<compile_context>
chip_gen: v7x
topology: tpu7x:2x2x1
jax: 0.10.0
libtpu: 0.0.40
codegen_flags: <defaults>
</compile_context>

<pallas_src>
import jax
import jax.numpy as jnp
from jax.experimental import pallas as pl
from jax.experimental.pallas import tpu as pltpu  # noqa: F401  (TPU backend)


# ----------------------------------------------------------------------------
# Small helpers
# ----------------------------------------------------------------------------
def _round_up(x, m):
    return (x + m - 1) // m * m


def _pad2d(x, rows, cols):
    r, c = x.shape
    return jnp.pad(x, ((0, rows - r), (0, cols - c)))


def _spec(shape):
    """Whole-array VMEM block (no grid)."""
    zero = (0,) * len(shape)
    return pl.BlockSpec(shape, lambda: zero)


def _cost(operands, out_nbytes, flops):
    nbytes = out_nbytes + sum(int(a.size) * a.dtype.itemsize for a in operands)
    return pl.CostEstimate(flops=int(flops), transcendentals=0, bytes_accessed=int(nbytes))


# ----------------------------------------------------------------------------
# In-kernel dense helpers (MXU matmul, f32 accumulate, bias, ReLU)
# ----------------------------------------------------------------------------
def _dense(x, w_ref, b_ref):
    y = jnp.dot(x.astype(w_ref.dtype), w_ref[...],
                preferred_element_type=jnp.float32)
    return jnp.maximum(y + b_ref[...], 0.0)


def _dense2(x1, w1_ref, x2, w2_ref, b_ref):
    """relu(cat(x1, x2) @ [W1; W2] + b) without materializing the concat."""
    y = jnp.dot(x1.astype(w1_ref.dtype), w1_ref[...],
                preferred_element_type=jnp.float32)
    y = y + jnp.dot(x2.astype(w2_ref.dtype), w2_ref[...],
                    preferred_element_type=jnp.float32)
    return jnp.maximum(y + b_ref[...], 0.0)


def _lang_branch(subj, obj, w_s, b_s, w_o, b_o, w_l0s, w_l0o, b_l0, w_l1, b_l1):
    s = _dense(subj, w_s, b_s)                    # (M, 256)
    o = _dense(obj, w_o, b_o)                     # (M, 256)
    h = _dense2(s, w_l0s, o, w_l0o, b_l0)         # (M, 256)
    return _dense(h, w_l1, b_l1)                  # (M, 128)


def _spatial_branch(mflat, delta,
                    w_c2, b_c2, w_d0, b_d0, w_d1, b_d1, w_d2, b_d2,
                    w_sp0m, w_sp0d, b_sp0, w_sp1, b_sp1):
    m = _dense(mflat, w_c2, b_c2)                 # (M, 128)  conv2 + ReLU
    d = _dense(delta, w_d0, b_d0)                 # (M, 256)
    d = _dense(d, w_d1, b_d1)                     # (M, 128)
    d = _dense(d, w_d2, b_d2)                     # (M, 128)
    sp = _dense2(m, w_sp0m, d, w_sp0d, b_sp0)     # (M, 128)
    return _dense(sp, w_sp1, b_sp1)               # (M, 128)


# ----------------------------------------------------------------------------
# Pallas kernels
# ----------------------------------------------------------------------------
def _matmul_relu_kernel(x_ref, w_ref, b_ref, o_ref):
    """Single conv-as-matmul layer: o = relu(x @ w + b)."""
    o_ref[...] = _dense(x_ref[...], w_ref, b_ref).astype(o_ref.dtype)


def _fused_kernel(subj_ref, obj_ref, mflat_ref, delta_ref,
                  w_s_ref, b_s_ref, w_o_ref, b_o_ref,
                  w_l0s_ref, w_l0o_ref, b_l0_ref, w_l1_ref, b_l1_ref,
                  w_c2_ref, b_c2_ref,
                  w_d0_ref, b_d0_ref, w_d1_ref, b_d1_ref, w_d2_ref, b_d2_ref,
                  w_sp0m_ref, w_sp0d_ref, b_sp0_ref, w_sp1_ref, b_sp1_ref,
                  o_ref):
    """Language branch + spatial branch + final add, fully fused (11 matmuls)."""
    lang = _lang_branch(subj_ref[...], obj_ref[...],
                        w_s_ref, b_s_ref, w_o_ref, b_o_ref,
                        w_l0s_ref, w_l0o_ref, b_l0_ref, w_l1_ref, b_l1_ref)
    sp = _spatial_branch(mflat_ref[...], delta_ref[...],
                         w_c2_ref, b_c2_ref, w_d0_ref, b_d0_ref,
                         w_d1_ref, b_d1_ref, w_d2_ref, b_d2_ref,
                         w_sp0m_ref, w_sp0d_ref, b_sp0_ref, w_sp1_ref, b_sp1_ref)
    o_ref[...] = (lang + sp).astype(o_ref.dtype)


def _lang_kernel(subj_ref, obj_ref,
                 w_s_ref, b_s_ref, w_o_ref, b_o_ref,
                 w_l0s_ref, w_l0o_ref, b_l0_ref, w_l1_ref, b_l1_ref,
                 o_ref):
    """Language branch only (use_spatial=False)."""
    o_ref[...] = _lang_branch(subj_ref[...], obj_ref[...],
                              w_s_ref, b_s_ref, w_o_ref, b_o_ref,
                              w_l0s_ref, w_l0o_ref, b_l0_ref,
                              w_l1_ref, b_l1_ref).astype(o_ref.dtype)


def _spatial_only_kernel(mflat_ref, delta_ref,
                         w_c2_ref, b_c2_ref,
                         w_d0_ref, b_d0_ref, w_d1_ref, b_d1_ref, w_d2_ref, b_d2_ref,
                         w_sp0m_ref, w_sp0d_ref, b_sp0_ref, w_sp1_ref, b_sp1_ref,
                         o_ref):
    """Spatial branch only (use_language=False)."""
    o_ref[...] = _spatial_branch(mflat_ref[...], delta_ref[...],
                                 w_c2_ref, b_c2_ref, w_d0_ref, b_d0_ref,
                                 w_d1_ref, b_d1_ref, w_d2_ref, b_d2_ref,
                                 w_sp0m_ref, w_sp0d_ref, b_sp0_ref,
                                 w_sp1_ref, b_sp1_ref).astype(o_ref.dtype)


# ----------------------------------------------------------------------------
# Conv glue: vectorized patch extraction (XLA) + Pallas matmul
# ----------------------------------------------------------------------------
def _matmul_relu(x, w, b):
    """relu(x @ w + b) as one whole-block pallas_call (conv0 / conv1 im2col matmuls)."""
    M, K = x.shape
    K2, N = w.shape
    assert K == K2, (K, K2)
    operands = (x, w, b)
    return pl.pallas_call(
        _matmul_relu_kernel,
        out_shape=jax.ShapeDtypeStruct((M, N), w.dtype),
        in_specs=[_spec(a.shape) for a in operands],
        out_specs=_spec((M, N)),
        cost_estimate=_cost(operands, M * N * w.dtype.itemsize, 2 * M * K * N),
    )(*operands)


def _extract_patches_nhwc(x, k, stride, pad):
    """(B,H,W,C) -> (B*Ho*Wo, k*k*C) with (kh, kw, cin) feature order.
    XLA glue: k*k strided slices + one concat (fused by XLA into one op)."""
    B, H, W, C = x.shape
    Ho = (H + 2 * pad - k) // stride + 1
    Wo = (W + 2 * pad - k) // stride + 1
    xp = jnp.pad(x, ((0, 0), (pad, pad), (pad, pad), (0, 0)))
    slabs = [xp[:, i:i + stride * Ho:stride, j:j + stride * Wo:stride, :]
             for i in range(k) for j in range(k)]
    patches = jnp.concatenate(slabs, axis=-1)                 # (B, Ho, Wo, k*k*C)
    return patches.reshape(B * Ho * Wo, k * k * C), Ho, Wo


def conv2d_relu_nhwc(x_nhwc, w_mat, b_row, *, k, stride, pad):
    """Conv2d + ReLU in NHWC; w_mat is the prepped (K_padded, Cout) matrix."""
    B = x_nhwc.shape[0]
    patches, Ho, Wo = _extract_patches_nhwc(x_nhwc, k, stride, pad)
    patches = patches.astype(w_mat.dtype)                     # halve HBM->VMEM bytes in bf16 mode
    kp = w_mat.shape[0]
    if patches.shape[1] < kp:                                 # zero-pad K to 128 multiple
        patches = jnp.pad(patches, ((0, 0), (0, kp - patches.shape[1])))
    out = _matmul_relu(patches, w_mat, b_row)                 # (B*Ho*Wo, Cout)
    return out.reshape(B, Ho, Wo, w_mat.shape[1])             # NHWC (channels on lanes)


# ----------------------------------------------------------------------------
# Deterministic parameter init (PyTorch-default-like uniform) + one-time prep
# ----------------------------------------------------------------------------
def _init_linear(key, din, dout):
    k1, k2 = jax.random.split(key)
    bound = 1.0 / (din ** 0.5)
    w = jax.random.uniform(k1, (din, dout), jnp.float32, -bound, bound)
    b = jax.random.uniform(k2, (dout,), jnp.float32, -bound, bound)
    return w, b


def _init_conv(key, cout, cin, k):
    k1, k2 = jax.random.split(key)
    bound = 1.0 / ((cin * k * k) ** 0.5)
    w = jax.random.uniform(k1, (cout, cin, k, k), jnp.float32, -bound, bound)  # OIHW
    b = jax.random.uniform(k2, (cout,), jnp.float32, -bound, bound)
    return w, b


def init_params(key):
    keys = jax.random.split(key, 12)
    return {
        "fc_subject": _init_linear(keys[0], 300, 256),
        "fc_object": _init_linear(keys[1], 300, 256),
        "fc_lang0": _init_linear(keys[2], 512, 256),
        "fc_lang1": _init_linear(keys[3], 256, 128),
        "conv0": _init_conv(keys[4], 32, 2, 5),
        "conv1": _init_conv(keys[5], 64, 32, 5),
        "conv2": _init_conv(keys[6], 128, 64, 8),
        "fc_delta0": _init_linear(keys[7], 38, 256),
        "fc_delta1": _init_linear(keys[8], 256, 128),
        "fc_delta2": _init_linear(keys[9], 128, 128),
        "fc_spatial0": _init_linear(keys[10], 256, 128),
        "fc_spatial1": _init_linear(keys[11], 128, 128),
    }


def prepare_params(raw, compute_dtype=jnp.bfloat16):
    """One-time weight prep: K zero-padding to 128 multiples, conv OIHW ->
    (kh*kw*cin, cout) matching the NHWC patch order, concat-avoiding weight
    splits, (1, N) f32 biases, weights cast to compute_dtype (f32 accumulation)."""
    def lin(name, k_pad=None):
        w, b = raw[name]
        if k_pad is not None and w.shape[0] < k_pad:
            w = jnp.pad(w, ((0, k_pad - w.shape[0]), (0, 0)))
        return w.astype(compute_dtype), b.reshape(1, -1).astype(jnp.float32)

    def conv(name, k_pad):
        w, b = raw[name]                                       # (cout, cin, kh, kw)
        cout, cin, kh, kw = w.shape
        wm = w.transpose(2, 3, 1, 0).reshape(kh * kw * cin, cout)   # rows = (i, j, cin)
        if wm.shape[0] < k_pad:
            wm = jnp.pad(wm, ((0, k_pad - wm.shape[0]), (0, 0)))
        return wm.astype(compute_dtype), b.reshape(1, -1).astype(jnp.float32)

    p = {}
    p["fc_subject"] = lin("fc_subject", 384)                   # K 300 -> 384
    p["fc_object"] = lin("fc_object", 384)
    w_l0, b_l0 = lin("fc_lang0")                                # K 512 split 256|256
    p["fc_lang0_s"], p["fc_lang0_o"], p["fc_lang0_b"] = w_l0[:256], w_l0[256:], b_l0
    p["fc_lang1"] = lin("fc_lang1")
    p["conv0"] = conv("conv0", 128)                             # K 2*5*5  = 50   -> 128
    p["conv1"] = conv("conv1", 896)                             # K 32*5*5 = 800  -> 896
    p["conv2"] = conv("conv2", 4096)                            # K 64*8*8 = 4096 exact
    p["fc_delta0"] = lin("fc_delta0", 128)                      # K 38 -> 128
    p["fc_delta1"] = lin("fc_delta1")
    p["fc_delta2"] = lin("fc_delta2")
    w_sp0, b_sp0 = lin("fc_spatial0")                           # K 256 split 128|128
    p["fc_spatial0_m"], p["fc_spatial0_d"], p["fc_spatial0_b"] = w_sp0[:128], w_sp0[128:], b_sp0
    p["fc_spatial1"] = lin("fc_spatial1")
    return p


# ----------------------------------------------------------------------------
# Forward pass (matches AttentionLayer.forward)
# ----------------------------------------------------------------------------
def attention_layer_forward(params, subj_embs, obj_embs, deltas, masks,
                            use_language=True, use_spatial=True):
    if not (use_language or use_spatial):
        return None

    B = subj_embs.shape[0]
    M = _round_up(B, 8)                                        # full sublanes per vreg
    wdt = params["fc_spatial1"][0].dtype                       # compute dtype of weights

    if use_language:
        subj_p = _pad2d(subj_embs.astype(wdt), M, 384)
        obj_p = _pad2d(obj_embs.astype(wdt), M, 384)
        w_s, b_s = params["fc_subject"]
        w_o, b_o = params["fc_object"]
        w_l1, b_l1 = params["fc_lang1"]
        lang_ops = (subj_p, obj_p, w_s, b_s, w_o, b_o,
                    params["fc_lang0_s"], params["fc_lang0_o"], params["fc_lang0_b"],
                    w_l1, b_l1)
        lang_flops = 2 * M * (2 * 384 * 256 + 2 * 256 * 256 + 256 * 128)
        if not use_spatial:
            lang_pad = pl.pallas_call(
                _lang_kernel,
                out_shape=jax.ShapeDtypeStruct((M, 128), jnp.float32),
                in_specs=[_spec(a.shape) for a in lang_ops],
                out_specs=_spec((M, 128)),
                cost_estimate=_cost(lang_ops, M * 128 * 4, lang_flops),
            )(*lang_ops)
            return lang_pad[:B]

    # ---- spatial branch pre-processing: mask_net conv0 / conv1 as im2col matmuls ----
    masks_nhwc = jnp.transpose(masks.astype(jnp.float32), (0, 2, 3, 1))       # (B,32,32,2)
    m0 = conv2d_relu_nhwc(masks_nhwc, *params["conv0"], k=5, stride=2, pad=2)  # (B,16,16,32)
    m1 = conv2d_relu_nhwc(m0, *params["conv1"], k=5, stride=2, pad=2)          # (B,8,8,64)
    # conv2 (k=8 on an 8x8 map, no padding) == flatten + linear; folded into the fused kernel.
    assert m1.shape[1:] == (8, 8, 64), m1.shape            # requires 32x32 input masks
    mflat_p = _pad2d(m1.reshape(B, 8 * 8 * 64).astype(wdt), M, 4096)
    deltas_p = _pad2d(deltas.astype(wdt), M, 128)

    w_c2, b_c2 = params["conv2"]
    w_d0, b_d0 = params["fc_delta0"]
    w_d1, b_d1 = params["fc_delta1"]
    w_d2, b_d2 = params["fc_delta2"]
    w_sp1, b_sp1 = params["fc_spatial1"]
    spatial_ops = (mflat_p, deltas_p,
                   w_c2, b_c2, w_d0, b_d0, w_d1, b_d1, w_d2, b_d2,
                   params["fc_spatial0_m"], params["fc_spatial0_d"], params["fc_spatial0_b"],
                   w_sp1, b_sp1)
    spatial_flops = 2 * M * (4096 * 128 + 128 * 256 + 256 * 128 + 128 * 128
                             + 2 * 128 * 128 + 128 * 128)

    if not use_language:
        out_pad = pl.pallas_call(
            _spatial_only_kernel,
            out_shape=jax.ShapeDtypeStruct((M, 128), jnp.float32),
            in_specs=[_spec(a.shape) for a in spatial_ops],
            out_specs=_spec((M, 128)),
            cost_estimate=_cost(spatial_ops, M * 128 * 4, spatial_flops),
        )(*spatial_ops)
        return out_pad[:B]

    # ---- both branches: single fully-fused kernel (lang + spatial + final add) ----
    operands = (lang_ops[0], lang_ops[1], spatial_ops[0], spatial_ops[1],
                *lang_ops[2:], *spatial_ops[2:])
    out_pad = pl.pallas_call(
        _fused_kernel,
        out_shape=jax.ShapeDtypeStruct((M, 128), jnp.float32),
        in_specs=[_spec(a.shape) for a in operands],
        out_specs=_spec((M, 128)),
        cost_estimate=_cost(operands, M * 128 * 4, lang_flops + spatial_flops),
    )(*operands)
    return out_pad[:B]


# ----------------------------------------------------------------------------
# Pure-JAX reference (for the in-script correctness check)
# ----------------------------------------------------------------------------
def reference_forward(raw, subj, obj, deltas, masks):
    P = jax.lax.Precision.HIGHEST

    def lin(p, x):
        w, b = p
        return jnp.maximum(jnp.matmul(x, w, precision=P) + b, 0.0)

    def conv(p, x, stride, pad):
        w, b = p
        y = jax.lax.conv_general_dilated(
            x, w, (stride, stride), [(pad, pad), (pad, pad)],
            dimension_numbers=("NCHW", "OIHW", "NCHW"), precision=P)
        return jnp.maximum(y + b[None, :, None, None], 0.0)

    lang = lin(raw["fc_lang1"], lin(raw["fc_lang0"],
               jnp.concatenate([lin(raw["fc_subject"], subj),
                                lin(raw["fc_object"], obj)], axis=1)))
    m = conv(raw["conv2"], conv(raw["conv1"], conv(raw["conv0"], masks, 2, 2), 2, 2), 1, 0)
    m = m.reshape(masks.shape[0], -1)
    d = lin(raw["fc_delta2"], lin(raw["fc_delta1"], lin(raw["fc_delta0"], deltas)))
    sp = lin(raw["fc_spatial1"], lin(raw["fc_spatial0"],
             jnp.concatenate([m, d], axis=1)))
    return lang + sp


if __name__ == "__main__":
    key = jax.random.PRNGKey(0)
    k_params, k_s, k_o, k_d, k_m = jax.random.split(key, 5)

    B = 2
    raw_params = init_params(k_params)

    subj_embs = jax.random.normal(k_s, (B, 300), jnp.float32)
    obj_embs = jax.random.normal(k_o, (B, 300), jnp.float32)
    deltas = jax.random.normal(k_d, (B, 38), jnp.float32)
    # masks must be (B, 2, 32, 32) so mask_net collapses to (B, 128, 1, 1)
    masks = jax.random.uniform(k_m, (B, 2, 32, 32), jnp.float32)

    fwd = jax.jit(attention_layer_forward)

    # --- correctness check in fp32 mode against a pure-JAX reference ---
    params_f32 = prepare_params(raw_params, compute_dtype=jnp.float32)
    out_f32 = jax.block_until_ready(fwd(params_f32, subj_embs, obj_embs, deltas, masks))
    ref = jax.block_until_ready(reference_forward(raw_params, subj_embs, obj_embs, deltas, masks))
    max_err = float(jnp.max(jnp.abs(out_f32 - ref)))
    assert max_err < 2e-2, f"fp32 Pallas result deviates from reference: max|err|={max_err}"

    # --- default bf16-weight / f32-accumulate run ---
    params = prepare_params(raw_params, compute_dtype=jnp.bfloat16)
    attention = jax.block_until_ready(fwd(params, subj_embs, obj_embs, deltas, masks))

    assert attention.shape == (B, 128), attention.shape
    assert attention.dtype == jnp.float32
    print("KERNEL_OK")
</pallas_src>

<mosaic_0001>
module attributes {stable_mosaic.version = 11 : i64} {
  func.func @_matmul_relu_kernel(%arg0: memref<512x128xf32, #tpu.memory_space<vmem>>, %arg1: memref<128x32xf32, #tpu.memory_space<vmem>>, %arg2: memref<1x32xf32, #tpu.memory_space<vmem>>, %arg3: memref<512x32xf32, #tpu.memory_space<vmem>>) attributes {dimension_semantics = [], scalar_prefetch = 0 : i64, scratch_operands = 0 : i64, tpu.core_type = #tpu.core_type<tc>} {
    %c0 = arith.constant 0 : index
    %c0_0 = arith.constant 0 : index
    %0 = vector.load %arg0[%c0, %c0_0] : memref<512x128xf32, #tpu.memory_space<vmem>>, vector<512x128xf32>
    %c0_1 = arith.constant 0 : index
    %c0_2 = arith.constant 0 : index
    %1 = vector.load %arg1[%c0_1, %c0_2] : memref<128x32xf32, #tpu.memory_space<vmem>>, vector<128x32xf32>
    %cst = arith.constant dense<0.000000e+00> : vector<512x32xf32>
    %2 = tpu.matmul %0, %1, %cst {dimension_numbers = #tpu.dot_dimension_numbers<[1], [0], [0], [1], [0, 0, 1, 1], [], []>} : vector<512x128xf32>, vector<128x32xf32>, vector<512x32xf32> -> vector<512x32xf32>
    %c0_3 = arith.constant 0 : index
    %c0_4 = arith.constant 0 : index
    %3 = vector.load %arg2[%c0_3, %c0_4] : memref<1x32xf32, #tpu.memory_space<vmem>>, vector<1x32xf32>
    %4 = vector.broadcast %3 : vector<1x32xf32> to vector<512x32xf32>
    %5 = arith.addf %2, %4 : vector<512x32xf32>
    %cst_5 = arith.constant 0.000000e+00 : f32
    %6 = vector.broadcast %cst_5 : f32 to vector<512x32xf32>
    %7 = arith.maximumf %5, %6 : vector<512x32xf32>
    %c0_6 = arith.constant 0 : index
    %c0_7 = arith.constant 0 : index
    %8 = vector.load %arg3[%c0_6, %c0_7] : memref<512x32xf32, #tpu.memory_space<vmem>>, vector<512x32xf32>
    tpu.vector_store %arg3[%c0_6, %c0_7], %7 {strides = array<i32>} : memref<512x32xf32, #tpu.memory_space<vmem>>, vector<512x32xf32>,
    return
  }
}

module attributes {stable_mosaic.version = 11 : i64} {
  func.func @_matmul_relu_kernel(%arg0: memref<128x896xf32, #tpu.memory_space<vmem>>, %arg1: memref<896x64xf32, #tpu.memory_space<vmem>>, %arg2: memref<1x64xf32, #tpu.memory_space<vmem>>, %arg3: memref<128x64xf32, #tpu.memory_space<vmem>>) attributes {dimension_semantics = [], scalar_prefetch = 0 : i64, scratch_operands = 0 : i64, tpu.core_type = #tpu.core_type<tc>} {
    %c0 = arith.constant 0 : index
    %c0_0 = arith.constant 0 : index
    %0 = vector.load %arg0[%c0, %c0_0] : memref<128x896xf32, #tpu.memory_space<vmem>>, vector<128x896xf32>
    %c0_1 = arith.constant 0 : index
    %c0_2 = arith.constant 0 : index
    %1 = vector.load %arg1[%c0_1, %c0_2] : memref<896x64xf32, #tpu.memory_space<vmem>>, vector<896x64xf32>
    %cst = arith.constant dense<0.000000e+00> : vector<128x64xf32>
    %2 = tpu.matmul %0, %1, %cst {dimension_numbers = #tpu.dot_dimension_numbers<[1], [0], [0], [1], [0, 0, 1, 1], [], []>} : vector<128x896xf32>, vector<896x64xf32>, vector<128x64xf32> -> vector<128x64xf32>
    %c0_3 = arith.constant 0 : index
    %c0_4 = arith.constant 0 : index
    %3 = vector.load %arg2[%c0_3, %c0_4] : memref<1x64xf32, #tpu.memory_space<vmem>>, vector<1x64xf32>
    %4 = vector.broadcast %3 : vector<1x64xf32> to vector<128x64xf32>
    %5 = arith.addf %2, %4 : vector<128x64xf32>
    %cst_5 = arith.constant 0.000000e+00 : f32
    %6 = vector.broadcast %cst_5 : f32 to vector<128x64xf32>
    %7 = arith.maximumf %5, %6 : vector<128x64xf32>
    %c0_6 = arith.constant 0 : index
    %c0_7 = arith.constant 0 : index
    %8 = vector.load %arg3[%c0_6, %c0_7] : memref<128x64xf32, #tpu.memory_space<vmem>>, vector<128x64xf32>
    tpu.vector_store %arg3[%c0_6, %c0_7], %7 {strides = array<i32>} : memref<128x64xf32, #tpu.memory_space<vmem>>, vector<128x64xf32>,
    return
  }
}

module attributes {stable_mosaic.version = 11 : i64} {
  func.func @_fused_kernel(%arg0: memref<8x384xf32, #tpu.memory_space<vmem>>, %arg1: memref<8x384xf32, #tpu.memory_space<vmem>>, %arg2: memref<8x4096xf32, #tpu.memory_space<vmem>>, %arg3: memref<8x128xf32, #tpu.memory_space<vmem>>, %arg4: memref<384x256xf32, #tpu.memory_space<vmem>>, %arg5: memref<1x256xf32, #tpu.memory_space<vmem>>, %arg6: memref<384x256xf32, #tpu.memory_space<vmem>>, %arg7: memref<1x256xf32, #tpu.memory_space<vmem>>, %arg8: memref<256x256xf32, #tpu.memory_space<vmem>>, %arg9: memref<256x256xf32, #tpu.memory_space<vmem>>, %arg10: memref<1x256xf32, #tpu.memory_space<vmem>>, %arg11: memref<256x128xf32, #tpu.memory_space<vmem>>, %arg12: memref<1x128xf32, #tpu.memory_space<vmem>>, %arg13: memref<4096x128xf32, #tpu.memory_space<vmem>>, %arg14: memref<1x128xf32, #tpu.memory_space<vmem>>, %arg15: memref<128x256xf32, #tpu.memory_space<vmem>>, %arg16: memref<1x256xf32, #tpu.memory_space<vmem>>, %arg17: memref<256x128xf32, #tpu.memory_space<vmem>>, %arg18: memref<1x128xf32, #tpu.memory_space<vmem>>, %arg19: memref<128x128xf32, #tpu.memory_space<vmem>>, %arg20: memref<1x128xf32, #tpu.memory_space<vmem>>, %arg21: memref<128x128xf32, #tpu.memory_space<vmem>>, %arg22: memref<128x128xf32, #tpu.memory_space<vmem>>, %arg23: memref<1x128xf32, #tpu.memory_space<vmem>>, %arg24: memref<128x128xf32, #tpu.memory_space<vmem>>, %arg25: memref<1x128xf32, #tpu.memory_space<vmem>>, %arg26: memref<8x128xf32, #tpu.memory_space<vmem>>) attributes {dimension_semantics = [], scalar_prefetch = 0 : i64, scratch_operands = 0 : i64, tpu.core_type = #tpu.core_type<tc>} {
    %c0 = arith.constant 0 : index
    %c0_0 = arith.constant 0 : index
    %0 = vector.load %arg0[%c0, %c0_0] : memref<8x384xf32, #tpu.memory_space<vmem>>, vector<8x384xf32>
    %c0_1 = arith.constant 0 : index
    %c0_2 = arith.constant 0 : index
    %1 = vector.load %arg1[%c0_1, %c0_2] : memref<8x384xf32, #tpu.memory_space<vmem>>, vector<8x384xf32>
    %c0_3 = arith.constant 0 : index
    %c0_4 = arith.constant 0 : index
    %2 = vector.load %arg4[%c0_3, %c0_4] : memref<384x256xf32, #tpu.memory_space<vmem>>, vector<384x256xf32>
    %cst = arith.constant dense<0.000000e+00> : vector<8x256xf32>
    %3 = tpu.matmul %0, %2, %cst {dimension_numbers = #tpu.dot_dimension_numbers<[1], [0], [0], [1], [0, 0, 1, 1], [], []>} : vector<8x384xf32>, vector<384x256xf32>, vector<8x256xf32> -> vector<8x256xf32>
    %c0_5 = arith.constant 0 : index
    %c0_6 = arith.constant 0 : index
    %4 = vector.load %arg5[%c0_5, %c0_6] : memref<1x256xf32, #tpu.memory_space<vmem>>, vector<1x256xf32>
    %5 = vector.broadcast %4 : vector<1x256xf32> to vector<8x256xf32>
    %6 = arith.addf %3, %5 : vector<8x256xf32>
    %cst_7 = arith.constant 0.000000e+00 : f32
    %7 = vector.broadcast %cst_7 : f32 to vector<8x256xf32>
    %8 = arith.maximumf %6, %7 : vector<8x256xf32>
    %c0_8 = arith.constant 0 : index
    %c0_9 = arith.constant 0 : index
    %9 = vector.load %arg6[%c0_8, %c0_9] : memref<384x256xf32, #tpu.memory_space<vmem>>, vector<384x256xf32>
    %cst_10 = arith.constant dense<0.000000e+00> : vector<8x256xf32>
    %10 = tpu.matmul %1, %9, %cst_10 {dimension_numbers = #tpu.dot_dimension_numbers<[1], [0], [0], [1], [0, 0, 1, 1], [], []>} : vector<8x384xf32>, vector<384x256xf32>, vector<8x256xf32> -> vector<8x256xf32>
    %c0_11 = arith.constant 0 : index
    %c0_12 = arith.constant 0 : index
    %11 = vector.load %arg7[%c0_11, %c0_12] : memref<1x256xf32, #tpu.memory_space<vmem>>, vector<1x256xf32>
    %12 = vector.broadcast %11 : vector<1x256xf32> to vector<8x256xf32>
    %13 = arith.addf %10, %12 : vector<8x256xf32>
    %cst_13 = arith.constant 0.000000e+00 : f32
    %14 = vector.broadcast %cst_13 : f32 to vector<8x256xf32>
    %15 = arith.maximumf %13, %14 : vector<8x256xf32>
    %c0_14 = arith.constant 0 : index
    %c0_15 = arith.constant 0 : index
    %16 = vector.load %arg8[%c0_14, %c0_15] : memref<256x256xf32, #tpu.memory_space<vmem>>, vector<256x256xf32>
    %cst_16 = arith.constant dense<0.000000e+00> : vector<8x256xf32>
    %17 = tpu.matmul %8, %16, %cst_16 {dimension_numbers = #tpu.dot_dimension_numbers<[1], [0], [0], [1], [0, 0, 1, 1], [], []>} : vector<8x256xf32>, vector<256x256xf32>, vector<8x256xf32> -> vector<8x256xf32>
    %c0_17 = arith.constant 0 : index
    %c0_18 = arith.constant 0 : index
    %18 = vector.load %arg9[%c0_17, %c0_18] : memref<256x256xf32, #tpu.memory_space<vmem>>, vector<256x256xf32>
    %cst_19 = arith.constant dense<0.000000e+00> : vector<8x256xf32>
    %19 = tpu.matmul %15, %18, %cst_19 {dimension_numbers = #tpu.dot_dimension_numbers<[1], [0], [0], [1], [0, 0, 1, 1], [], []>} : vector<8x256xf32>, vector<256x256xf32>, vector<8x256xf32> -> vector<8x256xf32>
    %20 = arith.addf %17, %19 : vector<8x256xf32>
    %c0_20 = arith.constant 0 : index
    %c0_21 = arith.constant 0 : index
    %21 = vector.load %arg10[%c0_20, %c0_21] : memref<1x256xf32, #tpu.memory_space<vmem>>, vector<1x256xf32>
    %22 = vector.broadcast %21 : vector<1x256xf32> to vector<8x256xf32>
    %23 = arith.addf %20, %22 : vector<8x256xf32>
    %cst_22 = arith.constant 0.000000e+00 : f32
    %24 = vector.broadcast %cst_22 : f32 to vector<8x256xf32>
    %25 = arith.maximumf %23, %24 : vector<8x256xf32>
    %c0_23 = arith.constant 0 : index
    %c0_24 = arith.constant 0 : index
    %26 = vector.load %arg11[%c0_23, %c0_24] : memref<256x128xf32, #tpu.memory_space<vmem>>, vector<256x128xf32>
    %cst_25 = arith.constant dense<0.000000e+00> : vector<8x128xf32>
    %27 = tpu.matmul %25, %26, %cst_25 {dimension_numbers = #tpu.dot_dimension_numbers<[1], [0], [0], [1], [0, 0, 1, 1], [], []>} : vector<8x256xf32>, vector<256x128xf32>, vector<8x128xf32> -> vector<8x128xf32>
    %c0_26 = arith.constant 0 : index
    %c0_27 = arith.constant 0 : index
    %28 = vector.load %arg12[%c0_26, %c0_27] : memref<1x128xf32, #tpu.memory_space<vmem>>, vector<1x128xf32>
    %29 = vector.broadcast %28 : vector<1x128xf32> to vector<8x128xf32>
    %30 = arith.addf %27, %29 : vector<8x128xf32>
    %cst_28 = arith.constant 0.000000e+00 : f32
    %31 = vector.broadcast %cst_28 : f32 to vector<8x128xf32>
    %32 = arith.maximumf %30, %31 : vector<8x128xf32>
    %c0_29 = arith.constant 0 : index
    %c0_30 = arith.constant 0 : index
    %33 = vector.load %arg2[%c0_29, %c0_30] : memref<8x4096xf32, #tpu.memory_space<vmem>>, vector<8x4096xf32>
    %c0_31 = arith.constant 0 : index
    %c0_32 = arith.constant 0 : index
    %34 = vector.load %arg3[%c0_31, %c0_32] : memref<8x128xf32, #tpu.memory_space<vmem>>, vector<8x128xf32>
    %c0_33 = arith.constant 0 : index
    %c0_34 = arith.constant 0 : index
    %35 = vector.load %arg13[%c0_33, %c0_34] : memref<4096x128xf32, #tpu.memory_space<vmem>>, vector<4096x128xf32>
    %cst_35 = arith.constant dense<0.000000e+00> : vector<8x128xf32>
    %36 = tpu.matmul %33, %35, %cst_35 {dimension_numbers = #tpu.dot_dimension_numbers<[1], [0], [0], [1], [0, 0, 1, 1], [], []>} : vector<8x4096xf32>, vector<4096x128xf32>, vector<8x128xf32> -> vector<8x128xf32>
    %c0_36 = arith.constant 0 : index
    %c0_37 = arith.constant 0 : index
    %37 = vector.load %arg14[%c0_36, %c0_37] : memref<1x128xf32, #tpu.memory_space<vmem>>, vector<1x128xf32>
    %38 = vector.broadcast %37 : vector<1x128xf32> to vector<8x128xf32>
    %39 = arith.addf %36, %38 : vector<8x128xf32>
    %cst_38 = arith.constant 0.000000e+00 : f32
    %40 = vector.broadcast %cst_38 : f32 to vector<8x128xf32>
    %41 = arith.maximumf %39, %40 : vector<8x128xf32>
    %c0_39 = arith.constant 0 : index
    %c0_40 = arith.constant 0 : index
    %42 = vector.load %arg15[%c0_39, %c0_40] : memref<128x256xf32, #tpu.memory_space<vmem>>, vector<128x256xf32>
    %cst_41 = arith.constant dense<0.000000e+00> : vector<8x256xf32>
    %43 = tpu.matmul %34, %42, %cst_41 {dimension_numbers = #tpu.dot_dimension_numbers<[1], [0], [0], [1], [0, 0, 1, 1], [], []>} : vector<8x128xf32>, vector<128x256xf32>, vector<8x256xf32> -> vector<8x256xf32>
    %c0_42 = arith.constant 0 : index
    %c0_43 = arith.constant 0 : index
    %44 = vector.load %arg16[%c0_42, %c0_43] : memref<1x256xf32, #tpu.memory_space<vmem>>, vector<1x256xf32>
    %45 = vector.broadcast %44 : vector<1x256xf32> to vector<8x256xf32>
    %46 = arith.addf %43, %45 : vector<8x256xf32>
    %cst_44 = arith.constant 0.000000e+00 : f32
    %47 = vector.broadcast %cst_44 : f32 to vector<8x256xf32>
    %48 = arith.maximumf %46, %47 : vector<8x256xf32>
    %c0_45 = arith.constant 0 : index
    %c0_46 = arith.constant 0 : index
    %49 = vector.load %arg17[%c0_45, %c0_46] : memref<256x128xf32, #tpu.memory_space<vmem>>, vector<256x128xf32>
    %cst_47 = arith.constant dense<0.000000e+00> : vector<8x128xf32>
    %50 = tpu.matmul %48, %49, %cst_47 {dimension_numbers = #tpu.dot_dimension_numbers<[1], [0], [0], [1], [0, 0, 1, 1], [], []>} : vector<8x256xf32>, vector<256x128xf32>, vector<8x128xf32> -> vector<8x128xf32>
    %c0_48 = arith.constant 0 : index
    %c0_49 = arith.constant 0 : index
    %51 = vector.load %arg18[%c0_48, %c0_49] : memref<1x128xf32, #tpu.memory_space<vmem>>, vector<1x128xf32>
    %52 = vector.broadcast %51 : vector<1x128xf32> to vector<8x128xf32>
    %53 = arith.addf %50, %52 : vector<8x128xf32>
    %cst_50 = arith.constant 0.000000e+00 : f32
    %54 = vector.broadcast %cst_50 : f32 to vector<8x128xf32>
    %55 = arith.maximumf %53, %54 : vector<8x128xf32>
    %c0_51 = arith.constant 0 : index
    %c0_52 = arith.constant 0 : index
    %56 = vector.load %arg19[%c0_51, %c0_52] : memref<128x128xf32, #tpu.memory_space<vmem>>, vector<128x128xf32>
    %cst_53 = arith.constant dense<0.000000e+00> : vector<8x128xf32>
    %57 = tpu.matmul %55, %56, %cst_53 {dimension_numbers = #tpu.dot_dimension_numbers<[1], [0], [0], [1], [0, 0, 1, 1], [], []>} : vector<8x128xf32>, vector<128x128xf32>, vector<8x128xf32> -> vector<8x128xf32>
    %c0_54 = arith.constant 0 : index
    %c0_55 = arith.constant 0 : index
    %58 = vector.load %arg20[%c0_54, %c0_55] : memref<1x128xf32, #tpu.memory_space<vmem>>, vector<1x128xf32>
    %59 = vector.broadcast %58 : vector<1x128xf32> to vector<8x128xf32>
    %60 = arith.addf %57, %59 : vector<8x128xf32>
    %cst_56 = arith.constant 0.000000e+00 : f32
    %61 = vector.broadcast %cst_56 : f32 to vector<8x128xf32>
    %62 = arith.maximumf %60, %61 : vector<8x128xf32>
    %c0_57 = arith.constant 0 : index
    %c0_58 = arith.constant 0 : index
    %63 = vector.load %arg21[%c0_57, %c0_58] : memref<128x128xf32, #tpu.memory_space<vmem>>, vector<128x128xf32>
    %cst_59 = arith.constant dense<0.000000e+00> : vector<8x128xf32>
    %64 = tpu.matmul %41, %63, %cst_59 {dimension_numbers = #tpu.dot_dimension_numbers<[1], [0], [0], [1], [0, 0, 1, 1], [], []>} : vector<8x128xf32>, vector<128x128xf32>, vector<8x128xf32> -> vector<8x128xf32>
    %c0_60 = arith.constant 0 : index
    %c0_61 = arith.constant 0 : index
    %65 = vector.load %arg22[%c0_60, %c0_61] : memref<128x128xf32, #tpu.memory_space<vmem>>, vector<128x128xf32>
    %cst_62 = arith.constant dense<0.000000e+00> : vector<8x128xf32>
    %66 = tpu.matmul %62, %65, %cst_62 {dimension_numbers = #tpu.dot_dimension_numbers<[1], [0], [0], [1], [0, 0, 1, 1], [], []>} : vector<8x128xf32>, vector<128x128xf32>, vector<8x128xf32> -> vector<8x128xf32>
    %67 = arith.addf %64, %66 : vector<8x128xf32>
    %c0_63 = arith.constant 0 : index
    %c0_64 = arith.constant 0 : index
    %68 = vector.load %arg23[%c0_63, %c0_64] : memref<1x128xf32, #tpu.memory_space<vmem>>, vector<1x128xf32>
    %69 = vector.broadcast %68 : vector<1x128xf32> to vector<8x128xf32>
    %70 = arith.addf %67, %69 : vector<8x128xf32>
    %cst_65 = arith.constant 0.000000e+00 : f32
    %71 = vector.broadcast %cst_65 : f32 to vector<8x128xf32>
    %72 = arith.maximumf %70, %71 : vector<8x128xf32>
    %c0_66 = arith.constant 0 : index
    %c0_67 = arith.constant 0 : index
    %73 = vector.load %arg24[%c0_66, %c0_67] : memref<128x128xf32, #tpu.memory_space<vmem>>, vector<128x128xf32>
    %cst_68 = arith.constant dense<0.000000e+00> : vector<8x128xf32>
    %74 = tpu.matmul %72, %73, %cst_68 {dimension_numbers = #tpu.dot_dimension_numbers<[1], [0], [0], [1], [0, 0, 1, 1], [], []>} : vector<8x128xf32>, vector<128x128xf32>, vector<8x128xf32> -> vector<8x128xf32>
    %c0_69 = arith.constant 0 : index
    %c0_70 = arith.constant 0 : index
    %75 = vector.load %arg25[%c0_69, %c0_70] : memref<1x128xf32, #tpu.memory_space<vmem>>, vector<1x128xf32>
    %76 = vector.broadcast %75 : vector<1x128xf32> to vector<8x128xf32>
    %77 = arith.addf %74, %76 : vector<8x128xf32>
    %cst_71 = arith.constant 0.000000e+00 : f32
    %78 = vector.broadcast %cst_71 : f32 to vector<8x128xf32>
    %79 = arith.maximumf %77, %78 : vector<8x128xf32>
    %80 = arith.addf %32, %79 : vector<8x128xf32>
    %c0_72 = arith.constant 0 : index
    %c0_73 = arith.constant 0 : index
    %81 = vector.load %arg26[%c0_72, %c0_73] : memref<8x128xf32, #tpu.memory_space<vmem>>, vector<8x128xf32>
    tpu.vector_store %arg26[%c0_72, %c0_73], %80 {strides = array<i32>} : memref<8x128xf32, #tpu.memory_space<vmem>>, vector<8x128xf32>,
    return
  }
}

</mosaic_0001>

<llo_original>
// kernel: attention_layer_forward.3
$region0: #{attention_layer_forward.3}
  #allocation0 [shape = 'u32[]', space=smem, size = 0x4, offset = 0x4, fixed_abs, tag = 'smem constant byte address 0x4 - core index']
  #allocation1 [shape = 'u32[144,128]{1,0:T(1,128)}', space=vmem, size = 0x12000, scoped, tag = 'internal scratch']
  %s0 = inlined_call_operand.vmem [shape: f32[512,128], index: 0, kind: input, shape index: {}]
  %s1 = inlined_call_operand.vmem [shape: f32[128,32], index: 1, kind: input, shape index: {}]
  %s2 = inlined_call_operand.vmem [shape: f32[1,32], index: 2, kind: input, shape index: {}]
  %s3 = inlined_call_operand.vmem [shape: f32[512,32], index: 3, kind: output, shape index: {}]
  %s4 = sld [smem:[#allocation0]]
  $region22: #{attention_layer_forward.3} parent=0
    _
  %s6 = ssub.s32 1, %s4
  %s7 = scalar_select 0, %s6, %s4
  // Predicated region
  $region2: #{attention_layer_forward.3} parent=0 // pred_check
    _
  $region3: #{attention_layer_forward.3} parent=0 // pred_check_branch
    %9 = sbr.rel (0) target = $region5
  $region4: #{attention_layer_forward.3} parent=0 // pred_region
    _
  $region5: #{attention_layer_forward.3} parent=0 // pred_fallthru
    _
  // Predicated region
  $region6: #{attention_layer_forward.3} parent=0 // pred_check
    _
  $region7: #{attention_layer_forward.3} parent=0 // pred_check_branch
    %11 = sbr.rel (0) target = $region9
  $region8: #{attention_layer_forward.3} parent=0 // pred_region
    _
  $region9: #{attention_layer_forward.3} parent=0 // pred_fallthru
    _
  // Predicated region
  $region10: #{attention_layer_forward.3} parent=0 // pred_check
    _
  $region11: #{attention_layer_forward.3} parent=0 // pred_check_branch
    %13 = sbr.rel (0) target = $region13
  $region12: #{attention_layer_forward.3} parent=0 // pred_region
    _
  $region13: #{attention_layer_forward.3} parent=0 // pred_fallthru
    _
  %v14 = vld [vmem:[%s0] sm:$0xff]
  %v15 = vld [vmem:[%s0 + $0x8] sm:$0xff]
  %v16 = vld [vmem:[%s0 + $0x10] sm:$0xff]
  %v17 = vld [vmem:[%s0 + $0x18] sm:$0xff]
  %v18 = vld [vmem:[%s0 + $0x20] sm:$0xff]
  %v19 = vld [vmem:[%s0 + $0x28] sm:$0xff]
  %v20 = vld [vmem:[%s0 + $0x30] sm:$0xff]
  %v21 = vld [vmem:[%s0 + $0x38] sm:$0xff]
  %v22 = vld [vmem:[%s0 + $0x40] sm:$0xff]
  %v23 = vld [vmem:[%s0 + $0x48] sm:$0xff]
  %v24 = vld [vmem:[%s0 + $0x50] sm:$0xff]
  %v25 = vld [vmem:[%s0 + $0x58] sm:$0xff]
  %v26 = vld [vmem:[%s0 + $0x60] sm:$0xff]
  %v27 = vld [vmem:[%s0 + $0x68] sm:$0xff]
  %v28 = vld [vmem:[%s0 + $0x70] sm:$0xff]
  %v29 = vld [vmem:[%s0 + $0x78] sm:$0xff]
  %v30 = vld [vmem:[%s0 + $0x80] sm:$0xff]
  %v31 = vld [vmem:[%s0 + $0x88] sm:$0xff]
  %v32 = vld [vmem:[%s0 + $0x90] sm:$0xff]
  %v33 = vld [vmem:[%s0 + $0x98] sm:$0xff]
  %v34 = vld [vmem:[%s0 + $0xa0] sm:$0xff]
  %v35 = vld [vmem:[%s0 + $0xa8] sm:$0xff]
  %v36 = vld [vmem:[%s0 + $0xb0] sm:$0xff]
  %v37 = vld [vmem:[%s0 + $0xb8] sm:$0xff]
  %v38 = vld [vmem:[%s0 + $0xc0] sm:$0xff]
  %v39 = vld [vmem:[%s0 + $0xc8] sm:$0xff]
  %v40 = vld [vmem:[%s0 + $0xd0] sm:$0xff]
  %v41 = vld [vmem:[%s0 + $0xd8] sm:$0xff]
  %v42 = vld [vmem:[%s0 + $0xe0] sm:$0xff]
  %v43 = vld [vmem:[%s0 + $0xe8] sm:$0xff]
  %v44 = vld [vmem:[%s0 + $0xf0] sm:$0xff]
  %v45 = vld [vmem:[%s0 + $0xf8] sm:$0xff]
  %v46 = vld [vmem:[%s0 + $0x100] sm:$0xff]
  %v47 = vld [vmem:[%s0 + $0x108] sm:$0xff]
  %v48 = vld [vmem:[%s0 + $0x110] sm:$0xff]
  %v49 = vld [vmem:[%s0 + $0x118] sm:$0xff]
  %v50 = vld [vmem:[%s0 + $0x120] sm:$0xff]
  %v51 = vld [vmem:[%s0 + $0x128] sm:$0xff]
  %v52 = vld [vmem:[%s0 + $0x130] sm:$0xff]
  %v53 = vld [vmem:[%s0 + $0x138] sm:$0xff]
  %v54 = vld [vmem:[%s0 + $0x140] sm:$0xff]
  %v55 = vld [vmem:[%s0 + $0x148] sm:$0xff]
  %v56 = vld [vmem:[%s0 + $0x150] sm:$0xff]
  %v57 = vld [vmem:[%s0 + $0x158] sm:$0xff]
  %v58 = vld [vmem:[%s0 + $0x160] sm:$0xff]
  %v59 = vld [vmem:[%s0 + $0x168] sm:$0xff]
  %v60 = vld [vmem:[%s0 + $0x170] sm:$0xff]
  %v61 = vld [vmem:[%s0 + $0x178] sm:$0xff]
  %v62 = vld [vmem:[%s0 + $0x180] sm:$0xff]
  %v63 = vld [vmem:[%s0 + $0x188] sm:$0xff]
  %v64 = vld [vmem:[%s0 + $0x190] sm:$0xff]
  %v65 = vld [vmem:[%s0 + $0x198] sm:$0xff]
  %v66 = vld [vmem:[%s0 + $0x1a0] sm:$0xff]
  %v67 = vld [vmem:[%s0 + $0x1a8] sm:$0xff]
  %v68 = vld [vmem:[%s0 + $0x1b0] sm:$0xff]
  %v69 = vld [vmem:[%s0 + $0x1b8] sm:$0xff]
  %v70 = vld [vmem:[%s0 + $0x1c0] sm:$0xff]
  %v71 = vld [vmem:[%s0 + $0x1c8] sm:$0xff]
  %v72 = vld [vmem:[%s0 + $0x1d0] sm:$0xff]
  %v73 = vld [vmem:[%s0 + $0x1d8] sm:$0xff]
  %v74 = vld [vmem:[%s0 + $0x1e0] sm:$0xff]
  %v75 = vld [vmem:[%s0 + $0x1e8] sm:$0xff]
  %v76 = vld [vmem:[%s0 + $0x1f0] sm:$0xff]
  %v77 = vld [vmem:[%s0 + $0x1f8] sm:$0xff]
  %v78 = vld [vmem:[%s1] sm:$0xff]
  %v79 = vld [vmem:[%s1 + $0x8] sm:$0xff]
  %v80 = vld [vmem:[%s1 + $0x10] sm:$0xff]
  %v81 = vld [vmem:[%s1 + $0x18] sm:$0xff]
  %v82 = vld [vmem:[%s1 + $0x20] sm:$0xff]
  %v83 = vld [vmem:[%s1 + $0x28] sm:$0xff]
  %v84 = vld [vmem:[%s1 + $0x30] sm:$0xff]
  %v85 = vld [vmem:[%s1 + $0x38] sm:$0xff]
  %v86 = vld [vmem:[%s1 + $0x40] sm:$0xff]
  %v87 = vld [vmem:[%s1 + $0x48] sm:$0xff]
  %v88 = vld [vmem:[%s1 + $0x50] sm:$0xff]
  %v89 = vld [vmem:[%s1 + $0x58] sm:$0xff]
  %v90 = vld [vmem:[%s1 + $0x60] sm:$0xff]
  %v91 = vld [vmem:[%s1 + $0x68] sm:$0xff]
  %v92 = vld [vmem:[%s1 + $0x70] sm:$0xff]
  %v93 = vld [vmem:[%s1 + $0x78] sm:$0xff]
  %v94 = vld [vmem:[%s2] sm:$0x1]
  %v96 = vlaneseq
  %v97 = vshrl.u32 %v96, 7
  %v98 = vsub.s32 0, %v97
  %v99 = vrot.slane %v94, %v98
  %101 = vmatprep.subr.mxu0 0.0
  %102 = vmatpush1.msra.mxu0 %v78
  %103 = vmatprep.subr.mxu0 0.0
  %104 = vmatpush1.msra.mxu0 %v79
  %105 = vmatprep.subr.mxu0 0.0
  %106 = vmatpush1.msra.mxu0 %v80
  %107 = vmatprep.subr.mxu0 0.0
  %108 = vmatpush1.msra.mxu0 %v81
  %109 = vmatprep.subr.mxu0 0.0
  %110 = vmatpush1.msra.mxu0 %v82
  %111 = vmatprep.subr.mxu0 0.0
  %112 = vmatpush1.msra.mxu0 %v83
  %113 = vmatprep.subr.mxu0 0.0
  %114 = vmatpush1.msra.mxu0 %v84
  %115 = vmatprep.subr.mxu0 0.0
  %116 = vmatpush1.msra.mxu0 %v85
  %117 = vmatprep.subr.mxu0 0.0
  %118 = vmatpush1.msra.mxu0 %v86
  %119 = vmatprep.subr.mxu0 0.0
  %120 = vmatpush1.msra.mxu0 %v87
  %121 = vmatprep.subr.mxu0 0.0
  %122 = vmatpush1.msra.mxu0 %v88
  %123 = vmatprep.subr.mxu0 0.0
  %124 = vmatpush1.msra.mxu0 %v89
  %125 = vmatprep.subr.mxu0 0.0
  %126 = vmatpush1.msra.mxu0 %v90
  %127 = vmatprep.subr.mxu0 0.0
  %128 = vmatpush1.msra.mxu0 %v91
  %129 = vmatprep.subr.mxu0 0.0
  %130 = vmatpush1.msra.mxu0 %v92
  %131 = vmatprep.subr.mxu0 0.0
  %132 = vmatpush1.msra.mxu0 %v93
  %133 = vmatprep.subr.mxu0 0.0
  %134 = vmatpush1.msra.mxu0 0.0
  %135 = vmatprep.subr.mxu0 0.0
  %136 = vmatpush1.msra.mxu0 0.0
  %137 = vmatprep.subr.mxu0 0.0
  %138 = vmatpush1.msra.mxu0 0.0
  %139 = vmatprep.subr.mxu0 0.0
  %140 = vmatpush1.msra.mxu0 0.0
  %141 = vmatprep.subr.mxu0 0.0
  %142 = vmatpush1.msra.mxu0 0.0
  %143 = vmatprep.subr.mxu0 0.0
  %144 = vmatpush1.msra.mxu0 0.0
  %145 = vmatprep.subr.mxu0 0.0
  %146 = vmatpush1.msra.mxu0 0.0
  %147 = vmatprep.subr.mxu0 0.0
  %148 = vmatpush1.msra.mxu0 0.0
  %149 = vmatprep.subr.mxu0 0.0
  %150 = vmatpush1.msra.mxu0 0.0
  %151 = vmatprep.subr.mxu0 0.0
  %152 = vmatpush1.msra.mxu0 0.0
  %153 = vmatprep.subr.mxu0 0.0
  %154 = vmatpush1.msra.mxu0 0.0
  %155 = vmatprep.subr.mxu0 0.0
  %156 = vmatpush1.msra.mxu0 0.0
  %157 = vmatprep.subr.mxu0 0.0
  %158 = vmatpush1.msra.mxu0 0.0
  %159 = vmatprep.subr.mxu0 0.0
  %160 = vmatpush1.msra.mxu0 0.0
  %161 = vmatprep.subr.mxu0 0.0
  %162 = vmatpush1.msra.mxu0 0.0
  %163 = vmatprep.subr.mxu0 0.0
  %164 = vmatpush1.msra.mxu0 0.0
  %165 = vmatprep.mubr.f32.mxu0 0.0
  %166 = vmatmul.mubr.f32.gmra.mrb[0].mxu0 %v14
  %v167 = vpop.f32.mrb[0].mxu0
  %v168 = vadd.f32 %v99, %v167
  %v169 = vpop.f32.mrb[0].mxu0
  %170 = vmatprep.mubr.f32.mxu0 0.0
  %171 = vmatmul.mubr.f32.gmra.mrb[0].mxu0 %v15
  %v172 = vpop.f32.mrb[0].mxu0
  %v173 = vadd.f32 %v99, %v172
  %v174 = vpop.f32.mrb[0].mxu0
  %175 = vmatprep.mubr.f32.mxu0 0.0
  %176 = vmatmul.mubr.f32.gmra.mrb[0].mxu0 %v16
  %v177 = vpop.f32.mrb[0].mxu0
  %v178 = vadd.f32 %v99, %v177
  %v179 = vpop.f32.mrb[0].mxu0
  %180 = vmatprep.mubr.f32.mxu0 0.0
  %181 = vmatmul.mubr.f32.gmra.mrb[0].mxu0 %v17
  %v182 = vpop.f32.mrb[0].mxu0
  %v183 = vadd.f32 %v99, %v182
  %v184 = vpop.f32.mrb[0].mxu0
  %185 = vmatprep.mubr.f32.mxu0 0.0
  %186 = vmatmul.mubr.f32.gmra.mrb[0].mxu0 %v18
  %v187 = vpop.f32.mrb[0].mxu0
  %v188 = vadd.f32 %v99, %v187
  %v189 = vpop.f32.mrb[0].mxu0
  %190 = vmatprep.mubr.f32.mxu0 0.0
  %191 = vmatmul.mubr.f32.gmra.mrb[0].mxu0 %v19
  %v192 = vpop.f32.mrb[0].mxu0
  %v193 = vadd.f32 %v99, %v192
  %v194 = vpop.f32.mrb[0].mxu0
  %195 = vmatprep.mubr.f32.mxu0 0.0
  %196 = vmatmul.mubr.f32.gmra.mrb[0].mxu0 %v20
  %v197 = vpop.f32.mrb[0].mxu0
  %v198 = vadd.f32 %v99, %v197
  %v199 = vpop.f32.mrb[0].mxu0
  %200 = vmatprep.mubr.f32.mxu0 0.0
  %201 = vmatmul.mubr.f32.gmra.mrb[0].mxu0 %v21
  %v202 = vpop.f32.mrb[0].mxu0
  %v203 = vadd.f32 %v99, %v202
  %v204 = vpop.f32.mrb[0].mxu0
  %205 = vmatprep.mubr.f32.mxu0 0.0
  %206 = vmatmul.mubr.f32.gmra.mrb[0].mxu0 %v22
  %v207 = vpop.f32.mrb[0].mxu0
  %v208 = vadd.f32 %v99, %v207
  %v209 = vpop.f32.mrb[0].mxu0
  %210 = vmatprep.mubr.f32.mxu0 0.0
  %211 = vmatmul.mubr.f32.gmra.mrb[0].mxu0 %v23
  %v212 = vpop.f32.mrb[0].mxu0
  %v213 = vadd.f32 %v99, %v212
  %v214 = vpop.f32.mrb[0].mxu0
  %215 = vmatprep.mubr.f32.mxu0 0.0
  %216 = vmatmul.mubr.f32.gmra.mrb[0].mxu0 %v24
  %v217 = vpop.f32.mrb[0].mxu0
  %v218 = vadd.f32 %v99, %v217
  %v219 = vpop.f32.mrb[0].mxu0
  %220 = vmatprep.mubr.f32.mxu0 0.0
  %221 = vmatmul.mubr.f32.gmra.mrb[0].mxu0 %v25
  %v222 = vpop.f32.mrb[0].mxu0
  %v223 = vadd.f32 %v99, %v222
  %v224 = vpop.f32.mrb[0].mxu0
  %225 = vmatprep.mubr.f32.mxu0 0.0
  %226 = vmatmul.mubr.f32.gmra.mrb[0].mxu0 %v26
  %v227 = vpop.f32.mrb[0].mxu0
  %v228 = vadd.f32 %v99, %v227
  %v229 = vpop.f32.mrb[0].mxu0
  %230 = vmatprep.mubr.f32.mxu0 0.0
  %231 = vmatmul.mubr.f32.gmra.mrb[0].mxu0 %v27
  %v232 = vpop.f32.mrb[0].mxu0
  %v233 = vadd.f32 %v99, %v232
  %v234 = vpop.f32.mrb[0].mxu0
  %235 = vmatprep.mubr.f32.mxu0 0.0
  %236 = vmatmul.mubr.f32.gmra.mrb[0].mxu0 %v28
  %v237 = vpop.f32.mrb[0].mxu0
  %v238 = vadd.f32 %v99, %v237
  %v239 = vpop.f32.mrb[0].mxu0
  %240 = vmatprep.mubr.f32.mxu0 0.0
  %241 = vmatmul.mubr.f32.gmra.mrb[0].mxu0 %v29
  %v242 = vpop.f32.mrb[0].mxu0
  %v243 = vadd.f32 %v99, %v242
  %v244 = vpop.f32.mrb[0].mxu0
  %245 = vmatprep.mubr.f32.mxu0 0.0
  %246 = vmatmul.mubr.f32.gmra.mrb[0].mxu0 %v30
  %v247 = vpop.f32.mrb[0].mxu0
  %v248 = vadd.f32 %v99, %v247
  %v249 = vpop.f32.mrb[0].mxu0
  %250 = vmatprep.mubr.f32.mxu0 0.0
  %251 = vmatmul.mubr.f32.gmra.mrb[0].mxu0 %v31
  %v252 = vpop.f32.mrb[0].mxu0
  %v253 = vadd.f32 %v99, %v252
  %v254 = vpop.f32.mrb[0].mxu0
  %255 = vmatprep.mubr.f32.mxu0 0.0
  %256 = vmatmul.mubr.f32.gmra.mrb[0].mxu0 %v32
  %v257 = vpop.f32.mrb[0].mxu0
  %v258 = vadd.f32 %v99, %v257
  %v259 = vpop.f32.mrb[0].mxu0
  %260 = vmatprep.mubr.f32.mxu0 0.0
  %261 = vmatmul.mubr.f32.gmra.mrb[0].mxu0 %v33
  %v262 = vpop.f32.mrb[0].mxu0
  %v263 = vadd.f32 %v99, %v262
  %v264 = vpop.f32.mrb[0].mxu0
  %265 = vmatprep.mubr.f32.mxu0 0.0
  %266 = vmatmul.mubr.f32.gmra.mrb[0].mxu0 %v34
  %v267 = vpop.f32.mrb[0].mxu0
  %v268 = vadd.f32 %v99, %v267
  %v269 = vpop.f32.mrb[0].mxu0
  %270 = vmatprep.mubr.f32.mxu0 0.0
  %271 = vmatmul.mubr.f32.gmra.mrb[0].mxu0 %v35
  %v272 = vpop.f32.mrb[0].mxu0
  %v273 = vadd.f32 %v99, %v272
  %v274 = vpop.f32.mrb[0].mxu0
  %275 = vmatprep.mubr.f32.mxu0 0.0
  %276 = vmatmul.mubr.f32.gmra.mrb[0].mxu0 %v36
  %v277 = vpop.f32.mrb[0].mxu0
  %v278 = vadd.f32 %v99, %v277
  %v279 = vpop.f32.mrb[0].mxu0
  %280 = vmatprep.mubr.f32.mxu0 0.0
  %281 = vmatmul.mubr.f32.gmra.mrb[0].mxu0 %v37
  %v282 = vpop.f32.mrb[0].mxu0
  %v283 = vadd.f32 %v99, %v282
  %v284 = vpop.f32.mrb[0].mxu0
  %285 = vmatprep.mubr.f32.mxu0 0.0
  %286 = vmatmul.mubr.f32.gmra.mrb[0].mxu0 %v38
  %v287 = vpop.f32.mrb[0].mxu0
  %v288 = vadd.f32 %v99, %v287
  %v289 = vpop.f32.mrb[0].mxu0
  %290 = vmatprep.mubr.f32.mxu0 0.0
  %291 = vmatmul.mubr.f32.gmra.mrb[0].mxu0 %v39
  %v292 = vpop.f32.mrb[0].mxu0
  %v293 = vadd.f32 %v99, %v292
  %v294 = vpop.f32.mrb[0].mxu0
  %295 = vmatprep.mubr.f32.mxu0 0.0
  %296 = vmatmul.mubr.f32.gmra.mrb[0].mxu0 %v40
  %v297 = vpop.f32.mrb[0].mxu0
  %v298 = vadd.f32 %v99, %v297
  %v299 = vpop.f32.mrb[0].mxu0
  %300 = vmatprep.mubr.f32.mxu0 0.0
  %301 = vmatmul.mubr.f32.gmra.mrb[0].mxu0 %v41
  %v302 = vpop.f32.mrb[0].mxu0
  %v303 = vadd.f32 %v99, %v302
  %v304 = vpop.f32.mrb[0].mxu0
  %305 = vmatprep.mubr.f32.mxu0 0.0
  %306 = vmatmul.mubr.f32.gmra.mrb[0].mxu0 %v42
  %v307 = vpop.f32.mrb[0].mxu0
  %v308 = vadd.f32 %v99, %v307
  %v309 = vpop.f32.mrb[0].mxu0
  %310 = vmatprep.mubr.f32.mxu0 0.0
  %311 = vmatmul.mubr.f32.gmra.mrb[0].mxu0 %v43
  %v312 = vpop.f32.mrb[0].mxu0
  %v313 = vadd.f32 %v99, %v312
  %v314 = vpop.f32.mrb[0].mxu0
  %315 = vmatprep.mubr.f32.mxu0 0.0
  %316 = vmatmul.mubr.f32.gmra.mrb[0].mxu0 %v44
  %v317 = vpop.f32.mrb[0].mxu0
  %v318 = vadd.f32 %v99, %v317
  %v319 = vpop.f32.mrb[0].mxu0
  %320 = vmatprep.mubr.f32.mxu0 0.0
  %321 = vmatmul.mubr.f32.gmra.mrb[0].mxu0 %v45
  %v322 = vpop.f32.mrb[0].mxu0
  %v323 = vadd.f32 %v99, %v322
  %v324 = vpop.f32.mrb[0].mxu0
  %325 = vmatprep.mubr.f32.mxu0 0.0
  %326 = vmatmul.mubr.f32.gmra.mrb[0].mxu0 %v46
  %v327 = vpop.f32.mrb[0].mxu0
  %v328 = vadd.f32 %v99, %v327
  %v329 = vpop.f32.mrb[0].mxu0
  %330 = vmatprep.mubr.f32.mxu0 0.0
  %331 = vmatmul.mubr.f32.gmra.mrb[0].mxu0 %v47
  %v332 = vpop.f32.mrb[0].mxu0
  %v333 = vadd.f32 %v99, %v332
  %v334 = vpop.f32.mrb[0].mxu0
  %335 = vmatprep.mubr.f32.mxu0 0.0
  %336 = vmatmul.mubr.f32.gmra.mrb[0].mxu0 %v48
  %v337 = vpop.f32.mrb[0].mxu0
  %v338 = vadd.f32 %v99, %v337
  %v339 = vpop.f32.mrb[0].mxu0
  %340 = vmatprep.mubr.f32.mxu0 0.0
  %341 = vmatmul.mubr.f32.gmra.mrb[0].mxu0 %v49
  %v342 = vpop.f32.mrb[0].mxu0
  %v343 = vadd.f32 %v99, %v342
  %v344 = vpop.f32.mrb[0].mxu0
  %345 = vmatprep.mubr.f32.mxu0 0.0
  %346 = vmatmul.mubr.f32.gmra.mrb[0].mxu0 %v50
  %v347 = vpop.f32.mrb[0].mxu0
  %v348 = vadd.f32 %v99, %v347
  %v349 = vpop.f32.mrb[0].mxu0
  %350 = vmatprep.mubr.f32.mxu0 0.0
  %351 = vmatmul.mubr.f32.gmra.mrb[0].mxu0 %v51
  %v352 = vpop.f32.mrb[0].mxu0
  %v353 = vadd.f32 %v99, %v352
  %v354 = vpop.f32.mrb[0].mxu0
  %355 = vmatprep.mubr.f32.mxu0 0.0
  %356 = vmatmul.mubr.f32.gmra.mrb[0].mxu0 %v52
  %v357 = vpop.f32.mrb[0].mxu0
  %v358 = vadd.f32 %v99, %v357
  %v359 = vpop.f32.mrb[0].mxu0
  %360 = vmatprep.mubr.f32.mxu0 0.0
  %361 = vmatmul.mubr.f32.gmra.mrb[0].mxu0 %v53
  %v362 = vpop.f32.mrb[0].mxu0
  %v363 = vadd.f32 %v99, %v362
  %v364 = vpop.f32.mrb[0].mxu0
  %365 = vmatprep.mubr.f32.mxu0 0.0
  %366 = vmatmul.mubr.f32.gmra.mrb[0].mxu0 %v54
  %v367 = vpop.f32.mrb[0].mxu0
  %v368 = vadd.f32 %v99, %v367
  %v369 = vpop.f32.mrb[0].mxu0
  %370 = vmatprep.mubr.f32.mxu0 0.0
  %371 = vmatmul.mubr.f32.gmra.mrb[0].mxu0 %v55
  %v372 = vpop.f32.mrb[0].mxu0
  %v373 = vadd.f32 %v99, %v372
  %v374 = vpop.f32.mrb[0].mxu0
  %375 = vmatprep.mubr.f32.mxu0 0.0
  %376 = vmatmul.mubr.f32.gmra.mrb[0].mxu0 %v56
  %v377 = vpop.f32.mrb[0].mxu0
  %v378 = vadd.f32 %v99, %v377
  %v379 = vpop.f32.mrb[0].mxu0
  %380 = vmatprep.mubr.f32.mxu0 0.0
  %381 = vmatmul.mubr.f32.gmra.mrb[0].mxu0 %v57
  %v382 = vpop.f32.mrb[0].mxu0
  %v383 = vadd.f32 %v99, %v382
  %v384 = vpop.f32.mrb[0].mxu0
  %385 = vmatprep.mubr.f32.mxu0 0.0
  %386 = vmatmul.mubr.f32.gmra.mrb[0].mxu0 %v58
  %v387 = vpop.f32.mrb[0].mxu0
  %v388 = vadd.f32 %v99, %v387
  %v389 = vpop.f32.mrb[0].mxu0
  %390 = vmatprep.mubr.f32.mxu0 0.0
  %391 = vmatmul.mubr.f32.gmra.mrb[0].mxu0 %v59
  %v392 = vpop.f32.mrb[0].mxu0
  %v393 = vadd.f32 %v99, %v392
  %v394 = vpop.f32.mrb[0].mxu0
  %395 = vmatprep.mubr.f32.mxu0 0.0
  %396 = vmatmul.mubr.f32.gmra.mrb[0].mxu0 %v60
  %v397 = vpop.f32.mrb[0].mxu0
  %v398 = vadd.f32 %v99, %v397
  %v399 = vpop.f32.mrb[0].mxu0
  %400 = vmatprep.mubr.f32.mxu0 0.0
  %401 = vmatmul.mubr.f32.gmra.mrb[0].mxu0 %v61
  %v402 = vpop.f32.mrb[0].mxu0
  %v403 = vadd.f32 %v99, %v402
  %v404 = vpop.f32.mrb[0].mxu0
  %405 = vmatprep.mubr.f32.mxu0 0.0
  %406 = vmatmul.mubr.f32.gmra.mrb[0].mxu0 %v62
  %v407 = vpop.f32.mrb[0].mxu0
  %v408 = vadd.f32 %v99, %v407
  %v409 = vpop.f32.mrb[0].mxu0
  %410 = vmatprep.mubr.f32.mxu0 0.0
  %411 = vmatmul.mubr.f32.gmra.mrb[0].mxu0 %v63
  %v412 = vpop.f32.mrb[0].mxu0
  %v413 = vadd.f32 %v99, %v412
  %v414 = vpop.f32.mrb[0].mxu0
  %415 = vmatprep.mubr.f32.mxu0 0.0
  %416 = vmatmul.mubr.f32.gmra.mrb[0].mxu0 %v64
  %v417 = vpop.f32.mrb[0].mxu0
  %v418 = vadd.f32 %v99, %v417
  %v419 = vpop.f32.mrb[0].mxu0
  %420 = vmatprep.mubr.f32.mxu0 0.0
  %421 = vmatmul.mubr.f32.gmra.mrb[0].mxu0 %v65
  %v422 = vpop.f32.mrb[0].mxu0
  %v423 = vadd.f32 %v99, %v422
  %v424 = vpop.f32.mrb[0].mxu0
  %425 = vmatprep.mubr.f32.mxu0 0.0
  %426 = vmatmul.mubr.f32.gmra.mrb[0].mxu0 %v66
  %v427 = vpop.f32.mrb[0].mxu0
  %v428 = vadd.f32 %v99, %v427
  %v429 = vpop.f32.mrb[0].mxu0
  %430 = vmatprep.mubr.f32.mxu0 0.0
  %431 = vmatmul.mubr.f32.gmra.mrb[0].mxu0 %v67
  %v432 = vpop.f32.mrb[0].mxu0
  %v433 = vadd.f32 %v99, %v432
  %v434 = vpop.f32.mrb[0].mxu0
  %435 = vmatprep.mubr.f32.mxu0 0.0
  %436 = vmatmul.mubr.f32.gmra.mrb[0].mxu0 %v68
  %v437 = vpop.f32.mrb[0].mxu0
  %v438 = vadd.f32 %v99, %v437
  %v439 = vpop.f32.mrb[0].mxu0
  %440 = vmatprep.mubr.f32.mxu0 0.0
  %441 = vmatmul.mubr.f32.gmra.mrb[0].mxu0 %v69
  %v442 = vpop.f32.mrb[0].mxu0
  %v443 = vadd.f32 %v99, %v442
  %v444 = vpop.f32.mrb[0].mxu0
  %445 = vmatprep.mubr.f32.mxu0 0.0
  %446 = vmatmul.mubr.f32.gmra.mrb[0].mxu0 %v70
  %v447 = vpop.f32.mrb[0].mxu0
  %v448 = vadd.f32 %v99, %v447
  %v449 = vpop.f32.mrb[0].mxu0
  %450 = vmatprep.mubr.f32.mxu0 0.0
  %451 = vmatmul.mubr.f32.gmra.mrb[0].mxu0 %v71
  %v452 = vpop.f32.mrb[0].mxu0
  %v453 = vadd.f32 %v99, %v452
  %v454 = vpop.f32.mrb[0].mxu0
  %455 = vmatprep.mubr.f32.mxu0 0.0
  %456 = vmatmul.mubr.f32.gmra.mrb[0].mxu0 %v72
  %v457 = vpop.f32.mrb[0].mxu0
  %v458 = vadd.f32 %v99, %v457
  %v459 = vpop.f32.mrb[0].mxu0
  %460 = vmatprep.mubr.f32.mxu0 0.0
  %461 = vmatmul.mubr.f32.gmra.mrb[0].mxu0 %v73
  %v462 = vpop.f32.mrb[0].mxu0
  %v463 = vadd.f32 %v99, %v462
  %v464 = vpop.f32.mrb[0].mxu0
  %465 = vmatprep.mubr.f32.mxu0 0.0
  %466 = vmatmul.mubr.f32.gmra.mrb[0].mxu0 %v74
  %v467 = vpop.f32.mrb[0].mxu0
  %v468 = vadd.f32 %v99, %v467
  %v469 = vpop.f32.mrb[0].mxu0
  %470 = vmatprep.mubr.f32.mxu0 0.0
  %471 = vmatmul.mubr.f32.gmra.mrb[0].mxu0 %v75
  %v472 = vpop.f32.mrb[0].mxu0
  %v473 = vadd.f32 %v99, %v472
  %v474 = vpop.f32.mrb[0].mxu0
  %475 = vmatprep.mubr.f32.mxu0 0.0
  %476 = vmatmul.mubr.f32.gmra.mrb[0].mxu0 %v76
  %v477 = vpop.f32.mrb[0].mxu0
  %v478 = vadd.f32 %v99, %v477
  %v479 = vpop.f32.mrb[0].mxu0
  %480 = vmatprep.mubr.f32.mxu0 0.0
  %481 = vmatmul.mubr.f32.gmra.mrb[0].mxu0 %v77
  %v482 = vpop.f32.mrb[0].mxu0
  %v483 = vadd.f32 %v99, %v482
  %v484 = vpop.f32.mrb[0].mxu0
  %485 = vdwg.mxu0
  %v486 = vmax.f32 %v168, 0.0
  %v487 = vmax.f32 %v173, 0.0
  %v488 = vmax.f32 %v178, 0.0
  %v489 = vmax.f32 %v183, 0.0
  %v490 = vmax.f32 %v188, 0.0
  %v491 = vmax.f32 %v193, 0.0
  %v492 = vmax.f32 %v198, 0.0
  %v493 = vmax.f32 %v203, 0.0
  %v494 = vmax.f32 %v208, 0.0
  %v495 = vmax.f32 %v213, 0.0
  %v496 = vmax.f32 %v218, 0.0
  %v497 = vmax.f32 %v223, 0.0
  %v498 = vmax.f32 %v228, 0.0
  %v499 = vmax.f32 %v233, 0.0
  %v500 = vmax.f32 %v238, 0.0
  %v501 = vmax.f32 %v243, 0.0
  %v502 = vmax.f32 %v248, 0.0
  %v503 = vmax.f32 %v253, 0.0
  %v504 = vmax.f32 %v258, 0.0
  %v505 = vmax.f32 %v263, 0.0
  %v506 = vmax.f32 %v268, 0.0
  %v507 = vmax.f32 %v273, 0.0
  %v508 = vmax.f32 %v278, 0.0
  %v509 = vmax.f32 %v283, 0.0
  %v510 = vmax.f32 %v288, 0.0
  %v511 = vmax.f32 %v293, 0.0
  %v512 = vmax.f32 %v298, 0.0
  %v513 = vmax.f32 %v303, 0.0
  %v514 = vmax.f32 %v308, 0.0
  %v515 = vmax.f32 %v313, 0.0
  %v516 = vmax.f32 %v318, 0.0
  %v517 = vmax.f32 %v323, 0.0
  %v518 = vmax.f32 %v328, 0.0
  %v519 = vmax.f32 %v333, 0.0
  %v520 = vmax.f32 %v338, 0.0
  %v521 = vmax.f32 %v343, 0.0
  %v522 = vmax.f32 %v348, 0.0
  %v523 = vmax.f32 %v353, 0.0
  %v524 = vmax.f32 %v358, 0.0
  %v525 = vmax.f32 %v363, 0.0
  %v526 = vmax.f32 %v368, 0.0
  %v527 = vmax.f32 %v373, 0.0
  %v528 = vmax.f32 %v378, 0.0
  %v529 = vmax.f32 %v383, 0.0
  %v530 = vmax.f32 %v388, 0.0
  %v531 = vmax.f32 %v393, 0.0
  %v532 = vmax.f32 %v398, 0.0
  %v533 = vmax.f32 %v403, 0.0
  %v534 = vmax.f32 %v408, 0.0
  %v535 = vmax.f32 %v413, 0.0
  %v536 = vmax.f32 %v418, 0.0
  %v537 = vmax.f32 %v423, 0.0
  %v538 = vmax.f32 %v428, 0.0
  %v539 = vmax.f32 %v433, 0.0
  %v540 = vmax.f32 %v438, 0.0
  %v541 = vmax.f32 %v443, 0.0
  %v542 = vmax.f32 %v448, 0.0
  %v543 = vmax.f32 %v453, 0.0
  %v544 = vmax.f32 %v458, 0.0
  %v545 = vmax.f32 %v463, 0.0
  %v546 = vmax.f32 %v468, 0.0
  %v547 = vmax.f32 %v473, 0.0
  %v548 = vmax.f32 %v478, 0.0
  %v549 = vmax.f32 %v483, 0.0
  %vm550 = vcmask 261120
  %551 = vst.msk [vmem:[%s3] sm:$0xff] %vm550, %v486
  %552 = vst.msk [vmem:[%s3 + $0x8] sm:$0xff] %vm550, %v487
  %553 = vst.msk [vmem:[%s3 + $0x10] sm:$0xff] %vm550, %v488
  %554 = vst.msk [vmem:[%s3 + $0x18] sm:$0xff] %vm550, %v489
  %555 = vst.msk [vmem:[%s3 + $0x20] sm:$0xff] %vm550, %v490
  %556 = vst.msk [vmem:[%s3 + $0x28] sm:$0xff] %vm550, %v491
  %557 = vst.msk [vmem:[%s3 + $0x30] sm:$0xff] %vm550, %v492
  %558 = vst.msk [vmem:[%s3 + $0x38] sm:$0xff] %vm550, %v493
  %559 = vst.msk [vmem:[%s3 + $0x40] sm:$0xff] %vm550, %v494
  %560 = vst.msk [vmem:[%s3 + $0x48] sm:$0xff] %vm550, %v495
  %561 = vst.msk [vmem:[%s3 + $0x50] sm:$0xff] %vm550, %v496
  %562 = vst.msk [vmem:[%s3 + $0x58] sm:$0xff] %vm550, %v497
  %563 = vst.msk [vmem:[%s3 + $0x60] sm:$0xff] %vm550, %v498
  %564 = vst.msk [vmem:[%s3 + $0x68] sm:$0xff] %vm550, %v499
  %565 = vst.msk [vmem:[%s3 + $0x70] sm:$0xff] %vm550, %v500
  %566 = vst.msk [vmem:[%s3 + $0x78] sm:$0xff] %vm550, %v501
  %567 = vst.msk [vmem:[%s3 + $0x80] sm:$0xff] %vm550, %v502
  %568 = vst.msk [vmem:[%s3 + $0x88] sm:$0xff] %vm550, %v503
  %569 = vst.msk [vmem:[%s3 + $0x90] sm:$0xff] %vm550, %v504
  %570 = vst.msk [vmem:[%s3 + $0x98] sm:$0xff] %vm550, %v505
  %571 = vst.msk [vmem:[%s3 + $0xa0] sm:$0xff] %vm550, %v506
  %572 = vst.msk [vmem:[%s3 + $0xa8] sm:$0xff] %vm550, %v507
  %573 = vst.msk [vmem:[%s3 + $0xb0] sm:$0xff] %vm550, %v508
  %574 = vst.msk [vmem:[%s3 + $0xb8] sm:$0xff] %vm550, %v509
  %575 = vst.msk [vmem:[%s3 + $0xc0] sm:$0xff] %vm550, %v510
  %576 = vst.msk [vmem:[%s3 + $0xc8] sm:$0xff] %vm550, %v511
  %577 = vst.msk [vmem:[%s3 + $0xd0] sm:$0xff] %vm550, %v512
  %578 = vst.msk [vmem:[%s3 + $0xd8] sm:$0xff] %vm550, %v513
  %579 = vst.msk [vmem:[%s3 + $0xe0] sm:$0xff] %vm550, %v514
  %580 = vst.msk [vmem:[%s3 + $0xe8] sm:$0xff] %vm550, %v515
  %581 = vst.msk [vmem:[%s3 + $0xf0] sm:$0xff] %vm550, %v516
  %582 = vst.msk [vmem:[%s3 + $0xf8] sm:$0xff] %vm550, %v517
  %583 = vst.msk [vmem:[%s3 + $0x100] sm:$0xff] %vm550, %v518
  %584 = vst.msk [vmem:[%s3 + $0x108] sm:$0xff] %vm550, %v519
  %585 = vst.msk [vmem:[%s3 + $0x110] sm:$0xff] %vm550, %v520
  %586 = vst.msk [vmem:[%s3 + $0x118] sm:$0xff] %vm550, %v521
  %587 = vst.msk [vmem:[%s3 + $0x120] sm:$0xff] %vm550, %v522
  %588 = vst.msk [vmem:[%s3 + $0x128] sm:$0xff] %vm550, %v523
  %589 = vst.msk [vmem:[%s3 + $0x130] sm:$0xff] %vm550, %v524
  %590 = vst.msk [vmem:[%s3 + $0x138] sm:$0xff] %vm550, %v525
  %591 = vst.msk [vmem:[%s3 + $0x140] sm:$0xff] %vm550, %v526
  %592 = vst.msk [vmem:[%s3 + $0x148] sm:$0xff] %vm550, %v527
  %593 = vst.msk [vmem:[%s3 + $0x150] sm:$0xff] %vm550, %v528
  %594 = vst.msk [vmem:[%s3 + $0x158] sm:$0xff] %vm550, %v529
  %595 = vst.msk [vmem:[%s3 + $0x160] sm:$0xff] %vm550, %v530
  %596 = vst.msk [vmem:[%s3 + $0x168] sm:$0xff] %vm550, %v531
  %597 = vst.msk [vmem:[%s3 + $0x170] sm:$0xff] %vm550, %v532
  %598 = vst.msk [vmem:[%s3 + $0x178] sm:$0xff] %vm550, %v533
  %599 = vst.msk [vmem:[%s3 + $0x180] sm:$0xff] %vm550, %v534
  %600 = vst.msk [vmem:[%s3 + $0x188] sm:$0xff] %vm550, %v535
  %601 = vst.msk [vmem:[%s3 + $0x190] sm:$0xff] %vm550, %v536
  %602 = vst.msk [vmem:[%s3 + $0x198] sm:$0xff] %vm550, %v537
  %603 = vst.msk [vmem:[%s3 + $0x1a0] sm:$0xff] %vm550, %v538
  %604 = vst.msk [vmem:[%s3 + $0x1a8] sm:$0xff] %vm550, %v539
  %605 = vst.msk [vmem:[%s3 + $0x1b0] sm:$0xff] %vm550, %v540
  %606 = vst.msk [vmem:[%s3 + $0x1b8] sm:$0xff] %vm550, %v541
  %607 = vst.msk [vmem:[%s3 + $0x1c0] sm:$0xff] %vm550, %v542
  %608 = vst.msk [vmem:[%s3 + $0x1c8] sm:$0xff] %vm550, %v543
  %609 = vst.msk [vmem:[%s3 + $0x1d0] sm:$0xff] %vm550, %v544
  %610 = vst.msk [vmem:[%s3 + $0x1d8] sm:$0xff] %vm550, %v545
  %611 = vst.msk [vmem:[%s3 + $0x1e0] sm:$0xff] %vm550, %v546
  %612 = vst.msk [vmem:[%s3 + $0x1e8] sm:$0xff] %vm550, %v547
  %613 = vst.msk [vmem:[%s3 + $0x1f0] sm:$0xff] %vm550, %v548
  %614 = vst.msk [vmem:[%s3 + $0x1f8] sm:$0xff] %vm550, %v549
  // Predicated region
  $region14: #{attention_layer_forward.3} parent=0 // pred_check
    _
  $region15: #{attention_layer_forward.3} parent=0 // pred_check_branch
    %616 = sbr.rel (0) target = $region17
  $region16: #{attention_layer_forward.3} parent=0 // pred_region
    _
  $region17: #{attention_layer_forward.3} parent=0 // pred_fallthru
    _
  // Predicated region
  $region18: #{attention_layer_forward.3} parent=0 // pred_check
    _
  $region19: #{attention_layer_forward.3} parent=0 // pred_check_branch
    %618 = sbr.rel (0) target = $region21
  $region20: #{attention_layer_forward.3} parent=0 // pred_region
    _
  $region21: #{attention_layer_forward.3} parent=0 // pred_fallthru
    _

// kernel: attention_layer_forward.4
$region0: #{attention_layer_forward.4}
  #allocation0 [shape = 'u32[]', space=smem, size = 0x4, offset = 0x4, fixed_abs, tag = 'smem constant byte address 0x4 - core index']
  #allocation1 [shape = 'u32[144,128]{1,0:T(1,128)}', space=vmem, size = 0x12000, scoped, tag = 'internal scratch']
  %s0 = inlined_call_operand.vmem [shape: f32[128,896], index: 0, kind: input, shape index: {}]
  %s1 = inlined_call_operand.vmem [shape: f32[896,64], index: 1, kind: input, shape index: {}]
  %s2 = inlined_call_operand.vmem [shape: f32[1,64], index: 2, kind: input, shape index: {}]
  %s3 = inlined_call_operand.vmem [shape: f32[128,64], index: 3, kind: output, shape index: {}]
  %s4 = sld [smem:[#allocation0]]
  $region22: #{attention_layer_forward.4} parent=0
    _
  %s6 = ssub.s32 1, %s4
  %s7 = scalar_select 0, %s6, %s4
  // Predicated region
  $region2: #{attention_layer_forward.4} parent=0 // pred_check
    _
  $region3: #{attention_layer_forward.4} parent=0 // pred_check_branch
    %9 = sbr.rel (0) target = $region5
  $region4: #{attention_layer_forward.4} parent=0 // pred_region
    _
  $region5: #{attention_layer_forward.4} parent=0 // pred_fallthru
    _
  // Predicated region
  $region6: #{attention_layer_forward.4} parent=0 // pred_check
    _
  $region7: #{attention_layer_forward.4} parent=0 // pred_check_branch
    %11 = sbr.rel (0) target = $region9
  $region8: #{attention_layer_forward.4} parent=0 // pred_region
    _
  $region9: #{attention_layer_forward.4} parent=0 // pred_fallthru
    _
  // Predicated region
  $region10: #{attention_layer_forward.4} parent=0 // pred_check
    _
  $region11: #{attention_layer_forward.4} parent=0 // pred_check_branch
    %13 = sbr.rel (0) target = $region13
  $region12: #{attention_layer_forward.4} parent=0 // pred_region
    _
  $region13: #{attention_layer_forward.4} parent=0 // pred_fallthru
    _
  %v14 = vld [vmem:[%s0] sm:$0xff]
  %v15 = vld [vmem:[%s0 + $0x8] sm:$0xff]
  %v16 = vld [vmem:[%s0 + $0x10] sm:$0xff]
  %v17 = vld [vmem:[%s0 + $0x18] sm:$0xff]
  %v18 = vld [vmem:[%s0 + $0x20] sm:$0xff]
  %v19 = vld [vmem:[%s0 + $0x28] sm:$0xff]
  %v20 = vld [vmem:[%s0 + $0x30] sm:$0xff]
  %v21 = vld [vmem:[%s0 + $0x38] sm:$0xff]
  %v22 = vld [vmem:[%s0 + $0x40] sm:$0xff]
  %v23 = vld [vmem:[%s0 + $0x48] sm:$0xff]
  %v24 = vld [vmem:[%s0 + $0x50] sm:$0xff]
  %v25 = vld [vmem:[%s0 + $0x58] sm:$0xff]
  %v26 = vld [vmem:[%s0 + $0x60] sm:$0xff]
  %v27 = vld [vmem:[%s0 + $0x68] sm:$0xff]
  %v28 = vld [vmem:[%s0 + $0x70] sm:$0xff]
  %v29 = vld [vmem:[%s0 + $0x78] sm:$0xff]
  %v30 = vld [vmem:[%s0 + $0x80] sm:$0xff]
  %v31 = vld [vmem:[%s0 + $0x88] sm:$0xff]
  %v32 = vld [vmem:[%s0 + $0x90] sm:$0xff]
  %v33 = vld [vmem:[%s0 + $0x98] sm:$0xff]
  %v34 = vld [vmem:[%s0 + $0xa0] sm:$0xff]
  %v35 = vld [vmem:[%s0 + $0xa8] sm:$0xff]
  %v36 = vld [vmem:[%s0 + $0xb0] sm:$0xff]
  %v37 = vld [vmem:[%s0 + $0xb8] sm:$0xff]
  %v38 = vld [vmem:[%s0 + $0xc0] sm:$0xff]
  %v39 = vld [vmem:[%s0 + $0xc8] sm:$0xff]
  %v40 = vld [vmem:[%s0 + $0xd0] sm:$0xff]
  %v41 = vld [vmem:[%s0 + $0xd8] sm:$0xff]
  %v42 = vld [vmem:[%s0 + $0xe0] sm:$0xff]
  %v43 = vld [vmem:[%s0 + $0xe8] sm:$0xff]
  %v44 = vld [vmem:[%s0 + $0xf0] sm:$0xff]
  %v45 = vld [vmem:[%s0 + $0xf8] sm:$0xff]
  %v46 = vld [vmem:[%s0 + $0x100] sm:$0xff]
  %v47 = vld [vmem:[%s0 + $0x108] sm:$0xff]
  %v48 = vld [vmem:[%s0 + $0x110] sm:$0xff]
  %v49 = vld [vmem:[%s0 + $0x118] sm:$0xff]
  %v50 = vld [vmem:[%s0 + $0x120] sm:$0xff]
  %v51 = vld [vmem:[%s0 + $0x128] sm:$0xff]
  %v52 = vld [vmem:[%s0 + $0x130] sm:$0xff]
  %v53 = vld [vmem:[%s0 + $0x138] sm:$0xff]
  %v54 = vld [vmem:[%s0 + $0x140] sm:$0xff]
  %v55 = vld [vmem:[%s0 + $0x148] sm:$0xff]
  %v56 = vld [vmem:[%s0 + $0x150] sm:$0xff]
  %v57 = vld [vmem:[%s0 + $0x158] sm:$0xff]
  %v58 = vld [vmem:[%s0 + $0x160] sm:$0xff]
  %v59 = vld [vmem:[%s0 + $0x168] sm:$0xff]
  %v60 = vld [vmem:[%s0 + $0x170] sm:$0xff]
  %v61 = vld [vmem:[%s0 + $0x178] sm:$0xff]
  %v62 = vld [vmem:[%s0 + $0x180] sm:$0xff]
  %v63 = vld [vmem:[%s0 + $0x188] sm:$0xff]
  %v64 = vld [vmem:[%s0 + $0x190] sm:$0xff]
  %v65 = vld [vmem:[%s0 + $0x198] sm:$0xff]
  %v66 = vld [vmem:[%s0 + $0x1a0] sm:$0xff]
  %v67 = vld [vmem:[%s0 + $0x1a8] sm:$0xff]
  %v68 = vld [vmem:[%s0 + $0x1b0] sm:$0xff]
  %v69 = vld [vmem:[%s0 + $0x1b8] sm:$0xff]
  %v70 = vld [vmem:[%s0 + $0x1c0] sm:$0xff]
  %v71 = vld [vmem:[%s0 + $0x1c8] sm:$0xff]
  %v72 = vld [vmem:[%s0 + $0x1d0] sm:$0xff]
  %v73 = vld [vmem:[%s0 + $0x1d8] sm:$0xff]
  %v74 = vld [vmem:[%s0 + $0x1e0] sm:$0xff]
  %v75 = vld [vmem:[%s0 + $0x1e8] sm:$0xff]
  %v76 = vld [vmem:[%s0 + $0x1f0] sm:$0xff]
  %v77 = vld [vmem:[%s0 + $0x1f8] sm:$0xff]
  %v78 = vld [vmem:[%s0 + $0x200] sm:$0xff]
  %v79 = vld [vmem:[%s0 + $0x208] sm:$0xff]
  %v80 = vld [vmem:[%s0 + $0x210] sm:$0xff]
  %v81 = vld [vmem:[%s0 + $0x218] sm:$0xff]
  %v82 = vld [vmem:[%s0 + $0x220] sm:$0xff]
  %v83 = vld [vmem:[%s0 + $0x228] sm:$0xff]
  %v84 = vld [vmem:[%s0 + $0x230] sm:$0xff]
  %v85 = vld [vmem:[%s0 + $0x238] sm:$0xff]
  %v86 = vld [vmem:[%s0 + $0x240] sm:$0xff]
  %v87 = vld [vmem:[%s0 + $0x248] sm:$0xff]
  %v88 = vld [vmem:[%s0 + $0x250] sm:$0xff]
  %v89 = vld [vmem:[%s0 + $0x258] sm:$0xff]
  %v90 = vld [vmem:[%s0 + $0x260] sm:$0xff]
  %v91 = vld [vmem:[%s0 + $0x268] sm:$0xff]
  %v92 = vld [vmem:[%s0 + $0x270] sm:$0xff]
  %v93 = vld [vmem:[%s0 + $0x278] sm:$0xff]
  %v94 = vld [vmem:[%s0 + $0x280] sm:$0xff]
  %v95 = vld [vmem:[%s0 + $0x288] sm:$0xff]
  %v96 = vld [vmem:[%s0 + $0x290] sm:$0xff]
  %v97 = vld [vmem:[%s0 + $0x298] sm:$0xff]
  %v98 = vld [vmem:[%s0 + $0x2a0] sm:$0xff]
  %v99 = vld [vmem:[%s0 + $0x2a8] sm:$0xff]
  %v100 = vld [vmem:[%s0 + $0x2b0] sm:$0xff]
  %v101 = vld [vmem:[%s0 + $0x2b8] sm:$0xff]
  %v102 = vld [vmem:[%s0 + $0x2c0] sm:$0xff]
  %v103 = vld [vmem:[%s0 + $0x2c8] sm:$0xff]
  %v104 = vld [vmem:[%s0 + $0x2d0] sm:$0xff]
  %v105 = vld [vmem:[%s0 + $0x2d8] sm:$0xff]
  %v106 = vld [vmem:[%s0 + $0x2e0] sm:$0xff]
  %v107 = vld [vmem:[%s0 + $0x2e8] sm:$0xff]
  %v108 = vld [vmem:[%s0 + $0x2f0] sm:$0xff]
  %v109 = vld [vmem:[%s0 + $0x2f8] sm:$0xff]
  %v110 = vld [vmem:[%s0 + $0x300] sm:$0xff]
  %v111 = vld [vmem:[%s0 + $0x308] sm:$0xff]
  %v112 = vld [vmem:[%s0 + $0x310] sm:$0xff]
  %v113 = vld [vmem:[%s0 + $0x318] sm:$0xff]
  %v114 = vld [vmem:[%s0 + $0x320] sm:$0xff]
  %v115 = vld [vmem:[%s0 + $0x328] sm:$0xff]
  %v116 = vld [vmem:[%s0 + $0x330] sm:$0xff]
  %v117 = vld [vmem:[%s0 + $0x338] sm:$0xff]
  %v118 = vld [vmem:[%s0 + $0x340] sm:$0xff]
  %v119 = vld [vmem:[%s0 + $0x348] sm:$0xff]
  %v120 = vld [vmem:[%s0 + $0x350] sm:$0xff]
  %v121 = vld [vmem:[%s0 + $0x358] sm:$0xff]
  %v122 = vld [vmem:[%s0 + $0x360] sm:$0xff]
  %v123 = vld [vmem:[%s0 + $0x368] sm:$0xff]
  %v124 = vld [vmem:[%s0 + $0x370] sm:$0xff]
  %v125 = vld [vmem:[%s0 + $0x378] sm:$0xff]
  %v126 = vld [vmem:[%s1] sm:$0xff]
  %v127 = vld [vmem:[%s1 + $0x8] sm:$0xff]
  %v128 = vld [vmem:[%s1 + $0x10] sm:$0xff]
  %v129 = vld [vmem:[%s1 + $0x18] sm:$0xff]
  %v130 = vld [vmem:[%s1 + $0x20] sm:$0xff]
  %v131 = vld [vmem:[%s1 + $0x28] sm:$0xff]
  %v132 = vld [vmem:[%s1 + $0x30] sm:$0xff]
  %v133 = vld [vmem:[%s1 + $0x38] sm:$0xff]
  %v134 = vld [vmem:[%s1 + $0x40] sm:$0xff]
  %v135 = vld [vmem:[%s1 + $0x48] sm:$0xff]
  %v136 = vld [vmem:[%s1 + $0x50] sm:$0xff]
  %v137 = vld [vmem:[%s1 + $0x58] sm:$0xff]
  %v138 = vld [vmem:[%s1 + $0x60] sm:$0xff]
  %v139 = vld [vmem:[%s1 + $0x68] sm:$0xff]
  %v140 = vld [vmem:[%s1 + $0x70] sm:$0xff]
  %v141 = vld [vmem:[%s1 + $0x78] sm:$0xff]
  %v142 = vld [vmem:[%s1 + $0x80] sm:$0xff]
  %v143 = vld [vmem:[%s1 + $0x88] sm:$0xff]
  %v144 = vld [vmem:[%s1 + $0x90] sm:$0xff]
  %v145 = vld [vmem:[%s1 + $0x98] sm:$0xff]
  %v146 = vld [vmem:[%s1 + $0xa0] sm:$0xff]
  %v147 = vld [vmem:[%s1 + $0xa8] sm:$0xff]
  %v148 = vld [vmem:[%s1 + $0xb0] sm:$0xff]
  %v149 = vld [vmem:[%s1 + $0xb8] sm:$0xff]
  %v150 = vld [vmem:[%s1 + $0xc0] sm:$0xff]
  %v151 = vld [vmem:[%s1 + $0xc8] sm:$0xff]
  %v152 = vld [vmem:[%s1 + $0xd0] sm:$0xff]
  %v153 = vld [vmem:[%s1 + $0xd8] sm:$0xff]
  %v154 = vld [vmem:[%s1 + $0xe0] sm:$0xff]
  %v155 = vld [vmem:[%s1 + $0xe8] sm:$0xff]
  %v156 = vld [vmem:[%s1 + $0xf0] sm:$0xff]
  %v157 = vld [vmem:[%s1 + $0xf8] sm:$0xff]
  %v158 = vld [vmem:[%s1 + $0x100] sm:$0xff]
  %v159 = vld [vmem:[%s1 + $0x108] sm:$0xff]
  %v160 = vld [vmem:[%s1 + $0x110] sm:$0xff]
  %v161 = vld [vmem:[%s1 + $0x118] sm:$0xff]
  %v162 = vld [vmem:[%s1 + $0x120] sm:$0xff]
  %v163 = vld [vmem:[%s1 + $0x128] sm:$0xff]
  %v164 = vld [vmem:[%s1 + $0x130] sm:$0xff]
  %v165 = vld [vmem:[%s1 + $0x138] sm:$0xff]
  %v166 = vld [vmem:[%s1 + $0x140] sm:$0xff]
  %v167 = vld [vmem:[%s1 + $0x148] sm:$0xff]
  %v168 = vld [vmem:[%s1 + $0x150] sm:$0xff]
  %v169 = vld [vmem:[%s1 + $0x158] sm:$0xff]
  %v170 = vld [vmem:[%s1 + $0x160] sm:$0xff]
  %v171 = vld [vmem:[%s1 + $0x168] sm:$0xff]
  %v172 = vld [vmem:[%s1 + $0x170] sm:$0xff]
  %v173 = vld [vmem:[%s1 + $0x178] sm:$0xff]
  %v174 = vld [vmem:[%s1 + $0x180] sm:$0xff]
  %v175 = vld [vmem:[%s1 + $0x188] sm:$0xff]
  %v176 = vld [vmem:[%s1 + $0x190] sm:$0xff]
  %v177 = vld [vmem:[%s1 + $0x198] sm:$0xff]
  %v178 = vld [vmem:[%s1 + $0x1a0] sm:$0xff]
  %v179 = vld [vmem:[%s1 + $0x1a8] sm:$0xff]
  %v180 = vld [vmem:[%s1 + $0x1b0] sm:$0xff]
  %v181 = vld [vmem:[%s1 + $0x1b8] sm:$0xff]
  %v182 = vld [vmem:[%s1 + $0x1c0] sm:$0xff]
  %v183 = vld [vmem:[%s1 + $0x1c8] sm:$0xff]
  %v184 = vld [vmem:[%s1 + $0x1d0] sm:$0xff]
  %v185 = vld [vmem:[%s1 + $0x1d8] sm:$0xff]
  %v186 = vld [vmem:[%s1 + $0x1e0] sm:$0xff]
  %v187 = vld [vmem:[%s1 + $0x1e8] sm:$0xff]
  %v188 = vld [vmem:[%s1 + $0x1f0] sm:$0xff]
  %v189 = vld [vmem:[%s1 + $0x1f8] sm:$0xff]
  %v190 = vld [vmem:[%s1 + $0x200] sm:$0xff]
  %v191 = vld [vmem:[%s1 + $0x208] sm:$0xff]
  %v192 = vld [vmem:[%s1 + $0x210] sm:$0xff]
  %v193 = vld [vmem:[%s1 + $0x218] sm:$0xff]
  %v194 = vld [vmem:[%s1 + $0x220] sm:$0xff]
  %v195 = vld [vmem:[%s1 + $0x228] sm:$0xff]
  %v196 = vld [vmem:[%s1 + $0x230] sm:$0xff]
  %v197 = vld [vmem:[%s1 + $0x238] sm:$0xff]
  %v198 = vld [vmem:[%s1 + $0x240] sm:$0xff]
  %v199 = vld [vmem:[%s1 + $0x248] sm:$0xff]
  %v200 = vld [vmem:[%s1 + $0x250] sm:$0xff]
  %v201 = vld [vmem:[%s1 + $0x258] sm:$0xff]
  %v202 = vld [vmem:[%s1 + $0x260] sm:$0xff]
  %v203 = vld [vmem:[%s1 + $0x268] sm:$0xff]
  %v204 = vld [vmem:[%s1 + $0x270] sm:$0xff]
  %v205 = vld [vmem:[%s1 + $0x278] sm:$0xff]
  %v206 = vld [vmem:[%s1 + $0x280] sm:$0xff]
  %v207 = vld [vmem:[%s1 + $0x288] sm:$0xff]
  %v208 = vld [vmem:[%s1 + $0x290] sm:$0xff]
  %v209 = vld [vmem:[%s1 + $0x298] sm:$0xff]
  %v210 = vld [vmem:[%s1 + $0x2a0] sm:$0xff]
  %v211 = vld [vmem:[%s1 + $0x2a8] sm:$0xff]
  %v212 = vld [vmem:[%s1 + $0x2b0] sm:$0xff]
  %v213 = vld [vmem:[%s1 + $0x2b8] sm:$0xff]
  %v214 = vld [vmem:[%s1 + $0x2c0] sm:$0xff]
  %v215 = vld [vmem:[%s1 + $0x2c8] sm:$0xff]
  %v216 = vld [vmem:[%s1 + $0x2d0] sm:$0xff]
  %v217 = vld [vmem:[%s1 + $0x2d8] sm:$0xff]
  %v218 = vld [vmem:[%s1 + $0x2e0] sm:$0xff]
  %v219 = vld [vmem:[%s1 + $0x2e8] sm:$0xff]
  %v220 = vld [vmem:[%s1 + $0x2f0] sm:$0xff]
  %v221 = vld [vmem:[%s1 + $0x2f8] sm:$0xff]
  %v222 = vld [vmem:[%s1 + $0x300] sm:$0xff]
  %v223 = vld [vmem:[%s1 + $0x308] sm:$0xff]
  %v224 = vld [vmem:[%s1 + $0x310] sm:$0xff]
  %v225 = vld [vmem:[%s1 + $0x318] sm:$0xff]
  %v226 = vld [vmem:[%s1 + $0x320] sm:$0xff]
  %v227 = vld [vmem:[%s1 + $0x328] sm:$0xff]
  %v228 = vld [vmem:[%s1 + $0x330] sm:$0xff]
  %v229 = vld [vmem:[%s1 + $0x338] sm:$0xff]
  %v230 = vld [vmem:[%s1 + $0x340] sm:$0xff]
  %v231 = vld [vmem:[%s1 + $0x348] sm:$0xff]
  %v232 = vld [vmem:[%s1 + $0x350] sm:$0xff]
  %v233 = vld [vmem:[%s1 + $0x358] sm:$0xff]
  %v234 = vld [vmem:[%s1 + $0x360] sm:$0xff]
  %v235 = vld [vmem:[%s1 + $0x368] sm:$0xff]
  %v236 = vld [vmem:[%s1 + $0x370] sm:$0xff]
  %v237 = vld [vmem:[%s1 + $0x378] sm:$0xff]
  %v238 = vld [vmem:[%s2] sm:$0x1]
  %v240 = vlaneseq
  %v241 = vshrl.u32 %v240, 7
  %v242 = vsub.s32 0, %v241
  %v243 = vrot.slane %v238, %v242
  %245 = vmatprep.subr.mxu0 0.0
  %246 = vmatpush1.msra.mxu0 %v126
  %247 = vmatprep.subr.mxu0 0.0
  %248 = vmatpush1.msra.mxu0 %v127
  %249 = vmatprep.subr.mxu0 0.0
  %250 = vmatpush1.msra.mxu0 %v128
  %251 = vmatprep.subr.mxu0 0.0
  %252 = vmatpush1.msra.mxu0 %v129
  %253 = vmatprep.subr.mxu0 0.0
  %254 = vmatpush1.msra.mxu0 %v130
  %255 = vmatprep.subr.mxu0 0.0
  %256 = vmatpush1.msra.mxu0 %v131
  %257 = vmatprep.subr.mxu0 0.0
  %258 = vmatpush1.msra.mxu0 %v132
  %259 = vmatprep.subr.mxu0 0.0
  %260 = vmatpush1.msra.mxu0 %v133
  %261 = vmatprep.subr.mxu0 0.0
  %262 = vmatpush1.msra.mxu0 %v134
  %263 = vmatprep.subr.mxu0 0.0
  %264 = vmatpush1.msra.mxu0 %v135
  %265 = vmatprep.subr.mxu0 0.0
  %266 = vmatpush1.msra.mxu0 %v136
  %267 = vmatprep.subr.mxu0 0.0
  %268 = vmatpush1.msra.mxu0 %v137
  %269 = vmatprep.subr.mxu0 0.0
  %270 = vmatpush1.msra.mxu0 %v138
  %271 = vmatprep.subr.mxu0 0.0
  %272 = vmatpush1.msra.mxu0 %v139
  %273 = vmatprep.subr.mxu0 0.0
  %274 = vmatpush1.msra.mxu0 %v140
  %275 = vmatprep.subr.mxu0 0.0
  %276 = vmatpush1.msra.mxu0 %v141
  %277 = vmatprep.subr.mxu0 0.0
  %278 = vmatpush1.msra.mxu0 %v142
  %279 = vmatprep.subr.mxu0 0.0
  %280 = vmatpush1.msra.mxu0 %v143
  %281 = vmatprep.subr.mxu0 0.0
  %282 = vmatpush1.msra.mxu0 %v144
  %283 = vmatprep.subr.mxu0 0.0
  %284 = vmatpush1.msra.mxu0 %v145
  %285 = vmatprep.subr.mxu0 0.0
  %286 = vmatpush1.msra.mxu0 %v146
  %287 = vmatprep.subr.mxu0 0.0
  %288 = vmatpush1.msra.mxu0 %v147
  %289 = vmatprep.subr.mxu0 0.0
  %290 = vmatpush1.msra.mxu0 %v148
  %291 = vmatprep.subr.mxu0 0.0
  %292 = vmatpush1.msra.mxu0 %v149
  %293 = vmatprep.subr.mxu0 0.0
  %294 = vmatpush1.msra.mxu0 %v150
  %295 = vmatprep.subr.mxu0 0.0
  %296 = vmatpush1.msra.mxu0 %v151
  %297 = vmatprep.subr.mxu0 0.0
  %298 = vmatpush1.msra.mxu0 %v152
  %299 = vmatprep.subr.mxu0 0.0
  %300 = vmatpush1.msra.mxu0 %v153
  %301 = vmatprep.subr.mxu0 0.0
  %302 = vmatpush1.msra.mxu0 %v154
  %303 = vmatprep.subr.mxu0 0.0
  %304 = vmatpush1.msra.mxu0 %v155
  %305 = vmatprep.subr.mxu0 0.0
  %306 = vmatpush1.msra.mxu0 %v156
  %307 = vmatprep.subr.mxu0 0.0
  %308 = vmatpush1.msra.mxu0 %v157
  %309 = vmatprep.mubr.f32.mxu0 %v15
  %310 = vmatmul.mubr.f32.gmra.mrb[0].mxu0 %v14
  %v311 = vpop.f32.mrb[0].mxu0
  %v312 = vadd.f32 %v243, %v311
  %v313 = vpop.f32.mrb[0].mxu0
  %314 = vmatprep.mubr.f32.mxu0 %v22
  %315 = vmatmul.mubr.f32.gmra.mrb[0].mxu0 %v21
  %v316 = vpop.f32.mrb[0].mxu0
  %v317 = vadd.f32 %v243, %v316
  %v318 = vpop.f32.mrb[0].mxu0
  %319 = vmatprep.mubr.f32.mxu0 %v29
  %320 = vmatmul.mubr.f32.gmra.mrb[0].mxu0 %v28
  %v321 = vpop.f32.mrb[0].mxu0
  %v322 = vadd.f32 %v243, %v321
  %v323 = vpop.f32.mrb[0].mxu0
  %324 = vmatprep.mubr.f32.mxu0 %v36
  %325 = vmatmul.mubr.f32.gmra.mrb[0].mxu0 %v35
  %v326 = vpop.f32.mrb[0].mxu0
  %v327 = vadd.f32 %v243, %v326
  %v328 = vpop.f32.mrb[0].mxu0
  %329 = vmatprep.mubr.f32.mxu0 %v43
  %330 = vmatmul.mubr.f32.gmra.mrb[0].mxu0 %v42
  %v331 = vpop.f32.mrb[0].mxu0
  %v332 = vadd.f32 %v243, %v331
  %v333 = vpop.f32.mrb[0].mxu0
  %334 = vmatprep.mubr.f32.mxu0 %v50
  %335 = vmatmul.mubr.f32.gmra.mrb[0].mxu0 %v49
  %v336 = vpop.f32.mrb[0].mxu0
  %v337 = vadd.f32 %v243, %v336
  %v338 = vpop.f32.mrb[0].mxu0
  %339 = vmatprep.mubr.f32.mxu0 %v57
  %340 = vmatmul.mubr.f32.gmra.mrb[0].mxu0 %v56
  %v341 = vpop.f32.mrb[0].mxu0
  %v342 = vadd.f32 %v243, %v341
  %v343 = vpop.f32.mrb[0].mxu0
  %344 = vmatprep.mubr.f32.mxu0 %v64
  %345 = vmatmul.mubr.f32.gmra.mrb[0].mxu0 %v63
  %v346 = vpop.f32.mrb[0].mxu0
  %v347 = vadd.f32 %v243, %v346
  %v348 = vpop.f32.mrb[0].mxu0
  %349 = vmatprep.mubr.f32.mxu0 %v71
  %350 = vmatmul.mubr.f32.gmra.mrb[0].mxu0 %v70
  %v351 = vpop.f32.mrb[0].mxu0
  %v352 = vadd.f32 %v243, %v351
  %v353 = vpop.f32.mrb[0].mxu0
  %354 = vmatprep.mubr.f32.mxu0 %v78
  %355 = vmatmul.mubr.f32.gmra.mrb[0].mxu0 %v77
  %v356 = vpop.f32.mrb[0].mxu0
  %v357 = vadd.f32 %v243, %v356
  %v358 = vpop.f32.mrb[0].mxu0
  %359 = vmatprep.mubr.f32.mxu0 %v85
  %360 = vmatmul.mubr.f32.gmra.mrb[0].mxu0 %v84
  %v361 = vpop.f32.mrb[0].mxu0
  %v362 = vadd.f32 %v243, %v361
  %v363 = vpop.f32.mrb[0].mxu0
  %364 = vmatprep.mubr.f32.mxu0 %v92
  %365 = vmatmul.mubr.f32.gmra.mrb[0].mxu0 %v91
  %v366 = vpop.f32.mrb[0].mxu0
  %v367 = vadd.f32 %v243, %v366
  %v368 = vpop.f32.mrb[0].mxu0
  %369 = vmatprep.mubr.f32.mxu0 %v99
  %370 = vmatmul.mubr.f32.gmra.mrb[0].mxu0 %v98
  %v371 = vpop.f32.mrb[0].mxu0
  %v372 = vadd.f32 %v243, %v371
  %v373 = vpop.f32.mrb[0].mxu0
  %374 = vmatprep.mubr.f32.mxu0 %v106
  %375 = vmatmul.mubr.f32.gmra.mrb[0].mxu0 %v105
  %v376 = vpop.f32.mrb[0].mxu0
  %v377 = vadd.f32 %v243, %v376
  %v378 = vpop.f32.mrb[0].mxu0
  %379 = vmatprep.mubr.f32.mxu0 %v113
  %380 = vmatmul.mubr.f32.gmra.mrb[0].mxu0 %v112
  %v381 = vpop.f32.mrb[0].mxu0
  %v382 = vadd.f32 %v243, %v381
  %v383 = vpop.f32.mrb[0].mxu0
  %384 = vmatprep.mubr.f32.mxu0 %v120
  %385 = vmatmul.mubr.f32.gmra.mrb[0].mxu0 %v119
  %v386 = vpop.f32.mrb[0].mxu0
  %v387 = vadd.f32 %v243, %v386
  %v388 = vpop.f32.mrb[0].mxu0
  %389 = vdwg.mxu0
  %390 = vmatprep.subr.mxu0 0.0
  %391 = vmatpush1.msra.mxu0 %v158
  %392 = vmatprep.subr.mxu0 0.0
  %393 = vmatpush1.msra.mxu0 %v159
  %394 = vmatprep.subr.mxu0 0.0
  %395 = vmatpush1.msra.mxu0 %v160
  %396 = vmatprep.subr.mxu0 0.0
  %397 = vmatpush1.msra.mxu0 %v161
  %398 = vmatprep.subr.mxu0 0.0
  %399 = vmatpush1.msra.mxu0 %v162
  %400 = vmatprep.subr.mxu0 0.0
  %401 = vmatpush1.msra.mxu0 %v163
  %402 = vmatprep.subr.mxu0 0.0
  %403 = vmatpush1.msra.mxu0 %v164
  %404 = vmatprep.subr.mxu0 0.0
  %405 = vmatpush1.msra.mxu0 %v165
  %406 = vmatprep.subr.mxu0 0.0
  %407 = vmatpush1.msra.mxu0 %v166
  %408 = vmatprep.subr.mxu0 0.0
  %409 = vmatpush1.msra.mxu0 %v167
  %410 = vmatprep.subr.mxu0 0.0
  %411 = vmatpush1.msra.mxu0 %v168
  %412 = vmatprep.subr.mxu0 0.0
  %413 = vmatpush1.msra.mxu0 %v169
  %414 = vmatprep.subr.mxu0 0.0
  %415 = vmatpush1.msra.mxu0 %v170
  %416 = vmatprep.subr.mxu0 0.0
  %417 = vmatpush1.msra.mxu0 %v171
  %418 = vmatprep.subr.mxu0 0.0
  %419 = vmatpush1.msra.mxu0 %v172
  %420 = vmatprep.subr.mxu0 0.0
  %421 = vmatpush1.msra.mxu0 %v173
  %422 = vmatprep.subr.mxu0 0.0
  %423 = vmatpush1.msra.mxu0 %v174
  %424 = vmatprep.subr.mxu0 0.0
  %425 = vmatpush1.msra.mxu0 %v175
  %426 = vmatprep.subr.mxu0 0.0
  %427 = vmatpush1.msra.mxu0 %v176
  %428 = vmatprep.subr.mxu0 0.0
  %429 = vmatpush1.msra.mxu0 %v177
  %430 = vmatprep.subr.mxu0 0.0
  %431 = vmatpush1.msra.mxu0 %v178
  %432 = vmatprep.subr.mxu0 0.0
  %433 = vmatpush1.msra.mxu0 %v179
  %434 = vmatprep.subr.mxu0 0.0
  %435 = vmatpush1.msra.mxu0 %v180
  %436 = vmatprep.subr.mxu0 0.0
  %437 = vmatpush1.msra.mxu0 %v181
  %438 = vmatprep.subr.mxu0 0.0
  %439 = vmatpush1.msra.mxu0 %v182
  %440 = vmatprep.subr.mxu0 0.0
  %441 = vmatpush1.msra.mxu0 %v183
  %442 = vmatprep.subr.mxu0 0.0
  %443 = vmatpush1.msra.mxu0 %v184
  %444 = vmatprep.subr.mxu0 0.0
  %445 = vmatpush1.msra.mxu0 %v185
  %446 = vmatprep.subr.mxu0 0.0
  %447 = vmatpush1.msra.mxu0 %v186
  %448 = vmatprep.subr.mxu0 0.0
  %449 = vmatpush1.msra.mxu0 %v187
  %450 = vmatprep.subr.mxu0 0.0
  %451 = vmatpush1.msra.mxu0 %v188
  %452 = vmatprep.subr.mxu0 0.0
  %453 = vmatpush1.msra.mxu0 %v189
  %454 = vmatprep.mubr.f32.mxu0 %v17
  %455 = vmatmul.mubr.f32.gmra.mrb[0].mxu0 %v16
  %v456 = vpop.f32.mrb[0].mxu0
  %v457 = vadd.f32 %v312, %v456
  %v458 = vpop.f32.mrb[0].mxu0
  %459 = vmatprep.mubr.f32.mxu0 %v24
  %460 = vmatmul.mubr.f32.gmra.mrb[0].mxu0 %v23
  %v461 = vpop.f32.mrb[0].mxu0
  %v462 = vadd.f32 %v317, %v461
  %v463 = vpop.f32.mrb[0].mxu0
  %464 = vmatprep.mubr.f32.mxu0 %v31
  %465 = vmatmul.mubr.f32.gmra.mrb[0].mxu0 %v30
  %v466 = vpop.f32.mrb[0].mxu0
  %v467 = vadd.f32 %v322, %v466
  %v468 = vpop.f32.mrb[0].mxu0
  %469 = vmatprep.mubr.f32.mxu0 %v38
  %470 = vmatmul.mubr.f32.gmra.mrb[0].mxu0 %v37
  %v471 = vpop.f32.mrb[0].mxu0
  %v472 = vadd.f32 %v327, %v471
  %v473 = vpop.f32.mrb[0].mxu0
  %474 = vmatprep.mubr.f32.mxu0 %v45
  %475 = vmatmul.mubr.f32.gmra.mrb[0].mxu0 %v44
  %v476 = vpop.f32.mrb[0].mxu0
  %v477 = vadd.f32 %v332, %v476
  %v478 = vpop.f32.mrb[0].mxu0
  %479 = vmatprep.mubr.f32.mxu0 %v52
  %480 = vmatmul.mubr.f32.gmra.mrb[0].mxu0 %v51
  %v481 = vpop.f32.mrb[0].mxu0
  %v482 = vadd.f32 %v337, %v481
  %v483 = vpop.f32.mrb[0].mxu0
  %484 = vmatprep.mubr.f32.mxu0 %v59
  %485 = vmatmul.mubr.f32.gmra.mrb[0].mxu0 %v58
  %v486 = vpop.f32.mrb[0].mxu0
  %v487 = vadd.f32 %v342, %v486
  %v488 = vpop.f32.mrb[0].mxu0
  %489 = vmatprep.mubr.f32.mxu0 %v66
  %490 = vmatmul.mubr.f32.gmra.mrb[0].mxu0 %v65
  %v491 = vpop.f32.mrb[0].mxu0
  %v492 = vadd.f32 %v347, %v491
  %v493 = vpop.f32.mrb[0].mxu0
  %494 = vmatprep.mubr.f32.mxu0 %v73
  %495 = vmatmul.mubr.f32.gmra.mrb[0].mxu0 %v72
  %v496 = vpop.f32.mrb[0].mxu0
  %v497 = vadd.f32 %v352, %v496
  %v498 = vpop.f32.mrb[0].mxu0
  %499 = vmatprep.mubr.f32.mxu0 %v80
  %500 = vmatmul.mubr.f32.gmra.mrb[0].mxu0 %v79
  %v501 = vpop.f32.mrb[0].mxu0
  %v502 = vadd.f32 %v357, %v501
  %v503 = vpop.f32.mrb[0].mxu0
  %504 = vmatprep.mubr.f32.mxu0 %v87
  %505 = vmatmul.mubr.f32.gmra.mrb[0].mxu0 %v86
  %v506 = vpop.f32.mrb[0].mxu0
  %v507 = vadd.f32 %v362, %v506
  %v508 = vpop.f32.mrb[0].mxu0
  %509 = vmatprep.mubr.f32.mxu0 %v94
  %510 = vmatmul.mubr.f32.gmra.mrb[0].mxu0 %v93
  %v511 = vpop.f32.mrb[0].mxu0
  %v512 = vadd.f32 %v367, %v511
  %v513 = vpop.f32.mrb[0].mxu0
  %514 = vmatprep.mubr.f32.mxu0 %v101
  %515 = vmatmul.mubr.f32.gmra.mrb[0].mxu0 %v100
  %v516 = vpop.f32.mrb[0].mxu0
  %v517 = vadd.f32 %v372, %v516
  %v518 = vpop.f32.mrb[0].mxu0
  %519 = vmatprep.mubr.f32.mxu0 %v108
  %520 = vmatmul.mubr.f32.gmra.mrb[0].mxu0 %v107
  %v521 = vpop.f32.mrb[0].mxu0
  %v522 = vadd.f32 %v377, %v521
  %v523 = vpop.f32.mrb[0].mxu0
  %524 = vmatprep.mubr.f32.mxu0 %v115
  %525 = vmatmul.mubr.f32.gmra.mrb[0].mxu0 %v114
  %v526 = vpop.f32.mrb[0].mxu0
  %v527 = vadd.f32 %v382, %v526
  %v528 = vpop.f32.mrb[0].mxu0
  %529 = vmatprep.mubr.f32.mxu0 %v122
  %530 = vmatmul.mubr.f32.gmra.mrb[0].mxu0 %v121
  %v531 = vpop.f32.mrb[0].mxu0
  %v532 = vadd.f32 %v387, %v531
  %v533 = vpop.f32.mrb[0].mxu0
  %534 = vdwg.mxu0
  %535 = vmatprep.subr.mxu0 0.0
  %536 = vmatpush1.msra.mxu0 %v190
  %537 = vmatprep.subr.mxu0 0.0
  %538 = vmatpush1.msra.mxu0 %v191
  %539 = vmatprep.subr.mxu0 0.0
  %540 = vmatpush1.msra.mxu0 %v192
  %541 = vmatprep.subr.mxu0 0.0
  %542 = vmatpush1.msra.mxu0 %v193
  %543 = vmatprep.subr.mxu0 0.0
  %544 = vmatpush1.msra.mxu0 %v194
  %545 = vmatprep.subr.mxu0 0.0
  %546 = vmatpush1.msra.mxu0 %v195
  %547 = vmatprep.subr.mxu0 0.0
  %548 = vmatpush1.msra.mxu0 %v196
  %549 = vmatprep.subr.mxu0 0.0
  %550 = vmatpush1.msra.mxu0 %v197
  %551 = vmatprep.subr.mxu0 0.0
  %552 = vmatpush1.msra.mxu0 %v198
  %553 = vmatprep.subr.mxu0 0.0
  %554 = vmatpush1.msra.mxu0 %v199
  %555 = vmatprep.subr.mxu0 0.0
  %556 = vmatpush1.msra.mxu0 %v200
  %557 = vmatprep.subr.mxu0 0.0
  %558 = vmatpush1.msra.mxu0 %v201
  %559 = vmatprep.subr.mxu0 0.0
  %560 = vmatpush1.msra.mxu0 %v202
  %561 = vmatprep.subr.mxu0 0.0
  %562 = vmatpush1.msra.mxu0 %v203
  %563 = vmatprep.subr.mxu0 0.0
  %564 = vmatpush1.msra.mxu0 %v204
  %565 = vmatprep.subr.mxu0 0.0
  %566 = vmatpush1.msra.mxu0 %v205
  %567 = vmatprep.subr.mxu0 0.0
  %568 = vmatpush1.msra.mxu0 %v206
  %569 = vmatprep.subr.mxu0 0.0
  %570 = vmatpush1.msra.mxu0 %v207
  %571 = vmatprep.subr.mxu0 0.0
  %572 = vmatpush1.msra.mxu0 %v208
  %573 = vmatprep.subr.mxu0 0.0
  %574 = vmatpush1.msra.mxu0 %v209
  %575 = vmatprep.subr.mxu0 0.0
  %576 = vmatpush1.msra.mxu0 %v210
  %577 = vmatprep.subr.mxu0 0.0
  %578 = vmatpush1.msra.mxu0 %v211
  %579 = vmatprep.subr.mxu0 0.0
  %580 = vmatpush1.msra.mxu0 %v212
  %581 = vmatprep.subr.mxu0 0.0
  %582 = vmatpush1.msra.mxu0 %v213
  %583 = vmatprep.subr.mxu0 0.0
  %584 = vmatpush1.msra.mxu0 %v214
  %585 = vmatprep.subr.mxu0 0.0
  %586 = vmatpush1.msra.mxu0 %v215
  %587 = vmatprep.subr.mxu0 0.0
  %588 = vmatpush1.msra.mxu0 %v216
  %589 = vmatprep.subr.mxu0 0.0
  %590 = vmatpush1.msra.mxu0 %v217
  %591 = vmatprep.subr.mxu0 0.0
  %592 = vmatpush1.msra.mxu0 %v218
  %593 = vmatprep.subr.mxu0 0.0
  %594 = vmatpush1.msra.mxu0 %v219
  %595 = vmatprep.subr.mxu0 0.0
  %596 = vmatpush1.msra.mxu0 %v220
  %597 = vmatprep.subr.mxu0 0.0
  %598 = vmatpush1.msra.mxu0 %v221
  %599 = vmatprep.mubr.f32.mxu0 %v19
  %600 = vmatmul.mubr.f32.gmra.mrb[0].mxu0 %v18
  %v601 = vpop.f32.mrb[0].mxu0
  %v602 = vadd.f32 %v457, %v601
  %v603 = vpop.f32.mrb[0].mxu0
  %604 = vmatprep.mubr.f32.mxu0 %v26
  %605 = vmatmul.mubr.f32.gmra.mrb[0].mxu0 %v25
  %v606 = vpop.f32.mrb[0].mxu0
  %v607 = vadd.f32 %v462, %v606
  %v608 = vpop.f32.mrb[0].mxu0
  %609 = vmatprep.mubr.f32.mxu0 %v33
  %610 = vmatmul.mubr.f32.gmra.mrb[0].mxu0 %v32
  %v611 = vpop.f32.mrb[0].mxu0
  %v612 = vadd.f32 %v467, %v611
  %v613 = vpop.f32.mrb[0].mxu0
  %614 = vmatprep.mubr.f32.mxu0 %v40
  %615 = vmatmul.mubr.f32.gmra.mrb[0].mxu0 %v39
  %v616 = vpop.f32.mrb[0].mxu0
  %v617 = vadd.f32 %v472, %v616
  %v618 = vpop.f32.mrb[0].mxu0
  %619 = vmatprep.mubr.f32.mxu0 %v47
  %620 = vmatmul.mubr.f32.gmra.mrb[0].mxu0 %v46
  %v621 = vpop.f32.mrb[0].mxu0
  %v622 = vadd.f32 %v477, %v621
  %v623 = vpop.f32.mrb[0].mxu0
  %624 = vmatprep.mubr.f32.mxu0 %v54
  %625 = vmatmul.mubr.f32.gmra.mrb[0].mxu0 %v53
  %v626 = vpop.f32.mrb[0].mxu0
  %v627 = vadd.f32 %v482, %v626
  %v628 = vpop.f32.mrb[0].mxu0
  %629 = vmatprep.mubr.f32.mxu0 %v61
  %630 = vmatmul.mubr.f32.gmra.mrb[0].mxu0 %v60
  %v631 = vpop.f32.mrb[0].mxu0
  %v632 = vadd.f32 %v487, %v631
  %v633 = vpop.f32.mrb[0].mxu0
  %634 = vmatprep.mubr.f32.mxu0 %v68
  %635 = vmatmul.mubr.f32.gmra.mrb[0].mxu0 %v67
  %v636 = vpop.f32.mrb[0].mxu0
  %v637 = vadd.f32 %v492, %v636
  %v638 = vpop.f32.mrb[0].mxu0
  %639 = vmatprep.mubr.f32.mxu0 %v75
  %640 = vmatmul.mubr.f32.gmra.mrb[0].mxu0 %v74
  %v641 = vpop.f32.mrb[0].mxu0
  %v642 = vadd.f32 %v497, %v641
  %v643 = vpop.f32.mrb[0].mxu0
  %644 = vmatprep.mubr.f32.mxu0 %v82
  %645 = vmatmul.mubr.f32.gmra.mrb[0].mxu0 %v81
  %v646 = vpop.f32.mrb[0].mxu0
  %v647 = vadd.f32 %v502, %v646
  %v648 = vpop.f32.mrb[0].mxu0
  %649 = vmatprep.mubr.f32.mxu0 %v89
  %650 = vmatmul.mubr.f32.gmra.mrb[0].mxu0 %v88
  %v651 = vpop.f32.mrb[0].mxu0
  %v652 = vadd.f32 %v507, %v651
  %v653 = vpop.f32.mrb[0].mxu0
  %654 = vmatprep.mubr.f32.mxu0 %v96
  %655 = vmatmul.mubr.f32.gmra.mrb[0].mxu0 %v95
  %v656 = vpop.f32.mrb[0].mxu0
  %v657 = vadd.f32 %v512, %v656
  %v658 = vpop.f32.mrb[0].mxu0
  %659 = vmatprep.mubr.f32.mxu0 %v103
  %660 = vmatmul.mubr.f32.gmra.mrb[0].mxu0 %v102
  %v661 = vpop.f32.mrb[0].mxu0
  %v662 = vadd.f32 %v517, %v661
  %v663 = vpop.f32.mrb[0].mxu0
  %664 = vmatprep.mubr.f32.mxu0 %v110
  %665 = vmatmul.mubr.f32.gmra.mrb[0].mxu0 %v109
  %v666 = vpop.f32.mrb[0].mxu0
  %v667 = vadd.f32 %v522, %v666
  %v668 = vpop.f32.mrb[0].mxu0
  %669 = vmatprep.mubr.f32.mxu0 %v117
  %670 = vmatmul.mubr.f32.gmra.mrb[0].mxu0 %v116
  %v671 = vpop.f32.mrb[0].mxu0
  %v672 = vadd.f32 %v527, %v671
  %v673 = vpop.f32.mrb[0].mxu0
  %674 = vmatprep.mubr.f32.mxu0 %v124
  %675 = vmatmul.mubr.f32.gmra.mrb[0].mxu0 %v123
  %v676 = vpop.f32.mrb[0].mxu0
  %v677 = vadd.f32 %v532, %v676
  %v678 = vpop.f32.mrb[0].mxu0
  %679 = vdwg.mxu0
  %680 = vmatprep.subr.mxu0 0.0
  %681 = vmatpush1.msra.mxu0 %v222
  %682 = vmatprep.subr.mxu0 0.0
  %683 = vmatpush1.msra.mxu0 %v223
  %684 = vmatprep.subr.mxu0 0.0
  %685 = vmatpush1.msra.mxu0 %v224
  %686 = vmatprep.subr.mxu0 0.0
  %687 = vmatpush1.msra.mxu0 %v225
  %688 = vmatprep.subr.mxu0 0.0
  %689 = vmatpush1.msra.mxu0 %v226
  %690 = vmatprep.subr.mxu0 0.0
  %691 = vmatpush1.msra.mxu0 %v227
  %692 = vmatprep.subr.mxu0 0.0
  %693 = vmatpush1.msra.mxu0 %v228
  %694 = vmatprep.subr.mxu0 0.0
  %695 = vmatpush1.msra.mxu0 %v229
  %696 = vmatprep.subr.mxu0 0.0
  %697 = vmatpush1.msra.mxu0 %v230
  %698 = vmatprep.subr.mxu0 0.0
  %699 = vmatpush1.msra.mxu0 %v231
  %700 = vmatprep.subr.mxu0 0.0
  %701 = vmatpush1.msra.mxu0 %v232
  %702 = vmatprep.subr.mxu0 0.0
  %703 = vmatpush1.msra.mxu0 %v233
  %704 = vmatprep.subr.mxu0 0.0
  %705 = vmatpush1.msra.mxu0 %v234
  %706 = vmatprep.subr.mxu0 0.0
  %707 = vmatpush1.msra.mxu0 %v235
  %708 = vmatprep.subr.mxu0 0.0
  %709 = vmatpush1.msra.mxu0 %v236
  %710 = vmatprep.subr.mxu0 0.0
  %711 = vmatpush1.msra.mxu0 %v237
  %712 = vmatprep.subr.mxu0 0.0
  %713 = vmatpush1.msra.mxu0 0.0
  %714 = vmatprep.subr.mxu0 0.0
  %715 = vmatpush1.msra.mxu0 0.0
  %716 = vmatprep.subr.mxu0 0.0
  %717 = vmatpush1.msra.mxu0 0.0
  %718 = vmatprep.subr.mxu0 0.0
  %719 = vmatpush1.msra.mxu0 0.0
  %720 = vmatprep.subr.mxu0 0.0
  %721 = vmatpush1.msra.mxu0 0.0
  %722 = vmatprep.subr.mxu0 0.0
  %723 = vmatpush1.msra.mxu0 0.0
  %724 = vmatprep.subr.mxu0 0.0
  %725 = vmatpush1.msra.mxu0 0.0
  %726 = vmatprep.subr.mxu0 0.0
  %727 = vmatpush1.msra.mxu0 0.0
  %728 = vmatprep.subr.mxu0 0.0
  %729 = vmatpush1.msra.mxu0 0.0
  %730 = vmatprep.subr.mxu0 0.0
  %731 = vmatpush1.msra.mxu0 0.0
  %732 = vmatprep.subr.mxu0 0.0
  %733 = vmatpush1.msra.mxu0 0.0
  %734 = vmatprep.subr.mxu0 0.0
  %735 = vmatpush1.msra.mxu0 0.0
  %736 = vmatprep.subr.mxu0 0.0
  %737 = vmatpush1.msra.mxu0 0.0
  %738 = vmatprep.subr.mxu0 0.0
  %739 = vmatpush1.msra.mxu0 0.0
  %740 = vmatprep.subr.mxu0 0.0
  %741 = vmatpush1.msra.mxu0 0.0
  %742 = vmatprep.subr.mxu0 0.0
  %743 = vmatpush1.msra.mxu0 0.0
  %744 = vmatprep.mubr.f32.mxu0 0.0
  %745 = vmatmul.mubr.f32.gmra.mrb[0].mxu0 %v20
  %v746 = vpop.f32.mrb[0].mxu0
  %v747 = vadd.f32 %v602, %v746
  %v748 = vpop.f32.mrb[0].mxu0
  %749 = vmatprep.mubr.f32.mxu0 0.0
  %750 = vmatmul.mubr.f32.gmra.mrb[0].mxu0 %v27
  %v751 = vpop.f32.mrb[0].mxu0
  %v752 = vadd.f32 %v607, %v751
  %v753 = vpop.f32.mrb[0].mxu0
  %754 = vmatprep.mubr.f32.mxu0 0.0
  %755 = vmatmul.mubr.f32.gmra.mrb[0].mxu0 %v34
  %v756 = vpop.f32.mrb[0].mxu0
  %v757 = vadd.f32 %v612, %v756
  %v758 = vpop.f32.mrb[0].mxu0
  %759 = vmatprep.mubr.f32.mxu0 0.0
  %760 = vmatmul.mubr.f32.gmra.mrb[0].mxu0 %v41
  %v761 = vpop.f32.mrb[0].mxu0
  %v762 = vadd.f32 %v617, %v761
  %v763 = vpop.f32.mrb[0].mxu0
  %764 = vmatprep.mubr.f32.mxu0 0.0
  %765 = vmatmul.mubr.f32.gmra.mrb[0].mxu0 %v48
  %v766 = vpop.f32.mrb[0].mxu0
  %v767 = vadd.f32 %v622, %v766
  %v768 = vpop.f32.mrb[0].mxu0
  %769 = vmatprep.mubr.f32.mxu0 0.0
  %770 = vmatmul.mubr.f32.gmra.mrb[0].mxu0 %v55
  %v771 = vpop.f32.mrb[0].mxu0
  %v772 = vadd.f32 %v627, %v771
  %v773 = vpop.f32.mrb[0].mxu0
  %774 = vmatprep.mubr.f32.mxu0 0.0
  %775 = vmatmul.mubr.f32.gmra.mrb[0].mxu0 %v62
  %v776 = vpop.f32.mrb[0].mxu0
  %v777 = vadd.f32 %v632, %v776
  %v778 = vpop.f32.mrb[0].mxu0
  %779 = vmatprep.mubr.f32.mxu0 0.0
  %780 = vmatmul.mubr.f32.gmra.mrb[0].mxu0 %v69
  %v781 = vpop.f32.mrb[0].mxu0
  %v782 = vadd.f32 %v637, %v781
  %v783 = vpop.f32.mrb[0].mxu0
  %784 = vmatprep.mubr.f32.mxu0 0.0
  %785 = vmatmul.mubr.f32.gmra.mrb[0].mxu0 %v76
  %v786 = vpop.f32.mrb[0].mxu0
  %v787 = vadd.f32 %v642, %v786
  %v788 = vpop.f32.mrb[0].mxu0
  %789 = vmatprep.mubr.f32.mxu0 0.0
  %790 = vmatmul.mubr.f32.gmra.mrb[0].mxu0 %v83
  %v791 = vpop.f32.mrb[0].mxu0
  %v792 = vadd.f32 %v647, %v791
  %v793 = vpop.f32.mrb[0].mxu0
  %794 = vmatprep.mubr.f32.mxu0 0.0
  %795 = vmatmul.mubr.f32.gmra.mrb[0].mxu0 %v90
  %v796 = vpop.f32.mrb[0].mxu0
  %v797 = vadd.f32 %v652, %v796
  %v798 = vpop.f32.mrb[0].mxu0
  %799 = vmatprep.mubr.f32.mxu0 0.0
  %800 = vmatmul.mubr.f32.gmra.mrb[0].mxu0 %v97
  %v801 = vpop.f32.mrb[0].mxu0
  %v802 = vadd.f32 %v657, %v801
  %v803 = vpop.f32.mrb[0].mxu0
  %804 = vmatprep.mubr.f32.mxu0 0.0
  %805 = vmatmul.mubr.f32.gmra.mrb[0].mxu0 %v104
  %v806 = vpop.f32.mrb[0].mxu0
  %v807 = vadd.f32 %v662, %v806
  %v808 = vpop.f32.mrb[0].mxu0
  %809 = vmatprep.mubr.f32.mxu0 0.0
  %810 = vmatmul.mubr.f32.gmra.mrb[0].mxu0 %v111
  %v811 = vpop.f32.mrb[0].mxu0
  %v812 = vadd.f32 %v667, %v811
  %v813 = vpop.f32.mrb[0].mxu0
  %814 = vmatprep.mubr.f32.mxu0 0.0
  %815 = vmatmul.mubr.f32.gmra.mrb[0].mxu0 %v118
  %v816 = vpop.f32.mrb[0].mxu0
  %v817 = vadd.f32 %v672, %v816
  %v818 = vpop.f32.mrb[0].mxu0
  %819 = vmatprep.mubr.f32.mxu0 0.0
  %820 = vmatmul.mubr.f32.gmra.mrb[0].mxu0 %v125
  %v821 = vpop.f32.mrb[0].mxu0
  %v822 = vadd.f32 %v677, %v821
  %v823 = vpop.f32.mrb[0].mxu0
  %824 = vdwg.mxu0
  %v825 = vmax.f32 %v747, 0.0
  %v826 = vmax.f32 %v752, 0.0
  %v827 = vmax.f32 %v757, 0.0
  %v828 = vmax.f32 %v762, 0.0
  %v829 = vmax.f32 %v767, 0.0
  %v830 = vmax.f32 %v772, 0.0
  %v831 = vmax.f32 %v777, 0.0
  %v832 = vmax.f32 %v782, 0.0
  %v833 = vmax.f32 %v787, 0.0
  %v834 = vmax.f32 %v792, 0.0
  %v835 = vmax.f32 %v797, 0.0
  %v836 = vmax.f32 %v802, 0.0
  %v837 = vmax.f32 %v807, 0.0
  %v838 = vmax.f32 %v812, 0.0
  %v839 = vmax.f32 %v817, 0.0
  %v840 = vmax.f32 %v822, 0.0
  %vm841 = vcmask 523264
  %842 = vst.msk [vmem:[%s3] sm:$0xff] %vm841, %v825
  %843 = vst.msk [vmem:[%s3 + $0x8] sm:$0xff] %vm841, %v826
  %844 = vst.msk [vmem:[%s3 + $0x10] sm:$0xff] %vm841, %v827
  %845 = vst.msk [vmem:[%s3 + $0x18] sm:$0xff] %vm841, %v828
  %846 = vst.msk [vmem:[%s3 + $0x20] sm:$0xff] %vm841, %v829
  %847 = vst.msk [vmem:[%s3 + $0x28] sm:$0xff] %vm841, %v830
  %848 = vst.msk [vmem:[%s3 + $0x30] sm:$0xff] %vm841, %v831
  %849 = vst.msk [vmem:[%s3 + $0x38] sm:$0xff] %vm841, %v832
  %850 = vst.msk [vmem:[%s3 + $0x40] sm:$0xff] %vm841, %v833
  %851 = vst.msk [vmem:[%s3 + $0x48] sm:$0xff] %vm841, %v834
  %852 = vst.msk [vmem:[%s3 + $0x50] sm:$0xff] %vm841, %v835
  %853 = vst.msk [vmem:[%s3 + $0x58] sm:$0xff] %vm841, %v836
  %854 = vst.msk [vmem:[%s3 + $0x60] sm:$0xff] %vm841, %v837
  %855 = vst.msk [vmem:[%s3 + $0x68] sm:$0xff] %vm841, %v838
  %856 = vst.msk [vmem:[%s3 + $0x70] sm:$0xff] %vm841, %v839
  %857 = vst.msk [vmem:[%s3 + $0x78] sm:$0xff] %vm841, %v840
  // Predicated region
  $region14: #{attention_layer_forward.4} parent=0 // pred_check
    _
  $region15: #{attention_layer_forward.4} parent=0 // pred_check_branch
    %859 = sbr.rel (0) target = $region17
  $region16: #{attention_layer_forward.4} parent=0 // pred_region
    _
  $region17: #{attention_layer_forward.4} parent=0 // pred_fallthru
    _
  // Predicated region
  $region18: #{attention_layer_forward.4} parent=0 // pred_check
    _
  $region19: #{attention_layer_forward.4} parent=0 // pred_check_branch
    %861 = sbr.rel (0) target = $region21
  $region20: #{attention_layer_forward.4} parent=0 // pred_region
    _
  $region21: #{attention_layer_forward.4} parent=0 // pred_fallthru
    _

// kernel: attention_layer_forward.5
$region0: #{attention_layer_forward.5}
  #allocation0 [shape = 'u32[]', space=smem, size = 0x4, offset = 0x4, fixed_abs, tag = 'smem constant byte address 0x4 - core index']
  #allocation1 [shape = 'u32[144,128]{1,0:T(1,128)}', space=vmem, size = 0x12000, scoped, tag = 'internal scratch']
  %s0 = inlined_call_operand.vmem [shape: f32[8,384], index: 0, kind: input, shape index: {}]
  %s1 = inlined_call_operand.vmem [shape: f32[8,384], index: 1, kind: input, shape index: {}]
  %s2 = inlined_call_operand.vmem [shape: f32[8,4096], index: 2, kind: input, shape index: {}]
  %s3 = inlined_call_operand.vmem [shape: f32[8,128], index: 3, kind: input, shape index: {}]
  %s4 = inlined_call_operand.vmem [shape: f32[384,256], index: 4, kind: input, shape index: {}]
  %s5 = inlined_call_operand.vmem [shape: f32[1,256], index: 5, kind: input, shape index: {}]
  %s6 = inlined_call_operand.vmem [shape: f32[384,256], index: 6, kind: input, shape index: {}]
  %s7 = inlined_call_operand.vmem [shape: f32[1,256], index: 7, kind: input, shape index: {}]
  %s8 = inlined_call_operand.vmem [shape: f32[256,256], index: 8, kind: input, shape index: {}]
  %s9 = inlined_call_operand.vmem [shape: f32[256,256], index: 9, kind: input, shape index: {}]
  %s10 = inlined_call_operand.vmem [shape: f32[1,256], index: 10, kind: input, shape index: {}]
  %s11 = inlined_call_operand.vmem [shape: f32[256,128], index: 11, kind: input, shape index: {}]
  %s12 = inlined_call_operand.vmem [shape: f32[1,128], index: 12, kind: input, shape index: {}]
  %s13 = inlined_call_operand.vmem [shape: f32[4096,128], index: 13, kind: input, shape index: {}]
  %s14 = inlined_call_operand.vmem [shape: f32[1,128], index: 14, kind: input, shape index: {}]
  %s15 = inlined_call_operand.vmem [shape: f32[128,256], index: 15, kind: input, shape index: {}]
  %s16 = inlined_call_operand.vmem [shape: f32[1,256], index: 16, kind: input, shape index: {}]
  %s17 = inlined_call_operand.vmem [shape: f32[256,128], index: 17, kind: input, shape index: {}]
  %s18 = inlined_call_operand.vmem [shape: f32[1,128], index: 18, kind: input, shape index: {}]
  %s19 = inlined_call_operand.vmem [shape: f32[128,128], index: 19, kind: input, shape index: {}]
  %s20 = inlined_call_operand.vmem [shape: f32[1,128], index: 20, kind: input, shape index: {}]
  %s21 = inlined_call_operand.vmem [shape: f32[128,128], index: 21, kind: input, shape index: {}]
  %s22 = inlined_call_operand.vmem [shape: f32[128,128], index: 22, kind: input, shape index: {}]
  %s23 = inlined_call_operand.vmem [shape: f32[1,128], index: 23, kind: input, shape index: {}]
  %s24 = inlined_call_operand.vmem [shape: f32[128,128], index: 24, kind: input, shape index: {}]
  %s25 = inlined_call_operand.vmem [shape: f32[1,128], index: 25, kind: input, shape index: {}]
  %s26 = inlined_call_operand.vmem [shape: f32[8,128], index: 26, kind: output, shape index: {}]
  %s27 = sld [smem:[#allocation0]]
  $region114: #{attention_layer_forward.5} parent=0
    _
  %s29 = ssub.s32 1, %s27
  %s30 = scalar_select 0, %s29, %s27
  // Predicated region
  $region2: #{attention_layer_forward.5} parent=0 // pred_check
    _
  $region3: #{attention_layer_forward.5} parent=0 // pred_check_branch
    %32 = sbr.rel (0) target = $region5
  $region4: #{attention_layer_forward.5} parent=0 // pred_region
    _
  $region5: #{attention_layer_forward.5} parent=0 // pred_fallthru
    _
  // Predicated region
  $region6: #{attention_layer_forward.5} parent=0 // pred_check
    _
  $region7: #{attention_layer_forward.5} parent=0 // pred_check_branch
    %34 = sbr.rel (0) target = $region9
  $region8: #{attention_layer_forward.5} parent=0 // pred_region
    _
  $region9: #{attention_layer_forward.5} parent=0 // pred_fallthru
    _
  // Predicated region
  $region10: #{attention_layer_forward.5} parent=0 // pred_check
    _
  $region11: #{attention_layer_forward.5} parent=0 // pred_check_branch
    %36 = sbr.rel (0) target = $region13
  $region12: #{attention_layer_forward.5} parent=0 // pred_region
    _
  $region13: #{attention_layer_forward.5} parent=0 // pred_fallthru
    _
  // Predicated region
  $region14: #{attention_layer_forward.5} parent=0 // pred_check
    _
  $region15: #{attention_layer_forward.5} parent=0 // pred_check_branch
    %38 = sbr.rel (0) target = $region17
  $region16: #{attention_layer_forward.5} parent=0 // pred_region
    _
  $region17: #{attention_layer_forward.5} parent=0 // pred_fallthru
    _
  // Predicated region
  $region18: #{attention_layer_forward.5} parent=0 // pred_check
    _
  $region19: #{attention_layer_forward.5} parent=0 // pred_check_branch
    %40 = sbr.rel (0) target = $region21
  $region20: #{attention_layer_forward.5} parent=0 // pred_region
    _
  $region21: #{attention_layer_forward.5} parent=0 // pred_fallthru
    _
  // Predicated region
  $region22: #{attention_layer_forward.5} parent=0 // pred_check
    _
  $region23: #{attention_layer_forward.5} parent=0 // pred_check_branch
    %42 = sbr.rel (0) target = $region25
  $region24: #{attention_layer_forward.5} parent=0 // pred_region
    _
  $region25: #{attention_layer_forward.5} parent=0 // pred_fallthru
    _
  // Predicated region
  $region26: #{attention_layer_forward.5} parent=0 // pred_check
    _
  $region27: #{attention_layer_forward.5} parent=0 // pred_check_branch
    %44 = sbr.rel (0) target = $region29
  $region28: #{attention_layer_forward.5} parent=0 // pred_region
    _
  $region29: #{attention_layer_forward.5} parent=0 // pred_fallthru
    _
  // Predicated region
  $region30: #{attention_layer_forward.5} parent=0 // pred_check
    _
  $region31: #{attention_layer_forward.5} parent=0 // pred_check_branch
    %46 = sbr.rel (0) target = $region33
  $region32: #{attention_layer_forward.5} parent=0 // pred_region
    _
  $region33: #{attention_layer_forward.5} parent=0 // pred_fallthru
    _
  // Predicated region
  $region34: #{attention_layer_forward.5} parent=0 // pred_check
    _
  $region35: #{attention_layer_forward.5} parent=0 // pred_check_branch
    %48 = sbr.rel (0) target = $region37
  $region36: #{attention_layer_forward.5} parent=0 // pred_region
    _
  $region37: #{attention_layer_forward.5} parent=0 // pred_fallthru
    _
  // Predicated region
  $region38: #{attention_layer_forward.5} parent=0 // pred_check
    _
  $region39: #{attention_layer_forward.5} parent=0 // pred_check_branch
    %50 = sbr.rel (0) target = $region41
  $region40: #{attention_layer_forward.5} parent=0 // pred_region
    _
  $region41: #{attention_layer_forward.5} parent=0 // pred_fallthru
    _
  // Predicated region
  $region42: #{attention_layer_forward.5} parent=0 // pred_check
    _
  $region43: #{attention_layer_forward.5} parent=0 // pred_check_branch
    %52 = sbr.rel (0) target = $region45
  $region44: #{attention_layer_forward.5} parent=0 // pred_region
    _
  $region45: #{attention_layer_forward.5} parent=0 // pred_fallthru
    _
  // Predicated region
  $region46: #{attention_layer_forward.5} parent=0 // pred_check
    _
  $region47: #{attention_layer_forward.5} parent=0 // pred_check_branch
    %54 = sbr.rel (0) target = $region49
  $region48: #{attention_layer_forward.5} parent=0 // pred_region
    _
  $region49: #{attention_layer_forward.5} parent=0 // pred_fallthru
    _
  // Predicated region
  $region50: #{attention_layer_forward.5} parent=0 // pred_check
    _
  $region51: #{attention_layer_forward.5} parent=0 // pred_check_branch
    %56 = sbr.rel (0) target = $region53
  $region52: #{attention_layer_forward.5} parent=0 // pred_region
    _
  $region53: #{attention_layer_forward.5} parent=0 // pred_fallthru
    _
  // Predicated region
  $region54: #{attention_layer_forward.5} parent=0 // pred_check
    _
  $region55: #{attention_layer_forward.5} parent=0 // pred_check_branch
    %58 = sbr.rel (0) target = $region57
  $region56: #{attention_layer_forward.5} parent=0 // pred_region
    _
  $region57: #{attention_layer_forward.5} parent=0 // pred_fallthru
    _
  // Predicated region
  $region58: #{attention_layer_forward.5} parent=0 // pred_check
    _
  $region59: #{attention_layer_forward.5} parent=0 // pred_check_branch
    %60 = sbr.rel (0) target = $region61
  $region60: #{attention_layer_forward.5} parent=0 // pred_region
    _
  $region61: #{attention_layer_forward.5} parent=0 // pred_fallthru
    _
  // Predicated region
  $region62: #{attention_layer_forward.5} parent=0 // pred_check
    _
  $region63: #{attention_layer_forward.5} parent=0 // pred_check_branch
    %62 = sbr.rel (0) target = $region65
  $region64: #{attention_layer_forward.5} parent=0 // pred_region
    _
  $region65: #{attention_layer_forward.5} parent=0 // pred_fallthru
    _
  // Predicated region
  $region66: #{attention_layer_forward.5} parent=0 // pred_check
    _
  $region67: #{attention_layer_forward.5} parent=0 // pred_check_branch
    %64 = sbr.rel (0) target = $region69
  $region68: #{attention_layer_forward.5} parent=0 // pred_region
    _
  $region69: #{attention_layer_forward.5} parent=0 // pred_fallthru
    _
  // Predicated region
  $region70: #{attention_layer_forward.5} parent=0 // pred_check
    _
  $region71: #{attention_layer_forward.5} parent=0 // pred_check_branch
    %66 = sbr.rel (0) target = $region73
  $region72: #{attention_layer_forward.5} parent=0 // pred_region
    _
  $region73: #{attention_layer_forward.5} parent=0 // pred_fallthru
    _
  // Predicated region
  $region74: #{attention_layer_forward.5} parent=0 // pred_check
    _
  $region75: #{attention_layer_forward.5} parent=0 // pred_check_branch
    %68 = sbr.rel (0) target = $region77
  $region76: #{attention_layer_forward.5} parent=0 // pred_region
    _
  $region77: #{attention_layer_forward.5} parent=0 // pred_fallthru
    _
  // Predicated region
  $region78: #{attention_layer_forward.5} parent=0 // pred_check
    _
  $region79: #{attention_layer_forward.5} parent=0 // pred_check_branch
    %70 = sbr.rel (0) target = $region81
  $region80: #{attention_layer_forward.5} parent=0 // pred_region
    _
  $region81: #{attention_layer_forward.5} parent=0 // pred_fallthru
    _
  // Predicated region
  $region82: #{attention_layer_forward.5} parent=0 // pred_check
    _
  $region83: #{attention_layer_forward.5} parent=0 // pred_check_branch
    %72 = sbr.rel (0) target = $region85
  $region84: #{attention_layer_forward.5} parent=0 // pred_region
    _
  $region85: #{attention_layer_forward.5} parent=0 // pred_fallthru
    _
  // Predicated region
  $region86: #{attention_layer_forward.5} parent=0 // pred_check
    _
  $region87: #{attention_layer_forward.5} parent=0 // pred_check_branch
    %74 = sbr.rel (0) target = $region89
  $region88: #{attention_layer_forward.5} parent=0 // pred_region
    _
  $region89: #{attention_layer_forward.5} parent=0 // pred_fallthru
    _
  // Predicated region
  $region90: #{attention_layer_forward.5} parent=0 // pred_check
    _
  $region91: #{attention_layer_forward.5} parent=0 // pred_check_branch
    %76 = sbr.rel (0) target = $region93
  $region92: #{attention_layer_forward.5} parent=0 // pred_region
    _
  $region93: #{attention_layer_forward.5} parent=0 // pred_fallthru
    _
  // Predicated region
  $region94: #{attention_layer_forward.5} parent=0 // pred_check
    _
  $region95: #{attention_layer_forward.5} parent=0 // pred_check_branch
    %78 = sbr.rel (0) target = $region97
  $region96: #{attention_layer_forward.5} parent=0 // pred_region
    _
  $region97: #{attention_layer_forward.5} parent=0 // pred_fallthru
    _
  // Predicated region
  $region98: #{attention_layer_forward.5} parent=0 // pred_check
    _
  $region99: #{attention_layer_forward.5} parent=0 // pred_check_branch
    %80 = sbr.rel (0) target = $region101
  $region100: #{attention_layer_forward.5} parent=0 // pred_region
    _
  $region101: #{attention_layer_forward.5} parent=0 // pred_fallthru
    _
  // Predicated region
  $region102: #{attention_layer_forward.5} parent=0 // pred_check
    _
  $region103: #{attention_layer_forward.5} parent=0 // pred_check_branch
    %82 = sbr.rel (0) target = $region105
  $region104: #{attention_layer_forward.5} parent=0 // pred_region
    _
  $region105: #{attention_layer_forward.5} parent=0 // pred_fallthru
    _
  %v83 = vld [vmem:[%s0] sm:$0xff]
  %v84 = vld [vmem:[%s0 + $0x8] sm:$0xff]
  %v85 = vld [vmem:[%s0 + $0x10] sm:$0xff]
  %v86 = vld [vmem:[%s1] sm:$0xff]
  %v87 = vld [vmem:[%s1 + $0x8] sm:$0xff]
  %v88 = vld [vmem:[%s1 + $0x10] sm:$0xff]
  %v89 = vld [vmem:[%s4] sm:$0xff]
  %v90 = vld [vmem:[%s4 + $0x8] sm:$0xff]
  %v91 = vld [vmem:[%s4 + $0x10] sm:$0xff]
  %v92 = vld [vmem:[%s4 + $0x18] sm:$0xff]
  %v93 = vld [vmem:[%s4 + $0x20] sm:$0xff]
  %v94 = vld [vmem:[%s4 + $0x28] sm:$0xff]
  %v95 = vld [vmem:[%s4 + $0x30] sm:$0xff]
  %v96 = vld [vmem:[%s4 + $0x38] sm:$0xff]
  %v97 = vld [vmem:[%s4 + $0x40] sm:$0xff]
  %v98 = vld [vmem:[%s4 + $0x48] sm:$0xff]
  %v99 = vld [vmem:[%s4 + $0x50] sm:$0xff]
  %v100 = vld [vmem:[%s4 + $0x58] sm:$0xff]
  %v101 = vld [vmem:[%s4 + $0x60] sm:$0xff]
  %v102 = vld [vmem:[%s4 + $0x68] sm:$0xff]
  %v103 = vld [vmem:[%s4 + $0x70] sm:$0xff]
  %v104 = vld [vmem:[%s4 + $0x78] sm:$0xff]
  %v105 = vld [vmem:[%s4 + $0x80] sm:$0xff]
  %v106 = vld [vmem:[%s4 + $0x88] sm:$0xff]
  %v107 = vld [vmem:[%s4 + $0x90] sm:$0xff]
  %v108 = vld [vmem:[%s4 + $0x98] sm:$0xff]
  %v109 = vld [vmem:[%s4 + $0xa0] sm:$0xff]
  %v110 = vld [vmem:[%s4 + $0xa8] sm:$0xff]
  %v111 = vld [vmem:[%s4 + $0xb0] sm:$0xff]
  %v112 = vld [vmem:[%s4 + $0xb8] sm:$0xff]
  %v113 = vld [vmem:[%s4 + $0xc0] sm:$0xff]
  %v114 = vld [vmem:[%s4 + $0xc8] sm:$0xff]
  %v115 = vld [vmem:[%s4 + $0xd0] sm:$0xff]
  %v116 = vld [vmem:[%s4 + $0xd8] sm:$0xff]
  %v117 = vld [vmem:[%s4 + $0xe0] sm:$0xff]
  %v118 = vld [vmem:[%s4 + $0xe8] sm:$0xff]
  %v119 = vld [vmem:[%s4 + $0xf0] sm:$0xff]
  %v120 = vld [vmem:[%s4 + $0xf8] sm:$0xff]
  %v121 = vld [vmem:[%s4 + $0x100] sm:$0xff]
  %v122 = vld [vmem:[%s4 + $0x108] sm:$0xff]
  %v123 = vld [vmem:[%s4 + $0x110] sm:$0xff]
  %v124 = vld [vmem:[%s4 + $0x118] sm:$0xff]
  %v125 = vld [vmem:[%s4 + $0x120] sm:$0xff]
  %v126 = vld [vmem:[%s4 + $0x128] sm:$0xff]
  %v127 = vld [vmem:[%s4 + $0x130] sm:$0xff]
  %v128 = vld [vmem:[%s4 + $0x138] sm:$0xff]
  %v129 = vld [vmem:[%s4 + $0x140] sm:$0xff]
  %v130 = vld [vmem:[%s4 + $0x148] sm:$0xff]
  %v131 = vld [vmem:[%s4 + $0x150] sm:$0xff]
  %v132 = vld [vmem:[%s4 + $0x158] sm:$0xff]
  %v133 = vld [vmem:[%s4 + $0x160] sm:$0xff]
  %v134 = vld [vmem:[%s4 + $0x168] sm:$0xff]
  %v135 = vld [vmem:[%s4 + $0x170] sm:$0xff]
  %v136 = vld [vmem:[%s4 + $0x178] sm:$0xff]
  %v137 = vld [vmem:[%s4 + $0x180] sm:$0xff]
  %v138 = vld [vmem:[%s4 + $0x188] sm:$0xff]
  %v139 = vld [vmem:[%s4 + $0x190] sm:$0xff]
  %v140 = vld [vmem:[%s4 + $0x198] sm:$0xff]
  %v141 = vld [vmem:[%s4 + $0x1a0] sm:$0xff]
  %v142 = vld [vmem:[%s4 + $0x1a8] sm:$0xff]
  %v143 = vld [vmem:[%s4 + $0x1b0] sm:$0xff]
  %v144 = vld [vmem:[%s4 + $0x1b8] sm:$0xff]
  %v145 = vld [vmem:[%s4 + $0x1c0] sm:$0xff]
  %v146 = vld [vmem:[%s4 + $0x1c8] sm:$0xff]
  %v147 = vld [vmem:[%s4 + $0x1d0] sm:$0xff]
  %v148 = vld [vmem:[%s4 + $0x1d8] sm:$0xff]
  %v149 = vld [vmem:[%s4 + $0x1e0] sm:$0xff]
  %v150 = vld [vmem:[%s4 + $0x1e8] sm:$0xff]
  %v151 = vld [vmem:[%s4 + $0x1f0] sm:$0xff]
  %v152 = vld [vmem:[%s4 + $0x1f8] sm:$0xff]
  %v153 = vld [vmem:[%s4 + $0x200] sm:$0xff]
  %v154 = vld [vmem:[%s4 + $0x208] sm:$0xff]
  %v155 = vld [vmem:[%s4 + $0x210] sm:$0xff]
  %v156 = vld [vmem:[%s4 + $0x218] sm:$0xff]
  %v157 = vld [vmem:[%s4 + $0x220] sm:$0xff]
  %v158 = vld [vmem:[%s4 + $0x228] sm:$0xff]
  %v159 = vld [vmem:[%s4 + $0x230] sm:$0xff]
  %v160 = vld [vmem:[%s4 + $0x238] sm:$0xff]
  %v161 = vld [vmem:[%s4 + $0x240] sm:$0xff]
  %v162 = vld [vmem:[%s4 + $0x248] sm:$0xff]
  %v163 = vld [vmem:[%s4 + $0x250] sm:$0xff]
  %v164 = vld [vmem:[%s4 + $0x258] sm:$0xff]
  %v165 = vld [vmem:[%s4 + $0x260] sm:$0xff]
  %v166 = vld [vmem:[%s4 + $0x268] sm:$0xff]
  %v167 = vld [vmem:[%s4 + $0x270] sm:$0xff]
  %v168 = vld [vmem:[%s4 + $0x278] sm:$0xff]
  %v169 = vld [vmem:[%s4 + $0x280] sm:$0xff]
  %v170 = vld [vmem:[%s4 + $0x288] sm:$0xff]
  %v171 = vld [vmem:[%s4 + $0x290] sm:$0xff]
  %v172 = vld [vmem:[%s4 + $0x298] sm:$0xff]
  %v173 = vld [vmem:[%s4 + $0x2a0] sm:$0xff]
  %v174 = vld [vmem:[%s4 + $0x2a8] sm:$0xff]
  %v175 = vld [vmem:[%s4 + $0x2b0] sm:$0xff]
  %v176 = vld [vmem:[%s4 + $0x2b8] sm:$0xff]
  %v177 = vld [vmem:[%s4 + $0x2c0] sm:$0xff]
  %v178 = vld [vmem:[%s4 + $0x2c8] sm:$0xff]
  %v179 = vld [vmem:[%s4 + $0x2d0] sm:$0xff]
  %v180 = vld [vmem:[%s4 + $0x2d8] sm:$0xff]
  %v181 = vld [vmem:[%s4 + $0x2e0] sm:$0xff]
  %v182 = vld [vmem:[%s4 + $0x2e8] sm:$0xff]
  %v183 = vld [vmem:[%s4 + $0x2f0] sm:$0xff]
  %v184 = vld [vmem:[%s4 + $0x2f8] sm:$0xff]
  %v185 = vld [vmem:[%s5] sm:$0x3]
  %v187 = vlaneseq
  %v188 = vshrl.u32 %v187, 7
  %v189 = vsub.s32 0, %v188
  %v190 = vrot.slane %v185, %v189
  %v191 = vlaneseq
  %v192 = vshrl.u32 %v191, 7
  %v193 = vsub.s32 1, %v192
  %v194 = vrot.slane %v185, %v193
  %197 = vmatprep.subr.mxu0 %v90
  %198 = vmatpush1.msra.mxu0 %v89
  %199 = vmatprep.subr.mxu0 %v92
  %200 = vmatpush1.msra.mxu0 %v91
  %201 = vmatprep.subr.mxu0 %v94
  %202 = vmatpush1.msra.mxu0 %v93
  %203 = vmatprep.subr.mxu0 %v96
  %204 = vmatpush1.msra.mxu0 %v95
  %205 = vmatprep.subr.mxu0 %v98
  %206 = vmatpush1.msra.mxu0 %v97
  %207 = vmatprep.subr.mxu0 %v100
  %208 = vmatpush1.msra.mxu0 %v99
  %209 = vmatprep.subr.mxu0 %v102
  %210 = vmatpush1.msra.mxu0 %v101
  %211 = vmatprep.subr.mxu0 %v104
  %212 = vmatpush1.msra.mxu0 %v103
  %213 = vmatprep.subr.mxu0 %v106
  %214 = vmatpush1.msra.mxu0 %v105
  %215 = vmatprep.subr.mxu0 %v108
  %216 = vmatpush1.msra.mxu0 %v107
  %217 = vmatprep.subr.mxu0 %v110
  %218 = vmatpush1.msra.mxu0 %v109
  %219 = vmatprep.subr.mxu0 %v112
  %220 = vmatpush1.msra.mxu0 %v111
  %221 = vmatprep.subr.mxu0 %v114
  %222 = vmatpush1.msra.mxu0 %v113
  %223 = vmatprep.subr.mxu0 %v116
  %224 = vmatpush1.msra.mxu0 %v115
  %225 = vmatprep.subr.mxu0 %v118
  %226 = vmatpush1.msra.mxu0 %v117
  %227 = vmatprep.subr.mxu0 %v120
  %228 = vmatpush1.msra.mxu0 %v119
  %229 = vmatprep.subr.mxu0 %v122
  %230 = vmatpush1.msra.mxu0 %v121
  %231 = vmatprep.subr.mxu0 %v124
  %232 = vmatpush1.msra.mxu0 %v123
  %233 = vmatprep.subr.mxu0 %v126
  %234 = vmatpush1.msra.mxu0 %v125
  %235 = vmatprep.subr.mxu0 %v128
  %236 = vmatpush1.msra.mxu0 %v127
  %237 = vmatprep.subr.mxu0 %v130
  %238 = vmatpush1.msra.mxu0 %v129
  %239 = vmatprep.subr.mxu0 %v132
  %240 = vmatpush1.msra.mxu0 %v131
  %241 = vmatprep.subr.mxu0 %v134
  %242 = vmatpush1.msra.mxu0 %v133
  %243 = vmatprep.subr.mxu0 %v136
  %244 = vmatpush1.msra.mxu0 %v135
  %245 = vmatprep.subr.mxu0 %v138
  %246 = vmatpush1.msra.mxu0 %v137
  %247 = vmatprep.subr.mxu0 %v140
  %248 = vmatpush1.msra.mxu0 %v139
  %249 = vmatprep.subr.mxu0 %v142
  %250 = vmatpush1.msra.mxu0 %v141
  %251 = vmatprep.subr.mxu0 %v144
  %252 = vmatpush1.msra.mxu0 %v143
  %253 = vmatprep.subr.mxu0 %v146
  %254 = vmatpush1.msra.mxu0 %v145
  %255 = vmatprep.subr.mxu0 %v148
  %256 = vmatpush1.msra.mxu0 %v147
  %257 = vmatprep.subr.mxu0 %v150
  %258 = vmatpush1.msra.mxu0 %v149
  %259 = vmatprep.subr.mxu0 %v152
  %260 = vmatpush1.msra.mxu0 %v151
  %261 = vmatprep.mubr.f32.mxu0 %v84
  %262 = vmatmul.mubr.f32.gmra.mrb[0].mxu0 %v83
  %v263 = vpop.f32.mrb[0].mxu0
  %v264 = vadd.f32 %v190, %v263
  %v265 = vpop.f32.mrb[0].mxu0
  %v266 = vadd.f32 %v194, %v265
  %267 = vdwg.mxu0
  %268 = vmatprep.subr.mxu0 %v154
  %269 = vmatpush1.msra.mxu0 %v153
  %270 = vmatprep.subr.mxu0 %v156
  %271 = vmatpush1.msra.mxu0 %v155
  %272 = vmatprep.subr.mxu0 %v158
  %273 = vmatpush1.msra.mxu0 %v157
  %274 = vmatprep.subr.mxu0 %v160
  %275 = vmatpush1.msra.mxu0 %v159
  %276 = vmatprep.subr.mxu0 %v162
  %277 = vmatpush1.msra.mxu0 %v161
  %278 = vmatprep.subr.mxu0 %v164
  %279 = vmatpush1.msra.mxu0 %v163
  %280 = vmatprep.subr.mxu0 %v166
  %281 = vmatpush1.msra.mxu0 %v165
  %282 = vmatprep.subr.mxu0 %v168
  %283 = vmatpush1.msra.mxu0 %v167
  %284 = vmatprep.subr.mxu0 %v170
  %285 = vmatpush1.msra.mxu0 %v169
  %286 = vmatprep.subr.mxu0 %v172
  %287 = vmatpush1.msra.mxu0 %v171
  %288 = vmatprep.subr.mxu0 %v174
  %289 = vmatpush1.msra.mxu0 %v173
  %290 = vmatprep.subr.mxu0 %v176
  %291 = vmatpush1.msra.mxu0 %v175
  %292 = vmatprep.subr.mxu0 %v178
  %293 = vmatpush1.msra.mxu0 %v177
  %294 = vmatprep.subr.mxu0 %v180
  %295 = vmatpush1.msra.mxu0 %v179
  %296 = vmatprep.subr.mxu0 %v182
  %297 = vmatpush1.msra.mxu0 %v181
  %298 = vmatprep.subr.mxu0 %v184
  %299 = vmatpush1.msra.mxu0 %v183
  %300 = vmatprep.subr.mxu0 0.0
  %301 = vmatpush1.msra.mxu0 0.0
  %302 = vmatprep.subr.mxu0 0.0
  %303 = vmatpush1.msra.mxu0 0.0
  %304 = vmatprep.subr.mxu0 0.0
  %305 = vmatpush1.msra.mxu0 0.0
  %306 = vmatprep.subr.mxu0 0.0
  %307 = vmatpush1.msra.mxu0 0.0
  %308 = vmatprep.subr.mxu0 0.0
  %309 = vmatpush1.msra.mxu0 0.0
  %310 = vmatprep.subr.mxu0 0.0
  %311 = vmatpush1.msra.mxu0 0.0
  %312 = vmatprep.subr.mxu0 0.0
  %313 = vmatpush1.msra.mxu0 0.0
  %314 = vmatprep.subr.mxu0 0.0
  %315 = vmatpush1.msra.mxu0 0.0
  %316 = vmatprep.subr.mxu0 0.0
  %317 = vmatpush1.msra.mxu0 0.0
  %318 = vmatprep.subr.mxu0 0.0
  %319 = vmatpush1.msra.mxu0 0.0
  %320 = vmatprep.subr.mxu0 0.0
  %321 = vmatpush1.msra.mxu0 0.0
  %322 = vmatprep.subr.mxu0 0.0
  %323 = vmatpush1.msra.mxu0 0.0
  %324 = vmatprep.subr.mxu0 0.0
  %325 = vmatpush1.msra.mxu0 0.0
  %326 = vmatprep.subr.mxu0 0.0
  %327 = vmatpush1.msra.mxu0 0.0
  %328 = vmatprep.subr.mxu0 0.0
  %329 = vmatpush1.msra.mxu0 0.0
  %330 = vmatprep.subr.mxu0 0.0
  %331 = vmatpush1.msra.mxu0 0.0
  %332 = vmatprep.mubr.f32.mxu0 0.0
  %333 = vmatmul.mubr.f32.gmra.mrb[0].mxu0 %v85
  %v334 = vpop.f32.mrb[0].mxu0
  %v335 = vadd.f32 %v264, %v334
  %v336 = vpop.f32.mrb[0].mxu0
  %v337 = vadd.f32 %v266, %v336
  %338 = vdwg.mxu0
  %v339 = vmax.f32 %v335, 0.0
  %v340 = vmax.f32 %v337, 0.0
  %v341 = vld [vmem:[%s6] sm:$0xff]
  %v342 = vld [vmem:[%s6 + $0x8] sm:$0xff]
  %v343 = vld [vmem:[%s6 + $0x10] sm:$0xff]
  %v344 = vld [vmem:[%s6 + $0x18] sm:$0xff]
  %v345 = vld [vmem:[%s6 + $0x20] sm:$0xff]
  %v346 = vld [vmem:[%s6 + $0x28] sm:$0xff]
  %v347 = vld [vmem:[%s6 + $0x30] sm:$0xff]
  %v348 = vld [vmem:[%s6 + $0x38] sm:$0xff]
  %v349 = vld [vmem:[%s6 + $0x40] sm:$0xff]
  %v350 = vld [vmem:[%s6 + $0x48] sm:$0xff]
  %v351 = vld [vmem:[%s6 + $0x50] sm:$0xff]
  %v352 = vld [vmem:[%s6 + $0x58] sm:$0xff]
  %v353 = vld [vmem:[%s6 + $0x60] sm:$0xff]
  %v354 = vld [vmem:[%s6 + $0x68] sm:$0xff]
  %v355 = vld [vmem:[%s6 + $0x70] sm:$0xff]
  %v356 = vld [vmem:[%s6 + $0x78] sm:$0xff]
  %v357 = vld [vmem:[%s6 + $0x80] sm:$0xff]
  %v358 = vld [vmem:[%s6 + $0x88] sm:$0xff]
  %v359 = vld [vmem:[%s6 + $0x90] sm:$0xff]
  %v360 = vld [vmem:[%s6 + $0x98] sm:$0xff]
  %v361 = vld [vmem:[%s6 + $0xa0] sm:$0xff]
  %v362 = vld [vmem:[%s6 + $0xa8] sm:$0xff]
  %v363 = vld [vmem:[%s6 + $0xb0] sm:$0xff]
  %v364 = vld [vmem:[%s6 + $0xb8] sm:$0xff]
  %v365 = vld [vmem:[%s6 + $0xc0] sm:$0xff]
  %v366 = vld [vmem:[%s6 + $0xc8] sm:$0xff]
  %v367 = vld [vmem:[%s6 + $0xd0] sm:$0xff]
  %v368 = vld [vmem:[%s6 + $0xd8] sm:$0xff]
  %v369 = vld [vmem:[%s6 + $0xe0] sm:$0xff]
  %v370 = vld [vmem:[%s6 + $0xe8] sm:$0xff]
  %v371 = vld [vmem:[%s6 + $0xf0] sm:$0xff]
  %v372 = vld [vmem:[%s6 + $0xf8] sm:$0xff]
  %v373 = vld [vmem:[%s6 + $0x100] sm:$0xff]
  %v374 = vld [vmem:[%s6 + $0x108] sm:$0xff]
  %v375 = vld [vmem:[%s6 + $0x110] sm:$0xff]
  %v376 = vld [vmem:[%s6 + $0x118] sm:$0xff]
  %v377 = vld [vmem:[%s6 + $0x120] sm:$0xff]
  %v378 = vld [vmem:[%s6 + $0x128] sm:$0xff]
  %v379 = vld [vmem:[%s6 + $0x130] sm:$0xff]
  %v380 = vld [vmem:[%s6 + $0x138] sm:$0xff]
  %v381 = vld [vmem:[%s6 + $0x140] sm:$0xff]
  %v382 = vld [vmem:[%s6 + $0x148] sm:$0xff]
  %v383 = vld [vmem:[%s6 + $0x150] sm:$0xff]
  %v384 = vld [vmem:[%s6 + $0x158] sm:$0xff]
  %v385 = vld [vmem:[%s6 + $0x160] sm:$0xff]
  %v386 = vld [vmem:[%s6 + $0x168] sm:$0xff]
  %v387 = vld [vmem:[%s6 + $0x170] sm:$0xff]
  %v388 = vld [vmem:[%s6 + $0x178] sm:$0xff]
  %v389 = vld [vmem:[%s6 + $0x180] sm:$0xff]
  %v390 = vld [vmem:[%s6 + $0x188] sm:$0xff]
  %v391 = vld [vmem:[%s6 + $0x190] sm:$0xff]
  %v392 = vld [vmem:[%s6 + $0x198] sm:$0xff]
  %v393 = vld [vmem:[%s6 + $0x1a0] sm:$0xff]
  %v394 = vld [vmem:[%s6 + $0x1a8] sm:$0xff]
  %v395 = vld [vmem:[%s6 + $0x1b0] sm:$0xff]
  %v396 = vld [vmem:[%s6 + $0x1b8] sm:$0xff]
  %v397 = vld [vmem:[%s6 + $0x1c0] sm:$0xff]
  %v398 = vld [vmem:[%s6 + $0x1c8] sm:$0xff]
  %v399 = vld [vmem:[%s6 + $0x1d0] sm:$0xff]
  %v400 = vld [vmem:[%s6 + $0x1d8] sm:$0xff]
  %v401 = vld [vmem:[%s6 + $0x1e0] sm:$0xff]
  %v402 = vld [vmem:[%s6 + $0x1e8] sm:$0xff]
  %v403 = vld [vmem:[%s6 + $0x1f0] sm:$0xff]
  %v404 = vld [vmem:[%s6 + $0x1f8] sm:$0xff]
  %v405 = vld [vmem:[%s6 + $0x200] sm:$0xff]
  %v406 = vld [vmem:[%s6 + $0x208] sm:$0xff]
  %v407 = vld [vmem:[%s6 + $0x210] sm:$0xff]
  %v408 = vld [vmem:[%s6 + $0x218] sm:$0xff]
  %v409 = vld [vmem:[%s6 + $0x220] sm:$0xff]
  %v410 = vld [vmem:[%s6 + $0x228] sm:$0xff]
  %v411 = vld [vmem:[%s6 + $0x230] sm:$0xff]
  %v412 = vld [vmem:[%s6 + $0x238] sm:$0xff]
  %v413 = vld [vmem:[%s6 + $0x240] sm:$0xff]
  %v414 = vld [vmem:[%s6 + $0x248] sm:$0xff]
  %v415 = vld [vmem:[%s6 + $0x250] sm:$0xff]
  %v416 = vld [vmem:[%s6 + $0x258] sm:$0xff]
  %v417 = vld [vmem:[%s6 + $0x260] sm:$0xff]
  %v418 = vld [vmem:[%s6 + $0x268] sm:$0xff]
  %v419 = vld [vmem:[%s6 + $0x270] sm:$0xff]
  %v420 = vld [vmem:[%s6 + $0x278] sm:$0xff]
  %v421 = vld [vmem:[%s6 + $0x280] sm:$0xff]
  %v422 = vld [vmem:[%s6 + $0x288] sm:$0xff]
  %v423 = vld [vmem:[%s6 + $0x290] sm:$0xff]
  %v424 = vld [vmem:[%s6 + $0x298] sm:$0xff]
  %v425 = vld [vmem:[%s6 + $0x2a0] sm:$0xff]
  %v426 = vld [vmem:[%s6 + $0x2a8] sm:$0xff]
  %v427 = vld [vmem:[%s6 + $0x2b0] sm:$0xff]
  %v428 = vld [vmem:[%s6 + $0x2b8] sm:$0xff]
  %v429 = vld [vmem:[%s6 + $0x2c0] sm:$0xff]
  %v430 = vld [vmem:[%s6 + $0x2c8] sm:$0xff]
  %v431 = vld [vmem:[%s6 + $0x2d0] sm:$0xff]
  %v432 = vld [vmem:[%s6 + $0x2d8] sm:$0xff]
  %v433 = vld [vmem:[%s6 + $0x2e0] sm:$0xff]
  %v434 = vld [vmem:[%s6 + $0x2e8] sm:$0xff]
  %v435 = vld [vmem:[%s6 + $0x2f0] sm:$0xff]
  %v436 = vld [vmem:[%s6 + $0x2f8] sm:$0xff]
  %v437 = vld [vmem:[%s7] sm:$0x3]
  %v439 = vlaneseq
  %v440 = vshrl.u32 %v439, 7
  %v441 = vsub.s32 0, %v440
  %v442 = vrot.slane %v437, %v441
  %v443 = vlaneseq
  %v444 = vshrl.u32 %v443, 7
  %v445 = vsub.s32 1, %v444
  %v446 = vrot.slane %v437, %v445
  %449 = vmatprep.subr.mxu0 %v342
  %450 = vmatpush1.msra.mxu0 %v341
  %451 = vmatprep.subr.mxu0 %v344
  %452 = vmatpush1.msra.mxu0 %v343
  %453 = vmatprep.subr.mxu0 %v346
  %454 = vmatpush1.msra.mxu0 %v345
  %455 = vmatprep.subr.mxu0 %v348
  %456 = vmatpush1.msra.mxu0 %v347
  %457 = vmatprep.subr.mxu0 %v350
  %458 = vmatpush1.msra.mxu0 %v349
  %459 = vmatprep.subr.mxu0 %v352
  %460 = vmatpush1.msra.mxu0 %v351
  %461 = vmatprep.subr.mxu0 %v354
  %462 = vmatpush1.msra.mxu0 %v353
  %463 = vmatprep.subr.mxu0 %v356
  %464 = vmatpush1.msra.mxu0 %v355
  %465 = vmatprep.subr.mxu0 %v358
  %466 = vmatpush1.msra.mxu0 %v357
  %467 = vmatprep.subr.mxu0 %v360
  %468 = vmatpush1.msra.mxu0 %v359
  %469 = vmatprep.subr.mxu0 %v362
  %470 = vmatpush1.msra.mxu0 %v361
  %471 = vmatprep.subr.mxu0 %v364
  %472 = vmatpush1.msra.mxu0 %v363
  %473 = vmatprep.subr.mxu0 %v366
  %474 = vmatpush1.msra.mxu0 %v365
  %475 = vmatprep.subr.mxu0 %v368
  %476 = vmatpush1.msra.mxu0 %v367
  %477 = vmatprep.subr.mxu0 %v370
  %478 = vmatpush1.msra.mxu0 %v369
  %479 = vmatprep.subr.mxu0 %v372
  %480 = vmatpush1.msra.mxu0 %v371
  %481 = vmatprep.subr.mxu0 %v374
  %482 = vmatpush1.msra.mxu0 %v373
  %483 = vmatprep.subr.mxu0 %v376
  %484 = vmatpush1.msra.mxu0 %v375
  %485 = vmatprep.subr.mxu0 %v378
  %486 = vmatpush1.msra.mxu0 %v377
  %487 = vmatprep.subr.mxu0 %v380
  %488 = vmatpush1.msra.mxu0 %v379
  %489 = vmatprep.subr.mxu0 %v382
  %490 = vmatpush1.msra.mxu0 %v381
  %491 = vmatprep.subr.mxu0 %v384
  %492 = vmatpush1.msra.mxu0 %v383
  %493 = vmatprep.subr.mxu0 %v386
  %494 = vmatpush1.msra.mxu0 %v385
  %495 = vmatprep.subr.mxu0 %v388
  %496 = vmatpush1.msra.mxu0 %v387
  %497 = vmatprep.subr.mxu0 %v390
  %498 = vmatpush1.msra.mxu0 %v389
  %499 = vmatprep.subr.mxu0 %v392
  %500 = vmatpush1.msra.mxu0 %v391
  %501 = vmatprep.subr.mxu0 %v394
  %502 = vmatpush1.msra.mxu0 %v393
  %503 = vmatprep.subr.mxu0 %v396
  %504 = vmatpush1.msra.mxu0 %v395
  %505 = vmatprep.subr.mxu0 %v398
  %506 = vmatpush1.msra.mxu0 %v397
  %507 = vmatprep.subr.mxu0 %v400
  %508 = vmatpush1.msra.mxu0 %v399
  %509 = vmatprep.subr.mxu0 %v402
  %510 = vmatpush1.msra.mxu0 %v401
  %511 = vmatprep.subr.mxu0 %v404
  %512 = vmatpush1.msra.mxu0 %v403
  %513 = vmatprep.mubr.f32.mxu0 %v87
  %514 = vmatmul.mubr.f32.gmra.mrb[0].mxu0 %v86
  %v515 = vpop.f32.mrb[0].mxu0
  %v516 = vadd.f32 %v442, %v515
  %v517 = vpop.f32.mrb[0].mxu0
  %v518 = vadd.f32 %v446, %v517
  %519 = vdwg.mxu0
  %520 = vmatprep.subr.mxu0 %v406
  %521 = vmatpush1.msra.mxu0 %v405
  %522 = vmatprep.subr.mxu0 %v408
  %523 = vmatpush1.msra.mxu0 %v407
  %524 = vmatprep.subr.mxu0 %v410
  %525 = vmatpush1.msra.mxu0 %v409
  %526 = vmatprep.subr.mxu0 %v412
  %527 = vmatpush1.msra.mxu0 %v411
  %528 = vmatprep.subr.mxu0 %v414
  %529 = vmatpush1.msra.mxu0 %v413
  %530 = vmatprep.subr.mxu0 %v416
  %531 = vmatpush1.msra.mxu0 %v415
  %532 = vmatprep.subr.mxu0 %v418
  %533 = vmatpush1.msra.mxu0 %v417
  %534 = vmatprep.subr.mxu0 %v420
  %535 = vmatpush1.msra.mxu0 %v419
  %536 = vmatprep.subr.mxu0 %v422
  %537 = vmatpush1.msra.mxu0 %v421
  %538 = vmatprep.subr.mxu0 %v424
  %539 = vmatpush1.msra.mxu0 %v423
  %540 = vmatprep.subr.mxu0 %v426
  %541 = vmatpush1.msra.mxu0 %v425
  %542 = vmatprep.subr.mxu0 %v428
  %543 = vmatpush1.msra.mxu0 %v427
  %544 = vmatprep.subr.mxu0 %v430
  %545 = vmatpush1.msra.mxu0 %v429
  %546 = vmatprep.subr.mxu0 %v432
  %547 = vmatpush1.msra.mxu0 %v431
  %548 = vmatprep.subr.mxu0 %v434
  %549 = vmatpush1.msra.mxu0 %v433
  %550 = vmatprep.subr.mxu0 %v436
  %551 = vmatpush1.msra.mxu0 %v435
  %552 = vmatprep.subr.mxu0 0.0
  %553 = vmatpush1.msra.mxu0 0.0
  %554 = vmatprep.subr.mxu0 0.0
  %555 = vmatpush1.msra.mxu0 0.0
  %556 = vmatprep.subr.mxu0 0.0
  %557 = vmatpush1.msra.mxu0 0.0
  %558 = vmatprep.subr.mxu0 0.0
  %559 = vmatpush1.msra.mxu0 0.0
  %560 = vmatprep.subr.mxu0 0.0
  %561 = vmatpush1.msra.mxu0 0.0
  %562 = vmatprep.subr.mxu0 0.0
  %563 = vmatpush1.msra.mxu0 0.0
  %564 = vmatprep.subr.mxu0 0.0
  %565 = vmatpush1.msra.mxu0 0.0
  %566 = vmatprep.subr.mxu0 0.0
  %567 = vmatpush1.msra.mxu0 0.0
  %568 = vmatprep.subr.mxu0 0.0
  %569 = vmatpush1.msra.mxu0 0.0
  %570 = vmatprep.subr.mxu0 0.0
  %571 = vmatpush1.msra.mxu0 0.0
  %572 = vmatprep.subr.mxu0 0.0
  %573 = vmatpush1.msra.mxu0 0.0
  %574 = vmatprep.subr.mxu0 0.0
  %575 = vmatpush1.msra.mxu0 0.0
  %576 = vmatprep.subr.mxu0 0.0
  %577 = vmatpush1.msra.mxu0 0.0
  %578 = vmatprep.subr.mxu0 0.0
  %579 = vmatpush1.msra.mxu0 0.0
  %580 = vmatprep.subr.mxu0 0.0
  %581 = vmatpush1.msra.mxu0 0.0
  %582 = vmatprep.subr.mxu0 0.0
  %583 = vmatpush1.msra.mxu0 0.0
  %584 = vmatprep.mubr.f32.mxu0 0.0
  %585 = vmatmul.mubr.f32.gmra.mrb[0].mxu0 %v88
  %v586 = vpop.f32.mrb[0].mxu0
  %v587 = vadd.f32 %v516, %v586
  %v588 = vpop.f32.mrb[0].mxu0
  %v589 = vadd.f32 %v518, %v588
  %590 = vdwg.mxu0
  %v591 = vmax.f32 %v587, 0.0
  %v592 = vmax.f32 %v589, 0.0
  %v593 = vld [vmem:[%s8] sm:$0xff]
  %v594 = vld [vmem:[%s8 + $0x8] sm:$0xff]
  %v595 = vld [vmem:[%s8 + $0x10] sm:$0xff]
  %v596 = vld [vmem:[%s8 + $0x18] sm:$0xff]
  %v597 = vld [vmem:[%s8 + $0x20] sm:$0xff]
  %v598 = vld [vmem:[%s8 + $0x28] sm:$0xff]
  %v599 = vld [vmem:[%s8 + $0x30] sm:$0xff]
  %v600 = vld [vmem:[%s8 + $0x38] sm:$0xff]
  %v601 = vld [vmem:[%s8 + $0x40] sm:$0xff]
  %v602 = vld [vmem:[%s8 + $0x48] sm:$0xff]
  %v603 = vld [vmem:[%s8 + $0x50] sm:$0xff]
  %v604 = vld [vmem:[%s8 + $0x58] sm:$0xff]
  %v605 = vld [vmem:[%s8 + $0x60] sm:$0xff]
  %v606 = vld [vmem:[%s8 + $0x68] sm:$0xff]
  %v607 = vld [vmem:[%s8 + $0x70] sm:$0xff]
  %v608 = vld [vmem:[%s8 + $0x78] sm:$0xff]
  %v609 = vld [vmem:[%s8 + $0x80] sm:$0xff]
  %v610 = vld [vmem:[%s8 + $0x88] sm:$0xff]
  %v611 = vld [vmem:[%s8 + $0x90] sm:$0xff]
  %v612 = vld [vmem:[%s8 + $0x98] sm:$0xff]
  %v613 = vld [vmem:[%s8 + $0xa0] sm:$0xff]
  %v614 = vld [vmem:[%s8 + $0xa8] sm:$0xff]
  %v615 = vld [vmem:[%s8 + $0xb0] sm:$0xff]
  %v616 = vld [vmem:[%s8 + $0xb8] sm:$0xff]
  %v617 = vld [vmem:[%s8 + $0xc0] sm:$0xff]
  %v618 = vld [vmem:[%s8 + $0xc8] sm:$0xff]
  %v619 = vld [vmem:[%s8 + $0xd0] sm:$0xff]
  %v620 = vld [vmem:[%s8 + $0xd8] sm:$0xff]
  %v621 = vld [vmem:[%s8 + $0xe0] sm:$0xff]
  %v622 = vld [vmem:[%s8 + $0xe8] sm:$0xff]
  %v623 = vld [vmem:[%s8 + $0xf0] sm:$0xff]
  %v624 = vld [vmem:[%s8 + $0xf8] sm:$0xff]
  %v625 = vld [vmem:[%s8 + $0x100] sm:$0xff]
  %v626 = vld [vmem:[%s8 + $0x108] sm:$0xff]
  %v627 = vld [vmem:[%s8 + $0x110] sm:$0xff]
  %v628 = vld [vmem:[%s8 + $0x118] sm:$0xff]
  %v629 = vld [vmem:[%s8 + $0x120] sm:$0xff]
  %v630 = vld [vmem:[%s8 + $0x128] sm:$0xff]
  %v631 = vld [vmem:[%s8 + $0x130] sm:$0xff]
  %v632 = vld [vmem:[%s8 + $0x138] sm:$0xff]
  %v633 = vld [vmem:[%s8 + $0x140] sm:$0xff]
  %v634 = vld [vmem:[%s8 + $0x148] sm:$0xff]
  %v635 = vld [vmem:[%s8 + $0x150] sm:$0xff]
  %v636 = vld [vmem:[%s8 + $0x158] sm:$0xff]
  %v637 = vld [vmem:[%s8 + $0x160] sm:$0xff]
  %v638 = vld [vmem:[%s8 + $0x168] sm:$0xff]
  %v639 = vld [vmem:[%s8 + $0x170] sm:$0xff]
  %v640 = vld [vmem:[%s8 + $0x178] sm:$0xff]
  %v641 = vld [vmem:[%s8 + $0x180] sm:$0xff]
  %v642 = vld [vmem:[%s8 + $0x188] sm:$0xff]
  %v643 = vld [vmem:[%s8 + $0x190] sm:$0xff]
  %v644 = vld [vmem:[%s8 + $0x198] sm:$0xff]
  %v645 = vld [vmem:[%s8 + $0x1a0] sm:$0xff]
  %v646 = vld [vmem:[%s8 + $0x1a8] sm:$0xff]
  %v647 = vld [vmem:[%s8 + $0x1b0] sm:$0xff]
  %v648 = vld [vmem:[%s8 + $0x1b8] sm:$0xff]
  %v649 = vld [vmem:[%s8 + $0x1c0] sm:$0xff]
  %v650 = vld [vmem:[%s8 + $0x1c8] sm:$0xff]
  %v651 = vld [vmem:[%s8 + $0x1d0] sm:$0xff]
  %v652 = vld [vmem:[%s8 + $0x1d8] sm:$0xff]
  %v653 = vld [vmem:[%s8 + $0x1e0] sm:$0xff]
  %v654 = vld [vmem:[%s8 + $0x1e8] sm:$0xff]
  %v655 = vld [vmem:[%s8 + $0x1f0] sm:$0xff]
  %v656 = vld [vmem:[%s8 + $0x1f8] sm:$0xff]
  %v657 = vld [vmem:[%s9] sm:$0xff]
  %v658 = vld [vmem:[%s9 + $0x8] sm:$0xff]
  %v659 = vld [vmem:[%s9 + $0x10] sm:$0xff]
  %v660 = vld [vmem:[%s9 + $0x18] sm:$0xff]
  %v661 = vld [vmem:[%s9 + $0x20] sm:$0xff]
  %v662 = vld [vmem:[%s9 + $0x28] sm:$0xff]
  %v663 = vld [vmem:[%s9 + $0x30] sm:$0xff]
  %v664 = vld [vmem:[%s9 + $0x38] sm:$0xff]
  %v665 = vld [vmem:[%s9 + $0x40] sm:$0xff]
  %v666 = vld [vmem:[%s9 + $0x48] sm:$0xff]
  %v667 = vld [vmem:[%s9 + $0x50] sm:$0xff]
  %v668 = vld [vmem:[%s9 + $0x58] sm:$0xff]
  %v669 = vld [vmem:[%s9 + $0x60] sm:$0xff]
  %v670 = vld [vmem:[%s9 + $0x68] sm:$0xff]
  %v671 = vld [vmem:[%s9 + $0x70] sm:$0xff]
  %v672 = vld [vmem:[%s9 + $0x78] sm:$0xff]
  %v673 = vld [vmem:[%s9 + $0x80] sm:$0xff]
  %v674 = vld [vmem:[%s9 + $0x88] sm:$0xff]
  %v675 = vld [vmem:[%s9 + $0x90] sm:$0xff]
  %v676 = vld [vmem:[%s9 + $0x98] sm:$0xff]
  %v677 = vld [vmem:[%s9 + $0xa0] sm:$0xff]
  %v678 = vld [vmem:[%s9 + $0xa8] sm:$0xff]
  %v679 = vld [vmem:[%s9 + $0xb0] sm:$0xff]
  %v680 = vld [vmem:[%s9 + $0xb8] sm:$0xff]
  %v681 = vld [vmem:[%s9 + $0xc0] sm:$0xff]
  %v682 = vld [vmem:[%s9 + $0xc8] sm:$0xff]
  %v683 = vld [vmem:[%s9 + $0xd0] sm:$0xff]
  %v684 = vld [vmem:[%s9 + $0xd8] sm:$0xff]
  %v685 = vld [vmem:[%s9 + $0xe0] sm:$0xff]
  %v686 = vld [vmem:[%s9 + $0xe8] sm:$0xff]
  %v687 = vld [vmem:[%s9 + $0xf0] sm:$0xff]
  %v688 = vld [vmem:[%s9 + $0xf8] sm:$0xff]
  %v689 = vld [vmem:[%s9 + $0x100] sm:$0xff]
  %v690 = vld [vmem:[%s9 + $0x108] sm:$0xff]
  %v691 = vld [vmem:[%s9 + $0x110] sm:$0xff]
  %v692 = vld [vmem:[%s9 + $0x118] sm:$0xff]
  %v693 = vld [vmem:[%s9 + $0x120] sm:$0xff]
  %v694 = vld [vmem:[%s9 + $0x128] sm:$0xff]
  %v695 = vld [vmem:[%s9 + $0x130] sm:$0xff]
  %v696 = vld [vmem:[%s9 + $0x138] sm:$0xff]
  %v697 = vld [vmem:[%s9 + $0x140] sm:$0xff]
  %v698 = vld [vmem:[%s9 + $0x148] sm:$0xff]
  %v699 = vld [vmem:[%s9 + $0x150] sm:$0xff]
  %v700 = vld [vmem:[%s9 + $0x158] sm:$0xff]
  %v701 = vld [vmem:[%s9 + $0x160] sm:$0xff]
  %v702 = vld [vmem:[%s9 + $0x168] sm:$0xff]
  %v703 = vld [vmem:[%s9 + $0x170] sm:$0xff]
  %v704 = vld [vmem:[%s9 + $0x178] sm:$0xff]
  %v705 = vld [vmem:[%s9 + $0x180] sm:$0xff]
  %v706 = vld [vmem:[%s9 + $0x188] sm:$0xff]
  %v707 = vld [vmem:[%s9 + $0x190] sm:$0xff]
  %v708 = vld [vmem:[%s9 + $0x198] sm:$0xff]
  %v709 = vld [vmem:[%s9 + $0x1a0] sm:$0xff]
  %v710 = vld [vmem:[%s9 + $0x1a8] sm:$0xff]
  %v711 = vld [vmem:[%s9 + $0x1b0] sm:$0xff]
  %v712 = vld [vmem:[%s9 + $0x1b8] sm:$0xff]
  %v713 = vld [vmem:[%s9 + $0x1c0] sm:$0xff]
  %v714 = vld [vmem:[%s9 + $0x1c8] sm:$0xff]
  %v715 = vld [vmem:[%s9 + $0x1d0] sm:$0xff]
  %v716 = vld [vmem:[%s9 + $0x1d8] sm:$0xff]
  %v717 = vld [vmem:[%s9 + $0x1e0] sm:$0xff]
  %v718 = vld [vmem:[%s9 + $0x1e8] sm:$0xff]
  %v719 = vld [vmem:[%s9 + $0x1f0] sm:$0xff]
  %v720 = vld [vmem:[%s9 + $0x1f8] sm:$0xff]
  %721 = vmatprep.subr.mxu0 %v658
  %722 = vmatpush1.msra.mxu0 %v657
  %723 = vmatprep.subr.mxu0 %v660
  %724 = vmatpush1.msra.mxu0 %v659
  %725 = vmatprep.subr.mxu0 %v662
  %726 = vmatpush1.msra.mxu0 %v661
  %727 = vmatprep.subr.mxu0 %v664
  %728 = vmatpush1.msra.mxu0 %v663
  %729 = vmatprep.subr.mxu0 %v666
  %730 = vmatpush1.msra.mxu0 %v665
  %731 = vmatprep.subr.mxu0 %v668
  %732 = vmatpush1.msra.mxu0 %v667
  %733 = vmatprep.subr.mxu0 %v670
  %734 = vmatpush1.msra.mxu0 %v669
  %735 = vmatprep.subr.mxu0 %v672
  %736 = vmatpush1.msra.mxu0 %v671
  %737 = vmatprep.subr.mxu0 %v674
  %738 = vmatpush1.msra.mxu0 %v673
  %739 = vmatprep.subr.mxu0 %v676
  %740 = vmatpush1.msra.mxu0 %v675
  %741 = vmatprep.subr.mxu0 %v678
  %742 = vmatpush1.msra.mxu0 %v677
  %743 = vmatprep.subr.mxu0 %v680
  %744 = vmatpush1.msra.mxu0 %v679
  %745 = vmatprep.subr.mxu0 %v682
  %746 = vmatpush1.msra.mxu0 %v681
  %747 = vmatprep.subr.mxu0 %v684
  %748 = vmatpush1.msra.mxu0 %v683
  %749 = vmatprep.subr.mxu0 %v686
  %750 = vmatpush1.msra.mxu0 %v685
  %751 = vmatprep.subr.mxu0 %v688
  %752 = vmatpush1.msra.mxu0 %v687
  %753 = vmatprep.subr.mxu0 %v690
  %754 = vmatpush1.msra.mxu0 %v689
  %755 = vmatprep.subr.mxu0 %v692
  %756 = vmatpush1.msra.mxu0 %v691
  %757 = vmatprep.subr.mxu0 %v694
  %758 = vmatpush1.msra.mxu0 %v693
  %759 = vmatprep.subr.mxu0 %v696
  %760 = vmatpush1.msra.mxu0 %v695
  %761 = vmatprep.subr.mxu0 %v698
  %762 = vmatpush1.msra.mxu0 %v697
  %763 = vmatprep.subr.mxu0 %v700
  %764 = vmatpush1.msra.mxu0 %v699
  %765 = vmatprep.subr.mxu0 %v702
  %766 = vmatpush1.msra.mxu0 %v701
  %767 = vmatprep.subr.mxu0 %v704
  %768 = vmatpush1.msra.mxu0 %v703
  %769 = vmatprep.subr.mxu0 %v706
  %770 = vmatpush1.msra.mxu0 %v705
  %771 = vmatprep.subr.mxu0 %v708
  %772 = vmatpush1.msra.mxu0 %v707
  %773 = vmatprep.subr.mxu0 %v710
  %774 = vmatpush1.msra.mxu0 %v709
  %775 = vmatprep.subr.mxu0 %v712
  %776 = vmatpush1.msra.mxu0 %v711
  %777 = vmatprep.subr.mxu0 %v714
  %778 = vmatpush1.msra.mxu0 %v713
  %779 = vmatprep.subr.mxu0 %v716
  %780 = vmatpush1.msra.mxu0 %v715
  %781 = vmatprep.subr.mxu0 %v718
  %782 = vmatpush1.msra.mxu0 %v717
  %783 = vmatprep.subr.mxu0 %v720
  %784 = vmatpush1.msra.mxu0 %v719
  %785 = vmatprep.mubr.f32.mxu0 %v592
  %786 = vmatmul.mubr.f32.gmra.mrb[0].mxu0 %v591
  %v787 = vpop.f32.mrb[0].mxu0
  %v788 = vadd.f32 0.0, %v787
  %v789 = vpop.f32.mrb[0].mxu0
  %v790 = vadd.f32 0.0, %v789
  %791 = vdwg.mxu0
  %792 = vmatprep.subr.mxu0 %v594
  %793 = vmatpush1.msra.mxu0 %v593
  %794 = vmatprep.subr.mxu0 %v596
  %795 = vmatpush1.msra.mxu0 %v595
  %796 = vmatprep.subr.mxu0 %v598
  %797 = vmatpush1.msra.mxu0 %v597
  %798 = vmatprep.subr.mxu0 %v600
  %799 = vmatpush1.msra.mxu0 %v599
  %800 = vmatprep.subr.mxu0 %v602
  %801 = vmatpush1.msra.mxu0 %v601
  %802 = vmatprep.subr.mxu0 %v604
  %803 = vmatpush1.msra.mxu0 %v603
  %804 = vmatprep.subr.mxu0 %v606
  %805 = vmatpush1.msra.mxu0 %v605
  %806 = vmatprep.subr.mxu0 %v608
  %807 = vmatpush1.msra.mxu0 %v607
  %808 = vmatprep.subr.mxu0 %v610
  %809 = vmatpush1.msra.mxu0 %v609
  %810 = vmatprep.subr.mxu0 %v612
  %811 = vmatpush1.msra.mxu0 %v611
  %812 = vmatprep.subr.mxu0 %v614
  %813 = vmatpush1.msra.mxu0 %v613
  %814 = vmatprep.subr.mxu0 %v616
  %815 = vmatpush1.msra.mxu0 %v615
  %816 = vmatprep.subr.mxu0 %v618
  %817 = vmatpush1.msra.mxu0 %v617
  %818 = vmatprep.subr.mxu0 %v620
  %819 = vmatpush1.msra.mxu0 %v619
  %820 = vmatprep.subr.mxu0 %v622
  %821 = vmatpush1.msra.mxu0 %v621
  %822 = vmatprep.subr.mxu0 %v624
  %823 = vmatpush1.msra.mxu0 %v623
  %824 = vmatprep.subr.mxu0 %v626
  %825 = vmatpush1.msra.mxu0 %v625
  %826 = vmatprep.subr.mxu0 %v628
  %827 = vmatpush1.msra.mxu0 %v627
  %828 = vmatprep.subr.mxu0 %v630
  %829 = vmatpush1.msra.mxu0 %v629
  %830 = vmatprep.subr.mxu0 %v632
  %831 = vmatpush1.msra.mxu0 %v631
  %832 = vmatprep.subr.mxu0 %v634
  %833 = vmatpush1.msra.mxu0 %v633
  %834 = vmatprep.subr.mxu0 %v636
  %835 = vmatpush1.msra.mxu0 %v635
  %836 = vmatprep.subr.mxu0 %v638
  %837 = vmatpush1.msra.mxu0 %v637
  %838 = vmatprep.subr.mxu0 %v640
  %839 = vmatpush1.msra.mxu0 %v639
  %840 = vmatprep.subr.mxu0 %v642
  %841 = vmatpush1.msra.mxu0 %v641
  %842 = vmatprep.subr.mxu0 %v644
  %843 = vmatpush1.msra.mxu0 %v643
  %844 = vmatprep.subr.mxu0 %v646
  %845 = vmatpush1.msra.mxu0 %v645
  %846 = vmatprep.subr.mxu0 %v648
  %847 = vmatpush1.msra.mxu0 %v647
  %848 = vmatprep.subr.mxu0 %v650
  %849 = vmatpush1.msra.mxu0 %v649
  %850 = vmatprep.subr.mxu0 %v652
  %851 = vmatpush1.msra.mxu0 %v651
  %852 = vmatprep.subr.mxu0 %v654
  %853 = vmatpush1.msra.mxu0 %v653
  %854 = vmatprep.subr.mxu0 %v656
  %855 = vmatpush1.msra.mxu0 %v655
  %856 = vmatprep.mubr.f32.mxu0 %v340
  %857 = vmatmul.mubr.f32.gmra.mrb[0].mxu0 %v339
  %v858 = vpop.f32.mrb[0].mxu0
  %v859 = vadd.f32 %v788, %v858
  %v860 = vpop.f32.mrb[0].mxu0
  %v861 = vadd.f32 %v790, %v860
  %862 = vdwg.mxu0
  %v863 = vld [vmem:[%s10] sm:$0x3]
  %v865 = vlaneseq
  %v866 = vshrl.u32 %v865, 7
  %v867 = vsub.s32 0, %v866
  %v868 = vrot.slane %v863, %v867
  %v869 = vlaneseq
  %v870 = vshrl.u32 %v869, 7
  %v871 = vsub.s32 1, %v870
  %v872 = vrot.slane %v863, %v871
  %v875 = vadd.f32 %v859, %v868
  %v876 = vadd.f32 %v861, %v872
  %v877 = vmax.f32 %v875, 0.0
  %v878 = vmax.f32 %v876, 0.0
  %v879 = vld [vmem:[%s11] sm:$0xff]
  %v880 = vld [vmem:[%s11 + $0x8] sm:$0xff]
  %v881 = vld [vmem:[%s11 + $0x10] sm:$0xff]
  %v882 = vld [vmem:[%s11 + $0x18] sm:$0xff]
  %v883 = vld [vmem:[%s11 + $0x20] sm:$0xff]
  %v884 = vld [vmem:[%s11 + $0x28] sm:$0xff]
  %v885 = vld [vmem:[%s11 + $0x30] sm:$0xff]
  %v886 = vld [vmem:[%s11 + $0x38] sm:$0xff]
  %v887 = vld [vmem:[%s11 + $0x40] sm:$0xff]
  %v888 = vld [vmem:[%s11 + $0x48] sm:$0xff]
  %v889 = vld [vmem:[%s11 + $0x50] sm:$0xff]
  %v890 = vld [vmem:[%s11 + $0x58] sm:$0xff]
  %v891 = vld [vmem:[%s11 + $0x60] sm:$0xff]
  %v892 = vld [vmem:[%s11 + $0x68] sm:$0xff]
  %v893 = vld [vmem:[%s11 + $0x70] sm:$0xff]
  %v894 = vld [vmem:[%s11 + $0x78] sm:$0xff]
  %v895 = vld [vmem:[%s11 + $0x80] sm:$0xff]
  %v896 = vld [vmem:[%s11 + $0x88] sm:$0xff]
  %v897 = vld [vmem:[%s11 + $0x90] sm:$0xff]
  %v898 = vld [vmem:[%s11 + $0x98] sm:$0xff]
  %v899 = vld [vmem:[%s11 + $0xa0] sm:$0xff]
  %v900 = vld [vmem:[%s11 + $0xa8] sm:$0xff]
  %v901 = vld [vmem:[%s11 + $0xb0] sm:$0xff]
  %v902 = vld [vmem:[%s11 + $0xb8] sm:$0xff]
  %v903 = vld [vmem:[%s11 + $0xc0] sm:$0xff]
  %v904 = vld [vmem:[%s11 + $0xc8] sm:$0xff]
  %v905 = vld [vmem:[%s11 + $0xd0] sm:$0xff]
  %v906 = vld [vmem:[%s11 + $0xd8] sm:$0xff]
  %v907 = vld [vmem:[%s11 + $0xe0] sm:$0xff]
  %v908 = vld [vmem:[%s11 + $0xe8] sm:$0xff]
  %v909 = vld [vmem:[%s11 + $0xf0] sm:$0xff]
  %v910 = vld [vmem:[%s11 + $0xf8] sm:$0xff]
  %v911 = vld [vmem:[%s12] sm:$0x1]
  %v913 = vlaneseq
  %v914 = vshrl.u32 %v913, 7
  %v915 = vsub.s32 0, %v914
  %v916 = vrot.slane %v911, %v915
  %918 = vmatprep.subr.mxu0 0.0
  %919 = vmatpush1.msra.mxu0 %v879
  %920 = vmatprep.subr.mxu0 0.0
  %921 = vmatpush1.msra.mxu0 %v880
  %922 = vmatprep.subr.mxu0 0.0
  %923 = vmatpush1.msra.mxu0 %v881
  %924 = vmatprep.subr.mxu0 0.0
  %925 = vmatpush1.msra.mxu0 %v882
  %926 = vmatprep.subr.mxu0 0.0
  %927 = vmatpush1.msra.mxu0 %v883
  %928 = vmatprep.subr.mxu0 0.0
  %929 = vmatpush1.msra.mxu0 %v884
  %930 = vmatprep.subr.mxu0 0.0
  %931 = vmatpush1.msra.mxu0 %v885
  %932 = vmatprep.subr.mxu0 0.0
  %933 = vmatpush1.msra.mxu0 %v886
  %934 = vmatprep.subr.mxu0 0.0
  %935 = vmatpush1.msra.mxu0 %v887
  %936 = vmatprep.subr.mxu0 0.0
  %937 = vmatpush1.msra.mxu0 %v888
  %938 = vmatprep.subr.mxu0 0.0
  %939 = vmatpush1.msra.mxu0 %v889
  %940 = vmatprep.subr.mxu0 0.0
  %941 = vmatpush1.msra.mxu0 %v890
  %942 = vmatprep.subr.mxu0 0.0
  %943 = vmatpush1.msra.mxu0 %v891
  %944 = vmatprep.subr.mxu0 0.0
  %945 = vmatpush1.msra.mxu0 %v892
  %946 = vmatprep.subr.mxu0 0.0
  %947 = vmatpush1.msra.mxu0 %v893
  %948 = vmatprep.subr.mxu0 0.0
  %949 = vmatpush1.msra.mxu0 %v894
  %950 = vmatprep.subr.mxu0 0.0
  %951 = vmatpush1.msra.mxu0 %v895
  %952 = vmatprep.subr.mxu0 0.0
  %953 = vmatpush1.msra.mxu0 %v896
  %954 = vmatprep.subr.mxu0 0.0
  %955 = vmatpush1.msra.mxu0 %v897
  %956 = vmatprep.subr.mxu0 0.0
  %957 = vmatpush1.msra.mxu0 %v898
  %958 = vmatprep.subr.mxu0 0.0
  %959 = vmatpush1.msra.mxu0 %v899
  %960 = vmatprep.subr.mxu0 0.0
  %961 = vmatpush1.msra.mxu0 %v900
  %962 = vmatprep.subr.mxu0 0.0
  %963 = vmatpush1.msra.mxu0 %v901
  %964 = vmatprep.subr.mxu0 0.0
  %965 = vmatpush1.msra.mxu0 %v902
  %966 = vmatprep.subr.mxu0 0.0
  %967 = vmatpush1.msra.mxu0 %v903
  %968 = vmatprep.subr.mxu0 0.0
  %969 = vmatpush1.msra.mxu0 %v904
  %970 = vmatprep.subr.mxu0 0.0
  %971 = vmatpush1.msra.mxu0 %v905
  %972 = vmatprep.subr.mxu0 0.0
  %973 = vmatpush1.msra.mxu0 %v906
  %974 = vmatprep.subr.mxu0 0.0
  %975 = vmatpush1.msra.mxu0 %v907
  %976 = vmatprep.subr.mxu0 0.0
  %977 = vmatpush1.msra.mxu0 %v908
  %978 = vmatprep.subr.mxu0 0.0
  %979 = vmatpush1.msra.mxu0 %v909
  %980 = vmatprep.subr.mxu0 0.0
  %981 = vmatpush1.msra.mxu0 %v910
  %982 = vmatprep.mubr.f32.mxu0 %v878
  %983 = vmatmul.mubr.f32.gmra.mrb[0].mxu0 %v877
  %v984 = vpop.f32.mrb[0].mxu0
  %v985 = vadd.f32 %v916, %v984
  %v986 = vpop.f32.mrb[0].mxu0
  %987 = vdwg.mxu0
  %v988 = vmax.f32 %v985, 0.0
  %v989 = vld [vmem:[%s2] sm:$0xff]
  %v990 = vld [vmem:[%s2 + $0x8] sm:$0xff]
  %v991 = vld [vmem:[%s2 + $0x10] sm:$0xff]
  %v992 = vld [vmem:[%s2 + $0x18] sm:$0xff]
  %v993 = vld [vmem:[%s2 + $0x20] sm:$0xff]
  %v994 = vld [vmem:[%s2 + $0x28] sm:$0xff]
  %v995 = vld [vmem:[%s2 + $0x30] sm:$0xff]
  %v996 = vld [vmem:[%s2 + $0x38] sm:$0xff]
  %v997 = vld [vmem:[%s2 + $0x40] sm:$0xff]
  %v998 = vld [vmem:[%s2 + $0x48] sm:$0xff]
  %v999 = vld [vmem:[%s2 + $0x50] sm:$0xff]
  %v1000 = vld [vmem:[%s2 + $0x58] sm:$0xff]
  %v1001 = vld [vmem:[%s2 + $0x60] sm:$0xff]
  %v1002 = vld [vmem:[%s2 + $0x68] sm:$0xff]
  %v1003 = vld [vmem:[%s2 + $0x70] sm:$0xff]
  %v1004 = vld [vmem:[%s2 + $0x78] sm:$0xff]
  %v1005 = vld [vmem:[%s2 + $0x80] sm:$0xff]
  %v1006 = vld [vmem:[%s2 + $0x88] sm:$0xff]
  %v1007 = vld [vmem:[%s2 + $0x90] sm:$0xff]
  %v1008 = vld [vmem:[%s2 + $0x98] sm:$0xff]
  %v1009 = vld [vmem:[%s2 + $0xa0] sm:$0xff]
  %v1010 = vld [vmem:[%s2 + $0xa8] sm:$0xff]
  %v1011 = vld [vmem:[%s2 + $0xb0] sm:$0xff]
  %v1012 = vld [vmem:[%s2 + $0xb8] sm:$0xff]
  %v1013 = vld [vmem:[%s2 + $0xc0] sm:$0xff]
  %v1014 = vld [vmem:[%s2 + $0xc8] sm:$0xff]
  %v1015 = vld [vmem:[%s2 + $0xd0] sm:$0xff]
  %v1016 = vld [vmem:[%s2 + $0xd8] sm:$0xff]
  %v1017 = vld [vmem:[%s2 + $0xe0] sm:$0xff]
  %v1018 = vld [vmem:[%s2 + $0xe8] sm:$0xff]
  %v1019 = vld [vmem:[%s2 + $0xf0] sm:$0xff]
  %v1020 = vld [vmem:[%s2 + $0xf8] sm:$0xff]
  %v1021 = vld [vmem:[%s3] sm:$0xff]
  %v1022 = vld [vmem:[%s13] sm:$0xff]
  %v1023 = vld [vmem:[%s13 + $0x8] sm:$0xff]
  %v1024 = vld [vmem:[%s13 + $0x10] sm:$0xff]
  %v1025 = vld [vmem:[%s13 + $0x18] sm:$0xff]
  %v1026 = vld [vmem:[%s13 + $0x20] sm:$0xff]
  %v1027 = vld [vmem:[%s13 + $0x28] sm:$0xff]
  %v1028 = vld [vmem:[%s13 + $0x30] sm:$0xff]
  %v1029 = vld [vmem:[%s13 + $0x38] sm:$0xff]
  %v1030 = vld [vmem:[%s13 + $0x40] sm:$0xff]
  %v1031 = vld [vmem:[%s13 + $0x48] sm:$0xff]
  %v1032 = vld [vmem:[%s13 + $0x50] sm:$0xff]
  %v1033 = vld [vmem:[%s13 + $0x58] sm:$0xff]
  %v1034 = vld [vmem:[%s13 + $0x60] sm:$0xff]
  %v1035 = vld [vmem:[%s13 + $0x68] sm:$0xff]
  %v1036 = vld [vmem:[%s13 + $0x70] sm:$0xff]
  %v1037 = vld [vmem:[%s13 + $0x78] sm:$0xff]
  %v1038 = vld [vmem:[%s13 + $0x80] sm:$0xff]
  %v1039 = vld [vmem:[%s13 + $0x88] sm:$0xff]
  %v1040 = vld [vmem:[%s13 + $0x90] sm:$0xff]
  %v1041 = vld [vmem:[%s13 + $0x98] sm:$0xff]
  %v1042 = vld [vmem:[%s13 + $0xa0] sm:$0xff]
  %v1043 = vld [vmem:[%s13 + $0xa8] sm:$0xff]
  %v1044 = vld [vmem:[%s13 + $0xb0] sm:$0xff]
  %v1045 = vld [vmem:[%s13 + $0xb8] sm:$0xff]
  %v1046 = vld [vmem:[%s13 + $0xc0] sm:$0xff]
  %v1047 = vld [vmem:[%s13 + $0xc8] sm:$0xff]
  %v1048 = vld [vmem:[%s13 + $0xd0] sm:$0xff]
  %v1049 = vld [vmem:[%s13 + $0xd8] sm:$0xff]
  %v1050 = vld [vmem:[%s13 + $0xe0] sm:$0xff]
  %v1051 = vld [vmem:[%s13 + $0xe8] sm:$0xff]
  %v1052 = vld [vmem:[%s13 + $0xf0] sm:$0xff]
  %v1053 = vld [vmem:[%s13 + $0xf8] sm:$0xff]
  %v1054 = vld [vmem:[%s13 + $0x100] sm:$0xff]
  %v1055 = vld [vmem:[%s13 + $0x108] sm:$0xff]
  %v1056 = vld [vmem:[%s13 + $0x110] sm:$0xff]
  %v1057 = vld [vmem:[%s13 + $0x118] sm:$0xff]
  %v1058 = vld [vmem:[%s13 + $0x120] sm:$0xff]
  %v1059 = vld [vmem:[%s13 + $0x128] sm:$0xff]
  %v1060 = vld [vmem:[%s13 + $0x130] sm:$0xff]
  %v1061 = vld [vmem:[%s13 + $0x138] sm:$0xff]
  %v1062 = vld [vmem:[%s13 + $0x140] sm:$0xff]
  %v1063 = vld [vmem:[%s13 + $0x148] sm:$0xff]
  %v1064 = vld [vmem:[%s13 + $0x150] sm:$0xff]
  %v1065 = vld [vmem:[%s13 + $0x158] sm:$0xff]
  %v1066 = vld [vmem:[%s13 + $0x160] sm:$0xff]
  %v1067 = vld [vmem:[%s13 + $0x168] sm:$0xff]
  %v1068 = vld [vmem:[%s13 + $0x170] sm:$0xff]
  %v1069 = vld [vmem:[%s13 + $0x178] sm:$0xff]
  %v1070 = vld [vmem:[%s13 + $0x180] sm:$0xff]
  %v1071 = vld [vmem:[%s13 + $0x188] sm:$0xff]
  %v1072 = vld [vmem:[%s13 + $0x190] sm:$0xff]
  %v1073 = vld [vmem:[%s13 + $0x198] sm:$0xff]
  %v1074 = vld [vmem:[%s13 + $0x1a0] sm:$0xff]
  %v1075 = vld [vmem:[%s13 + $0x1a8] sm:$0xff]
  %v1076 = vld [vmem:[%s13 + $0x1b0] sm:$0xff]
  %v1077 = vld [vmem:[%s13 + $0x1b8] sm:$0xff]
  %v1078 = vld [vmem:[%s13 + $0x1c0] sm:$0xff]
  %v1079 = vld [vmem:[%s13 + $0x1c8] sm:$0xff]
  %v1080 = vld [vmem:[%s13 + $0x1d0] sm:$0xff]
  %v1081 = vld [vmem:[%s13 + $0x1d8] sm:$0xff]
  %v1082 = vld [vmem:[%s13 + $0x1e0] sm:$0xff]
  %v1083 = vld [vmem:[%s13 + $0x1e8] sm:$0xff]
  %v1084 = vld [vmem:[%s13 + $0x1f0] sm:$0xff]
  %v1085 = vld [vmem:[%s13 + $0x1f8] sm:$0xff]
  %v1086 = vld [vmem:[%s13 + $0x200] sm:$0xff]
  %v1087 = vld [vmem:[%s13 + $0x208] sm:$0xff]
  %v1088 = vld [vmem:[%s13 + $0x210] sm:$0xff]
  %v1089 = vld [vmem:[%s13 + $0x218] sm:$0xff]
  %v1090 = vld [vmem:[%s13 + $0x220] sm:$0xff]
  %v1091 = vld [vmem:[%s13 + $0x228] sm:$0xff]
  %v1092 = vld [vmem:[%s13 + $0x230] sm:$0xff]
  %v1093 = vld [vmem:[%s13 + $0x238] sm:$0xff]
  %v1094 = vld [vmem:[%s13 + $0x240] sm:$0xff]
  %v1095 = vld [vmem:[%s13 + $0x248] sm:$0xff]
  %v1096 = vld [vmem:[%s13 + $0x250] sm:$0xff]
  %v1097 = vld [vmem:[%s13 + $0x258] sm:$0xff]
  %v1098 = vld [vmem:[%s13 + $0x260] sm:$0xff]
  %v1099 = vld [vmem:[%s13 + $0x268] sm:$0xff]
  %v1100 = vld [vmem:[%s13 + $0x270] sm:$0xff]
  %v1101 = vld [vmem:[%s13 + $0x278] sm:$0xff]
  %v1102 = vld [vmem:[%s13 + $0x280] sm:$0xff]
  %v1103 = vld [vmem:[%s13 + $0x288] sm:$0xff]
  %v1104 = vld [vmem:[%s13 + $0x290] sm:$0xff]
  %v1105 = vld [vmem:[%s13 + $0x298] sm:$0xff]
  %v1106 = vld [vmem:[%s13 + $0x2a0] sm:$0xff]
  %v1107 = vld [vmem:[%s13 + $0x2a8] sm:$0xff]
  %v1108 = vld [vmem:[%s13 + $0x2b0] sm:$0xff]
  %v1109 = vld [vmem:[%s13 + $0x2b8] sm:$0xff]
  %v1110 = vld [vmem:[%s13 + $0x2c0] sm:$0xff]
  %v1111 = vld [vmem:[%s13 + $0x2c8] sm:$0xff]
  %v1112 = vld [vmem:[%s13 + $0x2d0] sm:$0xff]
  %v1113 = vld [vmem:[%s13 + $0x2d8] sm:$0xff]
  %v1114 = vld [vmem:[%s13 + $0x2e0] sm:$0xff]
  %v1115 = vld [vmem:[%s13 + $0x2e8] sm:$0xff]
  %v1116 = vld [vmem:[%s13 + $0x2f0] sm:$0xff]
  %v1117 = vld [vmem:[%s13 + $0x2f8] sm:$0xff]
  %v1118 = vld [vmem:[%s13 + $0x300] sm:$0xff]
  %v1119 = vld [vmem:[%s13 + $0x308] sm:$0xff]
  %v1120 = vld [vmem:[%s13 + $0x310] sm:$0xff]
  %v1121 = vld [vmem:[%s13 + $0x318] sm:$0xff]
  %v1122 = vld [vmem:[%s13 + $0x320] sm:$0xff]
  %v1123 = vld [vmem:[%s13 + $0x328] sm:$0xff]
  %v1124 = vld [vmem:[%s13 + $0x330] sm:$0xff]
  %v1125 = vld [vmem:[%s13 + $0x338] sm:$0xff]
  %v1126 = vld [vmem:[%s13 + $0x340] sm:$0xff]
  %v1127 = vld [vmem:[%s13 + $0x348] sm:$0xff]
  %v1128 = vld [vmem:[%s13 + $0x350] sm:$0xff]
  %v1129 = vld [vmem:[%s13 + $0x358] sm:$0xff]
  %v1130 = vld [vmem:[%s13 + $0x360] sm:$0xff]
  %v1131 = vld [vmem:[%s13 + $0x368] sm:$0xff]
  %v1132 = vld [vmem:[%s13 + $0x370] sm:$0xff]
  %v1133 = vld [vmem:[%s13 + $0x378] sm:$0xff]
  %v1134 = vld [vmem:[%s13 + $0x380] sm:$0xff]
  %v1135 = vld [vmem:[%s13 + $0x388] sm:$0xff]
  %v1136 = vld [vmem:[%s13 + $0x390] sm:$0xff]
  %v1137 = vld [vmem:[%s13 + $0x398] sm:$0xff]
  %v1138 = vld [vmem:[%s13 + $0x3a0] sm:$0xff]
  %v1139 = vld [vmem:[%s13 + $0x3a8] sm:$0xff]
  %v1140 = vld [vmem:[%s13 + $0x3b0] sm:$0xff]
  %v1141 = vld [vmem:[%s13 + $0x3b8] sm:$0xff]
  %v1142 = vld [vmem:[%s13 + $0x3c0] sm:$0xff]
  %v1143 = vld [vmem:[%s13 + $0x3c8] sm:$0xff]
  %v1144 = vld [vmem:[%s13 + $0x3d0] sm:$0xff]
  %v1145 = vld [vmem:[%s13 + $0x3d8] sm:$0xff]
  %v1146 = vld [vmem:[%s13 + $0x3e0] sm:$0xff]
  %v1147 = vld [vmem:[%s13 + $0x3e8] sm:$0xff]
  %v1148 = vld [vmem:[%s13 + $0x3f0] sm:$0xff]
  %v1149 = vld [vmem:[%s13 + $0x3f8] sm:$0xff]
  %v1150 = vld [vmem:[%s13 + $0x400] sm:$0xff]
  %v1151 = vld [vmem:[%s13 + $0x408] sm:$0xff]
  %v1152 = vld [vmem:[%s13 + $0x410] sm:$0xff]
  %v1153 = vld [vmem:[%s13 + $0x418] sm:$0xff]
  %v1154 = vld [vmem:[%s13 + $0x420] sm:$0xff]
  %v1155 = vld [vmem:[%s13 + $0x428] sm:$0xff]
  %v1156 = vld [vmem:[%s13 + $0x430] sm:$0xff]
  %v1157 = vld [vmem:[%s13 + $0x438] sm:$0xff]
  %v1158 = vld [vmem:[%s13 + $0x440] sm:$0xff]
  %v1159 = vld [vmem:[%s13 + $0x448] sm:$0xff]
  %v1160 = vld [vmem:[%s13 + $0x450] sm:$0xff]
  %v1161 = vld [vmem:[%s13 + $0x458] sm:$0xff]
  %v1162 = vld [vmem:[%s13 + $0x460] sm:$0xff]
  %v1163 = vld [vmem:[%s13 + $0x468] sm:$0xff]
  %v1164 = vld [vmem:[%s13 + $0x470] sm:$0xff]
  %v1165 = vld [vmem:[%s13 + $0x478] sm:$0xff]
  %v1166 = vld [vmem:[%s13 + $0x480] sm:$0xff]
  %v1167 = vld [vmem:[%s13 + $0x488] sm:$0xff]
  %v1168 = vld [vmem:[%s13 + $0x490] sm:$0xff]
  %v1169 = vld [vmem:[%s13 + $0x498] sm:$0xff]
  %v1170 = vld [vmem:[%s13 + $0x4a0] sm:$0xff]
  %v1171 = vld [vmem:[%s13 + $0x4a8] sm:$0xff]
  %v1172 = vld [vmem:[%s13 + $0x4b0] sm:$0xff]
  %v1173 = vld [vmem:[%s13 + $0x4b8] sm:$0xff]
  %v1174 = vld [vmem:[%s13 + $0x4c0] sm:$0xff]
  %v1175 = vld [vmem:[%s13 + $0x4c8] sm:$0xff]
  %v1176 = vld [vmem:[%s13 + $0x4d0] sm:$0xff]
  %v1177 = vld [vmem:[%s13 + $0x4d8] sm:$0xff]
  %v1178 = vld [vmem:[%s13 + $0x4e0] sm:$0xff]
  %v1179 = vld [vmem:[%s13 + $0x4e8] sm:$0xff]
  %v1180 = vld [vmem:[%s13 + $0x4f0] sm:$0xff]
  %v1181 = vld [vmem:[%s13 + $0x4f8] sm:$0xff]
  %v1182 = vld [vmem:[%s13 + $0x500] sm:$0xff]
  %v1183 = vld [vmem:[%s13 + $0x508] sm:$0xff]
  %v1184 = vld [vmem:[%s13 + $0x510] sm:$0xff]
  %v1185 = vld [vmem:[%s13 + $0x518] sm:$0xff]
  %v1186 = vld [vmem:[%s13 + $0x520] sm:$0xff]
  %v1187 = vld [vmem:[%s13 + $0x528] sm:$0xff]
  %v1188 = vld [vmem:[%s13 + $0x530] sm:$0xff]
  %v1189 = vld [vmem:[%s13 + $0x538] sm:$0xff]
  %v1190 = vld [vmem:[%s13 + $0x540] sm:$0xff]
  %v1191 = vld [vmem:[%s13 + $0x548] sm:$0xff]
  %v1192 = vld [vmem:[%s13 + $0x550] sm:$0xff]
  %v1193 = vld [vmem:[%s13 + $0x558] sm:$0xff]
  %v1194 = vld [vmem:[%s13 + $0x560] sm:$0xff]
  %v1195 = vld [vmem:[%s13 + $0x568] sm:$0xff]
  %v1196 = vld [vmem:[%s13 + $0x570] sm:$0xff]
  %v1197 = vld [vmem:[%s13 + $0x578] sm:$0xff]
  %v1198 = vld [vmem:[%s13 + $0x580] sm:$0xff]
  %v1199 = vld [vmem:[%s13 + $0x588] sm:$0xff]
  %v1200 = vld [vmem:[%s13 + $0x590] sm:$0xff]
  %v1201 = vld [vmem:[%s13 + $0x598] sm:$0xff]
  %v1202 = vld [vmem:[%s13 + $0x5a0] sm:$0xff]
  %v1203 = vld [vmem:[%s13 + $0x5a8] sm:$0xff]
  %v1204 = vld [vmem:[%s13 + $0x5b0] sm:$0xff]
  %v1205 = vld [vmem:[%s13 + $0x5b8] sm:$0xff]
  %v1206 = vld [vmem:[%s13 + $0x5c0] sm:$0xff]
  %v1207 = vld [vmem:[%s13 + $0x5c8] sm:$0xff]
  %v1208 = vld [vmem:[%s13 + $0x5d0] sm:$0xff]
  %v1209 = vld [vmem:[%s13 + $0x5d8] sm:$0xff]
  %v1210 = vld [vmem:[%s13 + $0x5e0] sm:$0xff]
  %v1211 = vld [vmem:[%s13 + $0x5e8] sm:$0xff]
  %v1212 = vld [vmem:[%s13 + $0x5f0] sm:$0xff]
  %v1213 = vld [vmem:[%s13 + $0x5f8] sm:$0xff]
  %v1214 = vld [vmem:[%s13 + $0x600] sm:$0xff]
  %v1215 = vld [vmem:[%s13 + $0x608] sm:$0xff]
  %v1216 = vld [vmem:[%s13 + $0x610] sm:$0xff]
  %v1217 = vld [vmem:[%s13 + $0x618] sm:$0xff]
  %v1218 = vld [vmem:[%s13 + $0x620] sm:$0xff]
  %v1219 = vld [vmem:[%s13 + $0x628] sm:$0xff]
  %v1220 = vld [vmem:[%s13 + $0x630] sm:$0xff]
  %v1221 = vld [vmem:[%s13 + $0x638] sm:$0xff]
  %v1222 = vld [vmem:[%s13 + $0x640] sm:$0xff]
  %v1223 = vld [vmem:[%s13 + $0x648] sm:$0xff]
  %v1224 = vld [vmem:[%s13 + $0x650] sm:$0xff]
  %v1225 = vld [vmem:[%s13 + $0x658] sm:$0xff]
  %v1226 = vld [vmem:[%s13 + $0x660] sm:$0xff]
  %v1227 = vld [vmem:[%s13 + $0x668] sm:$0xff]
  %v1228 = vld [vmem:[%s13 + $0x670] sm:$0xff]
  %v1229 = vld [vmem:[%s13 + $0x678] sm:$0xff]
  %v1230 = vld [vmem:[%s13 + $0x680] sm:$0xff]
  %v1231 = vld [vmem:[%s13 + $0x688] sm:$0xff]
  %v1232 = vld [vmem:[%s13 + $0x690] sm:$0xff]
  %v1233 = vld [vmem:[%s13 + $0x698] sm:$0xff]
  %v1234 = vld [vmem:[%s13 + $0x6a0] sm:$0xff]
  %v1235 = vld [vmem:[%s13 + $0x6a8] sm:$0xff]
  %v1236 = vld [vmem:[%s13 + $0x6b0] sm:$0xff]
  %v1237 = vld [vmem:[%s13 + $0x6b8] sm:$0xff]
  %v1238 = vld [vmem:[%s13 + $0x6c0] sm:$0xff]
  %v1239 = vld [vmem:[%s13 + $0x6c8] sm:$0xff]
  %v1240 = vld [vmem:[%s13 + $0x6d0] sm:$0xff]
  %v1241 = vld [vmem:[%s13 + $0x6d8] sm:$0xff]
  %v1242 = vld [vmem:[%s13 + $0x6e0] sm:$0xff]
  %v1243 = vld [vmem:[%s13 + $0x6e8] sm:$0xff]
  %v1244 = vld [vmem:[%s13 + $0x6f0] sm:$0xff]
  %v1245 = vld [vmem:[%s13 + $0x6f8] sm:$0xff]
  %v1246 = vld [vmem:[%s13 + $0x700] sm:$0xff]
  %v1247 = vld [vmem:[%s13 + $0x708] sm:$0xff]
  %v1248 = vld [vmem:[%s13 + $0x710] sm:$0xff]
  %v1249 = vld [vmem:[%s13 + $0x718] sm:$0xff]
  %v1250 = vld [vmem:[%s13 + $0x720] sm:$0xff]
  %v1251 = vld [vmem:[%s13 + $0x728] sm:$0xff]
  %v1252 = vld [vmem:[%s13 + $0x730] sm:$0xff]
  %v1253 = vld [vmem:[%s13 + $0x738] sm:$0xff]
  %v1254 = vld [vmem:[%s13 + $0x740] sm:$0xff]
  %v1255 = vld [vmem:[%s13 + $0x748] sm:$0xff]
  %v1256 = vld [vmem:[%s13 + $0x750] sm:$0xff]
  %v1257 = vld [vmem:[%s13 + $0x758] sm:$0xff]
  %v1258 = vld [vmem:[%s13 + $0x760] sm:$0xff]
  %v1259 = vld [vmem:[%s13 + $0x768] sm:$0xff]
  %v1260 = vld [vmem:[%s13 + $0x770] sm:$0xff]
  %v1261 = vld [vmem:[%s13 + $0x778] sm:$0xff]
  %v1262 = vld [vmem:[%s13 + $0x780] sm:$0xff]
  %v1263 = vld [vmem:[%s13 + $0x788] sm:$0xff]
  %v1264 = vld [vmem:[%s13 + $0x790] sm:$0xff]
  %v1265 = vld [vmem:[%s13 + $0x798] sm:$0xff]
  %v1266 = vld [vmem:[%s13 + $0x7a0] sm:$0xff]
  %v1267 = vld [vmem:[%s13 + $0x7a8] sm:$0xff]
  %v1268 = vld [vmem:[%s13 + $0x7b0] sm:$0xff]
  %v1269 = vld [vmem:[%s13 + $0x7b8] sm:$0xff]
  %v1270 = vld [vmem:[%s13 + $0x7c0] sm:$0xff]
  %v1271 = vld [vmem:[%s13 + $0x7c8] sm:$0xff]
  %v1272 = vld [vmem:[%s13 + $0x7d0] sm:$0xff]
  %v1273 = vld [vmem:[%s13 + $0x7d8] sm:$0xff]
  %v1274 = vld [vmem:[%s13 + $0x7e0] sm:$0xff]
  %v1275 = vld [vmem:[%s13 + $0x7e8] sm:$0xff]
  %v1276 = vld [vmem:[%s13 + $0x7f0] sm:$0xff]
  %v1277 = vld [vmem:[%s13 + $0x7f8] sm:$0xff]
  %v1278 = vld [vmem:[%s13 + $0x800] sm:$0xff]
  %v1279 = vld [vmem:[%s13 + $0x808] sm:$0xff]
  %v1280 = vld [vmem:[%s13 + $0x810] sm:$0xff]
  %v1281 = vld [vmem:[%s13 + $0x818] sm:$0xff]
  %v1282 = vld [vmem:[%s13 + $0x820] sm:$0xff]
  %v1283 = vld [vmem:[%s13 + $0x828] sm:$0xff]
  %v1284 = vld [vmem:[%s13 + $0x830] sm:$0xff]
  %v1285 = vld [vmem:[%s13 + $0x838] sm:$0xff]
  %v1286 = vld [vmem:[%s13 + $0x840] sm:$0xff]
  %v1287 = vld [vmem:[%s13 + $0x848] sm:$0xff]
  %v1288 = vld [vmem:[%s13 + $0x850] sm:$0xff]
  %v1289 = vld [vmem:[%s13 + $0x858] sm:$0xff]
  %v1290 = vld [vmem:[%s13 + $0x860] sm:$0xff]
  %v1291 = vld [vmem:[%s13 + $0x868] sm:$0xff]
  %v1292 = vld [vmem:[%s13 + $0x870] sm:$0xff]
  %v1293 = vld [vmem:[%s13 + $0x878] sm:$0xff]
  %v1294 = vld [vmem:[%s13 + $0x880] sm:$0xff]
  %v1295 = vld [vmem:[%s13 + $0x888] sm:$0xff]
  %v1296 = vld [vmem:[%s13 + $0x890] sm:$0xff]
  %v1297 = vld [vmem:[%s13 + $0x898] sm:$0xff]
  %v1298 = vld [vmem:[%s13 + $0x8a0] sm:$0xff]
  %v1299 = vld [vmem:[%s13 + $0x8a8] sm:$0xff]
  %v1300 = vld [vmem:[%s13 + $0x8b0] sm:$0xff]
  %v1301 = vld [vmem:[%s13 + $0x8b8] sm:$0xff]
  %v1302 = vld [vmem:[%s13 + $0x8c0] sm:$0xff]
  %v1303 = vld [vmem:[%s13 + $0x8c8] sm:$0xff]
  %v1304 = vld [vmem:[%s13 + $0x8d0] sm:$0xff]
  %v1305 = vld [vmem:[%s13 + $0x8d8] sm:$0xff]
  %v1306 = vld [vmem:[%s13 + $0x8e0] sm:$0xff]
  %v1307 = vld [vmem:[%s13 + $0x8e8] sm:$0xff]
  %v1308 = vld [vmem:[%s13 + $0x8f0] sm:$0xff]
  %v1309 = vld [vmem:[%s13 + $0x8f8] sm:$0xff]
  %v1310 = vld [vmem:[%s13 + $0x900] sm:$0xff]
  %v1311 = vld [vmem:[%s13 + $0x908] sm:$0xff]
  %v1312 = vld [vmem:[%s13 + $0x910] sm:$0xff]
  %v1313 = vld [vmem:[%s13 + $0x918] sm:$0xff]
  %v1314 = vld [vmem:[%s13 + $0x920] sm:$0xff]
  %v1315 = vld [vmem:[%s13 + $0x928] sm:$0xff]
  %v1316 = vld [vmem:[%s13 + $0x930] sm:$0xff]
  %v1317 = vld [vmem:[%s13 + $0x938] sm:$0xff]
  %v1318 = vld [vmem:[%s13 + $0x940] sm:$0xff]
  %v1319 = vld [vmem:[%s13 + $0x948] sm:$0xff]
  %v1320 = vld [vmem:[%s13 + $0x950] sm:$0xff]
  %v1321 = vld [vmem:[%s13 + $0x958] sm:$0xff]
  %v1322 = vld [vmem:[%s13 + $0x960] sm:$0xff]
  %v1323 = vld [vmem:[%s13 + $0x968] sm:$0xff]
  %v1324 = vld [vmem:[%s13 + $0x970] sm:$0xff]
  %v1325 = vld [vmem:[%s13 + $0x978] sm:$0xff]
  %v1326 = vld [vmem:[%s13 + $0x980] sm:$0xff]
  %v1327 = vld [vmem:[%s13 + $0x988] sm:$0xff]
  %v1328 = vld [vmem:[%s13 + $0x990] sm:$0xff]
  %v1329 = vld [vmem:[%s13 + $0x998] sm:$0xff]
  %v1330 = vld [vmem:[%s13 + $0x9a0] sm:$0xff]
  %v1331 = vld [vmem:[%s13 + $0x9a8] sm:$0xff]
  %v1332 = vld [vmem:[%s13 + $0x9b0] sm:$0xff]
  %v1333 = vld [vmem:[%s13 + $0x9b8] sm:$0xff]
  %v1334 = vld [vmem:[%s13 + $0x9c0] sm:$0xff]
  %v1335 = vld [vmem:[%s13 + $0x9c8] sm:$0xff]
  %v1336 = vld [vmem:[%s13 + $0x9d0] sm:$0xff]
  %v1337 = vld [vmem:[%s13 + $0x9d8] sm:$0xff]
  %v1338 = vld [vmem:[%s13 + $0x9e0] sm:$0xff]
  %v1339 = vld [vmem:[%s13 + $0x9e8] sm:$0xff]
  %v1340 = vld [vmem:[%s13 + $0x9f0] sm:$0xff]
  %v1341 = vld [vmem:[%s13 + $0x9f8] sm:$0xff]
  %v1342 = vld [vmem:[%s13 + $0xa00] sm:$0xff]
  %v1343 = vld [vmem:[%s13 + $0xa08] sm:$0xff]
  %v1344 = vld [vmem:[%s13 + $0xa10] sm:$0xff]
  %v1345 = vld [vmem:[%s13 + $0xa18] sm:$0xff]
  %v1346 = vld [vmem:[%s13 + $0xa20] sm:$0xff]
  %v1347 = vld [vmem:[%s13 + $0xa28] sm:$0xff]
  %v1348 = vld [vmem:[%s13 + $0xa30] sm:$0xff]
  %v1349 = vld [vmem:[%s13 + $0xa38] sm:$0xff]
  %v1350 = vld [vmem:[%s13 + $0xa40] sm:$0xff]
  %v1351 = vld [vmem:[%s13 + $0xa48] sm:$0xff]
  %v1352 = vld [vmem:[%s13 + $0xa50] sm:$0xff]
  %v1353 = vld [vmem:[%s13 + $0xa58] sm:$0xff]
  %v1354 = vld [vmem:[%s13 + $0xa60] sm:$0xff]
  %v1355 = vld [vmem:[%s13 + $0xa68] sm:$0xff]
  %v1356 = vld [vmem:[%s13 + $0xa70] sm:$0xff]
  %v1357 = vld [vmem:[%s13 + $0xa78] sm:$0xff]
  %v1358 = vld [vmem:[%s13 + $0xa80] sm:$0xff]
  %v1359 = vld [vmem:[%s13 + $0xa88] sm:$0xff]
  %v1360 = vld [vmem:[%s13 + $0xa90] sm:$0xff]
  %v1361 = vld [vmem:[%s13 + $0xa98] sm:$0xff]
  %v1362 = vld [vmem:[%s13 + $0xaa0] sm:$0xff]
  %v1363 = vld [vmem:[%s13 + $0xaa8] sm:$0xff]
  %v1364 = vld [vmem:[%s13 + $0xab0] sm:$0xff]
  %v1365 = vld [vmem:[%s13 + $0xab8] sm:$0xff]
  %v1366 = vld [vmem:[%s13 + $0xac0] sm:$0xff]
  %v1367 = vld [vmem:[%s13 + $0xac8] sm:$0xff]
  %v1368 = vld [vmem:[%s13 + $0xad0] sm:$0xff]
  %v1369 = vld [vmem:[%s13 + $0xad8] sm:$0xff]
  %v1370 = vld [vmem:[%s13 + $0xae0] sm:$0xff]
  %v1371 = vld [vmem:[%s13 + $0xae8] sm:$0xff]
  %v1372 = vld [vmem:[%s13 + $0xaf0] sm:$0xff]
  %v1373 = vld [vmem:[%s13 + $0xaf8] sm:$0xff]
  %v1374 = vld [vmem:[%s13 + $0xb00] sm:$0xff]
  %v1375 = vld [vmem:[%s13 + $0xb08] sm:$0xff]
  %v1376 = vld [vmem:[%s13 + $0xb10] sm:$0xff]
  %v1377 = vld [vmem:[%s13 + $0xb18] sm:$0xff]
  %v1378 = vld [vmem:[%s13 + $0xb20] sm:$0xff]
  %v1379 = vld [vmem:[%s13 + $0xb28] sm:$0xff]
  %v1380 = vld [vmem:[%s13 + $0xb30] sm:$0xff]
  %v1381 = vld [vmem:[%s13 + $0xb38] sm:$0xff]
  %v1382 = vld [vmem:[%s13 + $0xb40] sm:$0xff]
  %v1383 = vld [vmem:[%s13 + $0xb48] sm:$0xff]
  %v1384 = vld [vmem:[%s13 + $0xb50] sm:$0xff]
  %v1385 = vld [vmem:[%s13 + $0xb58] sm:$0xff]
  %v1386 = vld [vmem:[%s13 + $0xb60] sm:$0xff]
  %v1387 = vld [vmem:[%s13 + $0xb68] sm:$0xff]
  %v1388 = vld [vmem:[%s13 + $0xb70] sm:$0xff]
  %v1389 = vld [vmem:[%s13 + $0xb78] sm:$0xff]
  %v1390 = vld [vmem:[%s13 + $0xb80] sm:$0xff]
  %v1391 = vld [vmem:[%s13 + $0xb88] sm:$0xff]
  %v1392 = vld [vmem:[%s13 + $0xb90] sm:$0xff]
  %v1393 = vld [vmem:[%s13 + $0xb98] sm:$0xff]
  %v1394 = vld [vmem:[%s13 + $0xba0] sm:$0xff]
  %v1395 = vld [vmem:[%s13 + $0xba8] sm:$0xff]
  %v1396 = vld [vmem:[%s13 + $0xbb0] sm:$0xff]
  %v1397 = vld [vmem:[%s13 + $0xbb8] sm:$0xff]
  %v1398 = vld [vmem:[%s13 + $0xbc0] sm:$0xff]
  %v1399 = vld [vmem:[%s13 + $0xbc8] sm:$0xff]
  %v1400 = vld [vmem:[%s13 + $0xbd0] sm:$0xff]
  %v1401 = vld [vmem:[%s13 + $0xbd8] sm:$0xff]
  %v1402 = vld [vmem:[%s13 + $0xbe0] sm:$0xff]
  %v1403 = vld [vmem:[%s13 + $0xbe8] sm:$0xff]
  %v1404 = vld [vmem:[%s13 + $0xbf0] sm:$0xff]
  %v1405 = vld [vmem:[%s13 + $0xbf8] sm:$0xff]
  %v1406 = vld [vmem:[%s13 + $0xc00] sm:$0xff]
  %v1407 = vld [vmem:[%s13 + $0xc08] sm:$0xff]
  %v1408 = vld [vmem:[%s13 + $0xc10] sm:$0xff]
  %v1409 = vld [vmem:[%s13 + $0xc18] sm:$0xff]
  %v1410 = vld [vmem:[%s13 + $0xc20] sm:$0xff]
  %v1411 = vld [vmem:[%s13 + $0xc28] sm:$0xff]
  %v1412 = vld [vmem:[%s13 + $0xc30] sm:$0xff]
  %v1413 = vld [vmem:[%s13 + $0xc38] sm:$0xff]
  %v1414 = vld [vmem:[%s13 + $0xc40] sm:$0xff]
  %v1415 = vld [vmem:[%s13 + $0xc48] sm:$0xff]
  %v1416 = vld [vmem:[%s13 + $0xc50] sm:$0xff]
  %v1417 = vld [vmem:[%s13 + $0xc58] sm:$0xff]
  %v1418 = vld [vmem:[%s13 + $0xc60] sm:$0xff]
  %v1419 = vld [vmem:[%s13 + $0xc68] sm:$0xff]
  %v1420 = vld [vmem:[%s13 + $0xc70] sm:$0xff]
  %v1421 = vld [vmem:[%s13 + $0xc78] sm:$0xff]
  %v1422 = vld [vmem:[%s13 + $0xc80] sm:$0xff]
  %v1423 = vld [vmem:[%s13 + $0xc88] sm:$0xff]
  %v1424 = vld [vmem:[%s13 + $0xc90] sm:$0xff]
  %v1425 = vld [vmem:[%s13 + $0xc98] sm:$0xff]
  %v1426 = vld [vmem:[%s13 + $0xca0] sm:$0xff]
  %v1427 = vld [vmem:[%s13 + $0xca8] sm:$0xff]
  %v1428 = vld [vmem:[%s13 + $0xcb0] sm:$0xff]
  %v1429 = vld [vmem:[%s13 + $0xcb8] sm:$0xff]
  %v1430 = vld [vmem:[%s13 + $0xcc0] sm:$0xff]
  %v1431 = vld [vmem:[%s13 + $0xcc8] sm:$0xff]
  %v1432 = vld [vmem:[%s13 + $0xcd0] sm:$0xff]
  %v1433 = vld [vmem:[%s13 + $0xcd8] sm:$0xff]
  %v1434 = vld [vmem:[%s13 + $0xce0] sm:$0xff]
  %v1435 = vld [vmem:[%s13 + $0xce8] sm:$0xff]
  %v1436 = vld [vmem:[%s13 + $0xcf0] sm:$0xff]
  %v1437 = vld [vmem:[%s13 + $0xcf8] sm:$0xff]
  %v1438 = vld [vmem:[%s13 + $0xd00] sm:$0xff]
  %v1439 = vld [vmem:[%s13 + $0xd08] sm:$0xff]
  %v1440 = vld [vmem:[%s13 + $0xd10] sm:$0xff]
  %v1441 = vld [vmem:[%s13 + $0xd18] sm:$0xff]
  %v1442 = vld [vmem:[%s13 + $0xd20] sm:$0xff]
  %v1443 = vld [vmem:[%s13 + $0xd28] sm:$0xff]
  %v1444 = vld [vmem:[%s13 + $0xd30] sm:$0xff]
  %v1445 = vld [vmem:[%s13 + $0xd38] sm:$0xff]
  %v1446 = vld [vmem:[%s13 + $0xd40] sm:$0xff]
  %v1447 = vld [vmem:[%s13 + $0xd48] sm:$0xff]
  %v1448 = vld [vmem:[%s13 + $0xd50] sm:$0xff]
  %v1449 = vld [vmem:[%s13 + $0xd58] sm:$0xff]
  %v1450 = vld [vmem:[%s13 + $0xd60] sm:$0xff]
  %v1451 = vld [vmem:[%s13 + $0xd68] sm:$0xff]
  %v1452 = vld [vmem:[%s13 + $0xd70] sm:$0xff]
  %v1453 = vld [vmem:[%s13 + $0xd78] sm:$0xff]
  %v1454 = vld [vmem:[%s13 + $0xd80] sm:$0xff]
  %v1455 = vld [vmem:[%s13 + $0xd88] sm:$0xff]
  %v1456 = vld [vmem:[%s13 + $0xd90] sm:$0xff]
  %v1457 = vld [vmem:[%s13 + $0xd98] sm:$0xff]
  %v1458 = vld [vmem:[%s13 + $0xda0] sm:$0xff]
  %v1459 = vld [vmem:[%s13 + $0xda8] sm:$0xff]
  %v1460 = vld [vmem:[%s13 + $0xdb0] sm:$0xff]
  %v1461 = vld [vmem:[%s13 + $0xdb8] sm:$0xff]
  %v1462 = vld [vmem:[%s13 + $0xdc0] sm:$0xff]
  %v1463 = vld [vmem:[%s13 + $0xdc8] sm:$0xff]
  %v1464 = vld [vmem:[%s13 + $0xdd0] sm:$0xff]
  %v1465 = vld [vmem:[%s13 + $0xdd8] sm:$0xff]
  %v1466 = vld [vmem:[%s13 + $0xde0] sm:$0xff]
  %v1467 = vld [vmem:[%s13 + $0xde8] sm:$0xff]
  %v1468 = vld [vmem:[%s13 + $0xdf0] sm:$0xff]
  %v1469 = vld [vmem:[%s13 + $0xdf8] sm:$0xff]
  %v1470 = vld [vmem:[%s13 + $0xe00] sm:$0xff]
  %v1471 = vld [vmem:[%s13 + $0xe08] sm:$0xff]
  %v1472 = vld [vmem:[%s13 + $0xe10] sm:$0xff]
  %v1473 = vld [vmem:[%s13 + $0xe18] sm:$0xff]
  %v1474 = vld [vmem:[%s13 + $0xe20] sm:$0xff]
  %v1475 = vld [vmem:[%s13 + $0xe28] sm:$0xff]
  %v1476 = vld [vmem:[%s13 + $0xe30] sm:$0xff]
  %v1477 = vld [vmem:[%s13 + $0xe38] sm:$0xff]
  %v1478 = vld [vmem:[%s13 + $0xe40] sm:$0xff]
  %v1479 = vld [vmem:[%s13 + $0xe48] sm:$0xff]
  %v1480 = vld [vmem:[%s13 + $0xe50] sm:$0xff]
  %v1481 = vld [vmem:[%s13 + $0xe58] sm:$0xff]
  %v1482 = vld [vmem:[%s13 + $0xe60] sm:$0xff]
  %v1483 = vld [vmem:[%s13 + $0xe68] sm:$0xff]
  %v1484 = vld [vmem:[%s13 + $0xe70] sm:$0xff]
  %v1485 = vld [vmem:[%s13 + $0xe78] sm:$0xff]
  %v1486 = vld [vmem:[%s13 + $0xe80] sm:$0xff]
  %v1487 = vld [vmem:[%s13 + $0xe88] sm:$0xff]
  %v1488 = vld [vmem:[%s13 + $0xe90] sm:$0xff]
  %v1489 = vld [vmem:[%s13 + $0xe98] sm:$0xff]
  %v1490 = vld [vmem:[%s13 + $0xea0] sm:$0xff]
  %v1491 = vld [vmem:[%s13 + $0xea8] sm:$0xff]
  %v1492 = vld [vmem:[%s13 + $0xeb0] sm:$0xff]
  %v1493 = vld [vmem:[%s13 + $0xeb8] sm:$0xff]
  %v1494 = vld [vmem:[%s13 + $0xec0] sm:$0xff]
  %v1495 = vld [vmem:[%s13 + $0xec8] sm:$0xff]
  %v1496 = vld [vmem:[%s13 + $0xed0] sm:$0xff]
  %v1497 = vld [vmem:[%s13 + $0xed8] sm:$0xff]
  %v1498 = vld [vmem:[%s13 + $0xee0] sm:$0xff]
  %v1499 = vld [vmem:[%s13 + $0xee8] sm:$0xff]
  %v1500 = vld [vmem:[%s13 + $0xef0] sm:$0xff]
  %v1501 = vld [vmem:[%s13 + $0xef8] sm:$0xff]
  %v1502 = vld [vmem:[%s13 + $0xf00] sm:$0xff]
  %v1503 = vld [vmem:[%s13 + $0xf08] sm:$0xff]
  %v1504 = vld [vmem:[%s13 + $0xf10] sm:$0xff]
  %v1505 = vld [vmem:[%s13 + $0xf18] sm:$0xff]
  %v1506 = vld [vmem:[%s13 + $0xf20] sm:$0xff]
  %v1507 = vld [vmem:[%s13 + $0xf28] sm:$0xff]
  %v1508 = vld [vmem:[%s13 + $0xf30] sm:$0xff]
  %v1509 = vld [vmem:[%s13 + $0xf38] sm:$0xff]
  %v1510 = vld [vmem:[%s13 + $0xf40] sm:$0xff]
  %v1511 = vld [vmem:[%s13 + $0xf48] sm:$0xff]
  %v1512 = vld [vmem:[%s13 + $0xf50] sm:$0xff]
  %v1513 = vld [vmem:[%s13 + $0xf58] sm:$0xff]
  %v1514 = vld [vmem:[%s13 + $0xf60] sm:$0xff]
  %v1515 = vld [vmem:[%s13 + $0xf68] sm:$0xff]
  %v1516 = vld [vmem:[%s13 + $0xf70] sm:$0xff]
  %v1517 = vld [vmem:[%s13 + $0xf78] sm:$0xff]
  %v1518 = vld [vmem:[%s13 + $0xf80] sm:$0xff]
  %v1519 = vld [vmem:[%s13 + $0xf88] sm:$0xff]
  %v1520 = vld [vmem:[%s13 + $0xf90] sm:$0xff]
  %v1521 = vld [vmem:[%s13 + $0xf98] sm:$0xff]
  %v1522 = vld [vmem:[%s13 + $0xfa0] sm:$0xff]
  %v1523 = vld [vmem:[%s13 + $0xfa8] sm:$0xff]
  %v1524 = vld [vmem:[%s13 + $0xfb0] sm:$0xff]
  %v1525 = vld [vmem:[%s13 + $0xfb8] sm:$0xff]
  %v1526 = vld [vmem:[%s13 + $0xfc0] sm:$0xff]
  %v1527 = vld [vmem:[%s13 + $0xfc8] sm:$0xff]
  %v1528 = vld [vmem:[%s13 + $0xfd0] sm:$0xff]
  %v1529 = vld [vmem:[%s13 + $0xfd8] sm:$0xff]
  %v1530 = vld [vmem:[%s13 + $0xfe0] sm:$0xff]
  %v1531 = vld [vmem:[%s13 + $0xfe8] sm:$0xff]
  %v1532 = vld [vmem:[%s13 + $0xff0] sm:$0xff]
  %v1533 = vld [vmem:[%s13 + $0xff8] sm:$0xff]
  %v1534 = vld [vmem:[%s14] sm:$0x1]
  %v1536 = vlaneseq
  %v1537 = vshrl.u32 %v1536, 7
  %v1538 = vsub.s32 0, %v1537
  %v1539 = vrot.slane %v1534, %v1538
  %1541 = vmatprep.subr.mxu0 0.0
  %1542 = vmatpush1.msra.mxu0 %v1022
  %1543 = vmatprep.subr.mxu0 0.0
  %1544 = vmatpush1.msra.mxu0 %v1023
  %1545 = vmatprep.subr.mxu0 0.0
  %1546 = vmatpush1.msra.mxu0 %v1024
  %1547 = vmatprep.subr.mxu0 0.0
  %1548 = vmatpush1.msra.mxu0 %v1025
  %1549 = vmatprep.subr.mxu0 0.0
  %1550 = vmatpush1.msra.mxu0 %v1026
  %1551 = vmatprep.subr.mxu0 0.0
  %1552 = vmatpush1.msra.mxu0 %v1027
  %1553 = vmatprep.subr.mxu0 0.0
  %1554 = vmatpush1.msra.mxu0 %v1028
  %1555 = vmatprep.subr.mxu0 0.0
  %1556 = vmatpush1.msra.mxu0 %v1029
  %1557 = vmatprep.subr.mxu0 0.0
  %1558 = vmatpush1.msra.mxu0 %v1030
  %1559 = vmatprep.subr.mxu0 0.0
  %1560 = vmatpush1.msra.mxu0 %v1031
  %1561 = vmatprep.subr.mxu0 0.0
  %1562 = vmatpush1.msra.mxu0 %v1032
  %1563 = vmatprep.subr.mxu0 0.0
  %1564 = vmatpush1.msra.mxu0 %v1033
  %1565 = vmatprep.subr.mxu0 0.0
  %1566 = vmatpush1.msra.mxu0 %v1034
  %1567 = vmatprep.subr.mxu0 0.0
  %1568 = vmatpush1.msra.mxu0 %v1035
  %1569 = vmatprep.subr.mxu0 0.0
  %1570 = vmatpush1.msra.mxu0 %v1036
  %1571 = vmatprep.subr.mxu0 0.0
  %1572 = vmatpush1.msra.mxu0 %v1037
  %1573 = vmatprep.subr.mxu0 0.0
  %1574 = vmatpush1.msra.mxu0 %v1038
  %1575 = vmatprep.subr.mxu0 0.0
  %1576 = vmatpush1.msra.mxu0 %v1039
  %1577 = vmatprep.subr.mxu0 0.0
  %1578 = vmatpush1.msra.mxu0 %v1040
  %1579 = vmatprep.subr.mxu0 0.0
  %1580 = vmatpush1.msra.mxu0 %v1041
  %1581 = vmatprep.subr.mxu0 0.0
  %1582 = vmatpush1.msra.mxu0 %v1042
  %1583 = vmatprep.subr.mxu0 0.0
  %1584 = vmatpush1.msra.mxu0 %v1043
  %1585 = vmatprep.subr.mxu0 0.0
  %1586 = vmatpush1.msra.mxu0 %v1044
  %1587 = vmatprep.subr.mxu0 0.0
  %1588 = vmatpush1.msra.mxu0 %v1045
  %1589 = vmatprep.subr.mxu0 0.0
  %1590 = vmatpush1.msra.mxu0 %v1046
  %1591 = vmatprep.subr.mxu0 0.0
  %1592 = vmatpush1.msra.mxu0 %v1047
  %1593 = vmatprep.subr.mxu0 0.0
  %1594 = vmatpush1.msra.mxu0 %v1048
  %1595 = vmatprep.subr.mxu0 0.0
  %1596 = vmatpush1.msra.mxu0 %v1049
  %1597 = vmatprep.subr.mxu0 0.0
  %1598 = vmatpush1.msra.mxu0 %v1050
  %1599 = vmatprep.subr.mxu0 0.0
  %1600 = vmatpush1.msra.mxu0 %v1051
  %1601 = vmatprep.subr.mxu0 0.0
  %1602 = vmatpush1.msra.mxu0 %v1052
  %1603 = vmatprep.subr.mxu0 0.0
  %1604 = vmatpush1.msra.mxu0 %v1053
  %1605 = vmatprep.mubr.f32.mxu0 %v990
  %1606 = vmatmul.mubr.f32.gmra.mrb[0].mxu0 %v989
  %v1607 = vpop.f32.mrb[0].mxu0
  %v1608 = vadd.f32 %v1539, %v1607
  %v1609 = vpop.f32.mrb[0].mxu0
  %1610 = vdwg.mxu0
  %1611 = vmatprep.subr.mxu0 0.0
  %1612 = vmatpush1.msra.mxu0 %v1054
  %1613 = vmatprep.subr.mxu0 0.0
  %1614 = vmatpush1.msra.mxu0 %v1055
  %1615 = vmatprep.subr.mxu0 0.0
  %1616 = vmatpush1.msra.mxu0 %v1056
  %1617 = vmatprep.subr.mxu0 0.0
  %1618 = vmatpush1.msra.mxu0 %v1057
  %1619 = vmatprep.subr.mxu0 0.0
  %1620 = vmatpush1.msra.mxu0 %v1058
  %1621 = vmatprep.subr.mxu0 0.0
  %1622 = vmatpush1.msra.mxu0 %v1059
  %1623 = vmatprep.subr.mxu0 0.0
  %1624 = vmatpush1.msra.mxu0 %v1060
  %1625 = vmatprep.subr.mxu0 0.0
  %1626 = vmatpush1.msra.mxu0 %v1061
  %1627 = vmatprep.subr.mxu0 0.0
  %1628 = vmatpush1.msra.mxu0 %v1062
  %1629 = vmatprep.subr.mxu0 0.0
  %1630 = vmatpush1.msra.mxu0 %v1063
  %1631 = vmatprep.subr.mxu0 0.0
  %1632 = vmatpush1.msra.mxu0 %v1064
  %1633 = vmatprep.subr.mxu0 0.0
  %1634 = vmatpush1.msra.mxu0 %v1065
  %1635 = vmatprep.subr.mxu0 0.0
  %1636 = vmatpush1.msra.mxu0 %v1066
  %1637 = vmatprep.subr.mxu0 0.0
  %1638 = vmatpush1.msra.mxu0 %v1067
  %1639 = vmatprep.subr.mxu0 0.0
  %1640 = vmatpush1.msra.mxu0 %v1068
  %1641 = vmatprep.subr.mxu0 0.0
  %1642 = vmatpush1.msra.mxu0 %v1069
  %1643 = vmatprep.subr.mxu0 0.0
  %1644 = vmatpush1.msra.mxu0 %v1070
  %1645 = vmatprep.subr.mxu0 0.0
  %1646 = vmatpush1.msra.mxu0 %v1071
  %1647 = vmatprep.subr.mxu0 0.0
  %1648 = vmatpush1.msra.mxu0 %v1072
  %1649 = vmatprep.subr.mxu0 0.0
  %1650 = vmatpush1.msra.mxu0 %v1073
  %1651 = vmatprep.subr.mxu0 0.0
  %1652 = vmatpush1.msra.mxu0 %v1074
  %1653 = vmatprep.subr.mxu0 0.0
  %1654 = vmatpush1.msra.mxu0 %v1075
  %1655 = vmatprep.subr.mxu0 0.0
  %1656 = vmatpush1.msra.mxu0 %v1076
  %1657 = vmatprep.subr.mxu0 0.0
  %1658 = vmatpush1.msra.mxu0 %v1077
  %1659 = vmatprep.subr.mxu0 0.0
  %1660 = vmatpush1.msra.mxu0 %v1078
  %1661 = vmatprep.subr.mxu0 0.0
  %1662 = vmatpush1.msra.mxu0 %v1079
  %1663 = vmatprep.subr.mxu0 0.0
  %1664 = vmatpush1.msra.mxu0 %v1080
  %1665 = vmatprep.subr.mxu0 0.0
  %1666 = vmatpush1.msra.mxu0 %v1081
  %1667 = vmatprep.subr.mxu0 0.0
  %1668 = vmatpush1.msra.mxu0 %v1082
  %1669 = vmatprep.subr.mxu0 0.0
  %1670 = vmatpush1.msra.mxu0 %v1083
  %1671 = vmatprep.subr.mxu0 0.0
  %1672 = vmatpush1.msra.mxu0 %v1084
  %1673 = vmatprep.subr.mxu0 0.0
  %1674 = vmatpush1.msra.mxu0 %v1085
  %1675 = vmatprep.mubr.f32.mxu0 %v992
  %1676 = vmatmul.mubr.f32.gmra.mrb[0].mxu0 %v991
  %v1677 = vpop.f32.mrb[0].mxu0
  %v1678 = vadd.f32 %v1608, %v1677
  %v1679 = vpop.f32.mrb[0].mxu0
  %1680 = vdwg.mxu0
  %1681 = vmatprep.subr.mxu0 0.0
  %1682 = vmatpush1.msra.mxu0 %v1086
  %1683 = vmatprep.subr.mxu0 0.0
  %1684 = vmatpush1.msra.mxu0 %v1087
  %1685 = vmatprep.subr.mxu0 0.0
  %1686 = vmatpush1.msra.mxu0 %v1088
  %1687 = vmatprep.subr.mxu0 0.0
  %1688 = vmatpush1.msra.mxu0 %v1089
  %1689 = vmatprep.subr.mxu0 0.0
  %1690 = vmatpush1.msra.mxu0 %v1090
  %1691 = vmatprep.subr.mxu0 0.0
  %1692 = vmatpush1.msra.mxu0 %v1091
  %1693 = vmatprep.subr.mxu0 0.0
  %1694 = vmatpush1.msra.mxu0 %v1092
  %1695 = vmatprep.subr.mxu0 0.0
  %1696 = vmatpush1.msra.mxu0 %v1093
  %1697 = vmatprep.subr.mxu0 0.0
  %1698 = vmatpush1.msra.mxu0 %v1094
  %1699 = vmatprep.subr.mxu0 0.0
  %1700 = vmatpush1.msra.mxu0 %v1095
  %1701 = vmatprep.subr.mxu0 0.0
  %1702 = vmatpush1.msra.mxu0 %v1096
  %1703 = vmatprep.subr.mxu0 0.0
  %1704 = vmatpush1.msra.mxu0 %v1097
  %1705 = vmatprep.subr.mxu0 0.0
  %1706 = vmatpush1.msra.mxu0 %v1098
  %1707 = vmatprep.subr.mxu0 0.0
  %1708 = vmatpush1.msra.mxu0 %v1099
  %1709 = vmatprep.subr.mxu0 0.0
  %1710 = vmatpush1.msra.mxu0 %v1100
  %1711 = vmatprep.subr.mxu0 0.0
  %1712 = vmatpush1.msra.mxu0 %v1101
  %1713 = vmatprep.subr.mxu0 0.0
  %1714 = vmatpush1.msra.mxu0 %v1102
  %1715 = vmatprep.subr.mxu0 0.0
  %1716 = vmatpush1.msra.mxu0 %v1103
  %1717 = vmatprep.subr.mxu0 0.0
  %1718 = vmatpush1.msra.mxu0 %v1104
  %1719 = vmatprep.subr.mxu0 0.0
  %1720 = vmatpush1.msra.mxu0 %v1105
  %1721 = vmatprep.subr.mxu0 0.0
  %1722 = vmatpush1.msra.mxu0 %v1106
  %1723 = vmatprep.subr.mxu0 0.0
  %1724 = vmatpush1.msra.mxu0 %v1107
  %1725 = vmatprep.subr.mxu0 0.0
  %1726 = vmatpush1.msra.mxu0 %v1108
  %1727 = vmatprep.subr.mxu0 0.0
  %1728 = vmatpush1.msra.mxu0 %v1109
  %1729 = vmatprep.subr.mxu0 0.0
  %1730 = vmatpush1.msra.mxu0 %v1110
  %1731 = vmatprep.subr.mxu0 0.0
  %1732 = vmatpush1.msra.mxu0 %v1111
  %1733 = vmatprep.subr.mxu0 0.0
  %1734 = vmatpush1.msra.mxu0 %v1112
  %1735 = vmatprep.subr.mxu0 0.0
  %1736 = vmatpush1.msra.mxu0 %v1113
  %1737 = vmatprep.subr.mxu0 0.0
  %1738 = vmatpush1.msra.mxu0 %v1114
  %1739 = vmatprep.subr.mxu0 0.0
  %1740 = vmatpush1.msra.mxu0 %v1115
  %1741 = vmatprep.subr.mxu0 0.0
  %1742 = vmatpush1.msra.mxu0 %v1116
  %1743 = vmatprep.subr.mxu0 0.0
  %1744 = vmatpush1.msra.mxu0 %v1117
  %1745 = vmatprep.mubr.f32.mxu0 %v994
  %1746 = vmatmul.mubr.f32.gmra.mrb[0].mxu0 %v993
  %v1747 = vpop.f32.mrb[0].mxu0
  %v1748 = vadd.f32 %v1678, %v1747
  %v1749 = vpop.f32.mrb[0].mxu0
  %1750 = vdwg.mxu0
  %1751 = vmatprep.subr.mxu0 0.0
  %1752 = vmatpush1.msra.mxu0 %v1118
  %1753 = vmatprep.subr.mxu0 0.0
  %1754 = vmatpush1.msra.mxu0 %v1119
  %1755 = vmatprep.subr.mxu0 0.0
  %1756 = vmatpush1.msra.mxu0 %v1120
  %1757 = vmatprep.subr.mxu0 0.0
  %1758 = vmatpush1.msra.mxu0 %v1121
  %1759 = vmatprep.subr.mxu0 0.0
  %1760 = vmatpush1.msra.mxu0 %v1122
  %1761 = vmatprep.subr.mxu0 0.0
  %1762 = vmatpush1.msra.mxu0 %v1123
  %1763 = vmatprep.subr.mxu0 0.0
  %1764 = vmatpush1.msra.mxu0 %v1124
  %1765 = vmatprep.subr.mxu0 0.0
  %1766 = vmatpush1.msra.mxu0 %v1125
  %1767 = vmatprep.subr.mxu0 0.0
  %1768 = vmatpush1.msra.mxu0 %v1126
  %1769 = vmatprep.subr.mxu0 0.0
  %1770 = vmatpush1.msra.mxu0 %v1127
  %1771 = vmatprep.subr.mxu0 0.0
  %1772 = vmatpush1.msra.mxu0 %v1128
  %1773 = vmatprep.subr.mxu0 0.0
  %1774 = vmatpush1.msra.mxu0 %v1129
  %1775 = vmatprep.subr.mxu0 0.0
  %1776 = vmatpush1.msra.mxu0 %v1130
  %1777 = vmatprep.subr.mxu0 0.0
  %1778 = vmatpush1.msra.mxu0 %v1131
  %1779 = vmatprep.subr.mxu0 0.0
  %1780 = vmatpush1.msra.mxu0 %v1132
  %1781 = vmatprep.subr.mxu0 0.0
  %1782 = vmatpush1.msra.mxu0 %v1133
  %1783 = vmatprep.subr.mxu0 0.0
  %1784 = vmatpush1.msra.mxu0 %v1134
  %1785 = vmatprep.subr.mxu0 0.0
  %1786 = vmatpush1.msra.mxu0 %v1135
  %1787 = vmatprep.subr.mxu0 0.0
  %1788 = vmatpush1.msra.mxu0 %v1136
  %1789 = vmatprep.subr.mxu0 0.0
  %1790 = vmatpush1.msra.mxu0 %v1137
  %1791 = vmatprep.subr.mxu0 0.0
  %1792 = vmatpush1.msra.mxu0 %v1138
  %1793 = vmatprep.subr.mxu0 0.0
  %1794 = vmatpush1.msra.mxu0 %v1139
  %1795 = vmatprep.subr.mxu0 0.0
  %1796 = vmatpush1.msra.mxu0 %v1140
  %1797 = vmatprep.subr.mxu0 0.0
  %1798 = vmatpush1.msra.mxu0 %v1141
  %1799 = vmatprep.subr.mxu0 0.0
  %1800 = vmatpush1.msra.mxu0 %v1142
  %1801 = vmatprep.subr.mxu0 0.0
  %1802 = vmatpush1.msra.mxu0 %v1143
  %1803 = vmatprep.subr.mxu0 0.0
  %1804 = vmatpush1.msra.mxu0 %v1144
  %1805 = vmatprep.subr.mxu0 0.0
  %1806 = vmatpush1.msra.mxu0 %v1145
  %1807 = vmatprep.subr.mxu0 0.0
  %1808 = vmatpush1.msra.mxu0 %v1146
  %1809 = vmatprep.subr.mxu0 0.0
  %1810 = vmatpush1.msra.mxu0 %v1147
  %1811 = vmatprep.subr.mxu0 0.0
  %1812 = vmatpush1.msra.mxu0 %v1148
  %1813 = vmatprep.subr.mxu0 0.0
  %1814 = vmatpush1.msra.mxu0 %v1149
  %1815 = vmatprep.mubr.f32.mxu0 %v996
  %1816 = vmatmul.mubr.f32.gmra.mrb[0].mxu0 %v995
  %v1817 = vpop.f32.mrb[0].mxu0
  %v1818 = vadd.f32 %v1748, %v1817
  %v1819 = vpop.f32.mrb[0].mxu0
  %1820 = vdwg.mxu0
  %1821 = vmatprep.subr.mxu0 0.0
  %1822 = vmatpush1.msra.mxu0 %v1150
  %1823 = vmatprep.subr.mxu0 0.0
  %1824 = vmatpush1.msra.mxu0 %v1151
  %1825 = vmatprep.subr.mxu0 0.0
  %1826 = vmatpush1.msra.mxu0 %v1152
  %1827 = vmatprep.subr.mxu0 0.0
  %1828 = vmatpush1.msra.mxu0 %v1153
  %1829 = vmatprep.subr.mxu0 0.0
  %1830 = vmatpush1.msra.mxu0 %v1154
  %1831 = vmatprep.subr.mxu0 0.0
  %1832 = vmatpush1.msra.mxu0 %v1155
  %1833 = vmatprep.subr.mxu0 0.0
  %1834 = vmatpush1.msra.mxu0 %v1156
  %1835 = vmatprep.subr.mxu0 0.0
  %1836 = vmatpush1.msra.mxu0 %v1157
  %1837 = vmatprep.subr.mxu0 0.0
  %1838 = vmatpush1.msra.mxu0 %v1158
  %1839 = vmatprep.subr.mxu0 0.0
  %1840 = vmatpush1.msra.mxu0 %v1159
  %1841 = vmatprep.subr.mxu0 0.0
  %1842 = vmatpush1.msra.mxu0 %v1160
  %1843 = vmatprep.subr.mxu0 0.0
  %1844 = vmatpush1.msra.mxu0 %v1161
  %1845 = vmatprep.subr.mxu0 0.0
  %1846 = vmatpush1.msra.mxu0 %v1162
  %1847 = vmatprep.subr.mxu0 0.0
  %1848 = vmatpush1.msra.mxu0 %v1163
  %1849 = vmatprep.subr.mxu0 0.0
  %1850 = vmatpush1.msra.mxu0 %v1164
  %1851 = vmatprep.subr.mxu0 0.0
  %1852 = vmatpush1.msra.mxu0 %v1165
  %1853 = vmatprep.subr.mxu0 0.0
  %1854 = vmatpush1.msra.mxu0 %v1166
  %1855 = vmatprep.subr.mxu0 0.0
  %1856 = vmatpush1.msra.mxu0 %v1167
  %1857 = vmatprep.subr.mxu0 0.0
  %1858 = vmatpush1.msra.mxu0 %v1168
  %1859 = vmatprep.subr.mxu0 0.0
  %1860 = vmatpush1.msra.mxu0 %v1169
  %1861 = vmatprep.subr.mxu0 0.0
  %1862 = vmatpush1.msra.mxu0 %v1170
  %1863 = vmatprep.subr.mxu0 0.0
  %1864 = vmatpush1.msra.mxu0 %v1171
  %1865 = vmatprep.subr.mxu0 0.0
  %1866 = vmatpush1.msra.mxu0 %v1172
  %1867 = vmatprep.subr.mxu0 0.0
  %1868 = vmatpush1.msra.mxu0 %v1173
  %1869 = vmatprep.subr.mxu0 0.0
  %1870 = vmatpush1.msra.mxu0 %v1174
  %1871 = vmatprep.subr.mxu0 0.0
  %1872 = vmatpush1.msra.mxu0 %v1175
  %1873 = vmatprep.subr.mxu0 0.0
  %1874 = vmatpush1.msra.mxu0 %v1176
  %1875 = vmatprep.subr.mxu0 0.0
  %1876 = vmatpush1.msra.mxu0 %v1177
  %1877 = vmatprep.subr.mxu0 0.0
  %1878 = vmatpush1.msra.mxu0 %v1178
  %1879 = vmatprep.subr.mxu0 0.0
  %1880 = vmatpush1.msra.mxu0 %v1179
  %1881 = vmatprep.subr.mxu0 0.0
  %1882 = vmatpush1.msra.mxu0 %v1180
  %1883 = vmatprep.subr.mxu0 0.0
  %1884 = vmatpush1.msra.mxu0 %v1181
  %1885 = vmatprep.mubr.f32.mxu0 %v998
  %1886 = vmatmul.mubr.f32.gmra.mrb[0].mxu0 %v997
  %v1887 = vpop.f32.mrb[0].mxu0
  %v1888 = vadd.f32 %v1818, %v1887
  %v1889 = vpop.f32.mrb[0].mxu0
  %1890 = vdwg.mxu0
  %1891 = vmatprep.subr.mxu0 0.0
  %1892 = vmatpush1.msra.mxu0 %v1182
  %1893 = vmatprep.subr.mxu0 0.0
  %1894 = vmatpush1.msra.mxu0 %v1183
  %1895 = vmatprep.subr.mxu0 0.0
  %1896 = vmatpush1.msra.mxu0 %v1184
  %1897 = vmatprep.subr.mxu0 0.0
  %1898 = vmatpush1.msra.mxu0 %v1185
  %1899 = vmatprep.subr.mxu0 0.0
  %1900 = vmatpush1.msra.mxu0 %v1186
  %1901 = vmatprep.subr.mxu0 0.0
  %1902 = vmatpush1.msra.mxu0 %v1187
  %1903 = vmatprep.subr.mxu0 0.0
  %1904 = vmatpush1.msra.mxu0 %v1188
  %1905 = vmatprep.subr.mxu0 0.0
  %1906 = vmatpush1.msra.mxu0 %v1189
  %1907 = vmatprep.subr.mxu0 0.0
  %1908 = vmatpush1.msra.mxu0 %v1190
  %1909 = vmatprep.subr.mxu0 0.0
  %1910 = vmatpush1.msra.mxu0 %v1191
  %1911 = vmatprep.subr.mxu0 0.0
  %1912 = vmatpush1.msra.mxu0 %v1192
  %1913 = vmatprep.subr.mxu0 0.0
  %1914 = vmatpush1.msra.mxu0 %v1193
  %1915 = vmatprep.subr.mxu0 0.0
  %1916 = vmatpush1.msra.mxu0 %v1194
  %1917 = vmatprep.subr.mxu0 0.0
  %1918 = vmatpush1.msra.mxu0 %v1195
  %1919 = vmatprep.subr.mxu0 0.0
  %1920 = vmatpush1.msra.mxu0 %v1196
  %1921 = vmatprep.subr.mxu0 0.0
  %1922 = vmatpush1.msra.mxu0 %v1197
  %1923 = vmatprep.subr.mxu0 0.0
  %1924 = vmatpush1.msra.mxu0 %v1198
  %1925 = vmatprep.subr.mxu0 0.0
  %1926 = vmatpush1.msra.mxu0 %v1199
  %1927 = vmatprep.subr.mxu0 0.0
  %1928 = vmatpush1.msra.mxu0 %v1200
  %1929 = vmatprep.subr.mxu0 0.0
  %1930 = vmatpush1.msra.mxu0 %v1201
  %1931 = vmatprep.subr.mxu0 0.0
  %1932 = vmatpush1.msra.mxu0 %v1202
  %1933 = vmatprep.subr.mxu0 0.0
  %1934 = vmatpush1.msra.mxu0 %v1203
  %1935 = vmatprep.subr.mxu0 0.0
  %1936 = vmatpush1.msra.mxu0 %v1204
  %1937 = vmatprep.subr.mxu0 0.0
  %1938 = vmatpush1.msra.mxu0 %v1205
  %1939 = vmatprep.subr.mxu0 0.0
  %1940 = vmatpush1.msra.mxu0 %v1206
  %1941 = vmatprep.subr.mxu0 0.0
  %1942 = vmatpush1.msra.mxu0 %v1207
  %1943 = vmatprep.subr.mxu0 0.0
  %1944 = vmatpush1.msra.mxu0 %v1208
  %1945 = vmatprep.subr.mxu0 0.0
  %1946 = vmatpush1.msra.mxu0 %v1209
  %1947 = vmatprep.subr.mxu0 0.0
  %1948 = vmatpush1.msra.mxu0 %v1210
  %1949 = vmatprep.subr.mxu0 0.0
  %1950 = vmatpush1.msra.mxu0 %v1211
  %1951 = vmatprep.subr.mxu0 0.0
  %1952 = vmatpush1.msra.mxu0 %v1212
  %1953 = vmatprep.subr.mxu0 0.0
  %1954 = vmatpush1.msra.mxu0 %v1213
  %1955 = vmatprep.mubr.f32.mxu0 %v1000
  %1956 = vmatmul.mubr.f32.gmra.mrb[0].mxu0 %v999
  %v1957 = vpop.f32.mrb[0].mxu0
  %v1958 = vadd.f32 %v1888, %v1957
  %v1959 = vpop.f32.mrb[0].mxu0
  %1960 = vdwg.mxu0
  %1961 = vmatprep.subr.mxu0 0.0
  %1962 = vmatpush1.msra.mxu0 %v1214
  %1963 = vmatprep.subr.mxu0 0.0
  %1964 = vmatpush1.msra.mxu0 %v1215
  %1965 = vmatprep.subr.mxu0 0.0
  %1966 = vmatpush1.msra.mxu0 %v1216
  %1967 = vmatprep.subr.mxu0 0.0
  %1968 = vmatpush1.msra.mxu0 %v1217
  %1969 = vmatprep.subr.mxu0 0.0
  %1970 = vmatpush1.msra.mxu0 %v1218
  %1971 = vmatprep.subr.mxu0 0.0
  %1972 = vmatpush1.msra.mxu0 %v1219
  %1973 = vmatprep.subr.mxu0 0.0
  %1974 = vmatpush1.msra.mxu0 %v1220
  %1975 = vmatprep.subr.mxu0 0.0
  %1976 = vmatpush1.msra.mxu0 %v1221
  %1977 = vmatprep.subr.mxu0 0.0
  %1978 = vmatpush1.msra.mxu0 %v1222
  %1979 = vmatprep.subr.mxu0 0.0
  %1980 = vmatpush1.msra.mxu0 %v1223
  %1981 = vmatprep.subr.mxu0 0.0
  %1982 = vmatpush1.msra.mxu0 %v1224
  %1983 = vmatprep.subr.mxu0 0.0
  %1984 = vmatpush1.msra.mxu0 %v1225
  %1985 = vmatprep.subr.mxu0 0.0
  %1986 = vmatpush1.msra.mxu0 %v1226
  %1987 = vmatprep.subr.mxu0 0.0
  %1988 = vmatpush1.msra.mxu0 %v1227
  %1989 = vmatprep.subr.mxu0 0.0
  %1990 = vmatpush1.msra.mxu0 %v1228
  %1991 = vmatprep.subr.mxu0 0.0
  %1992 = vmatpush1.msra.mxu0 %v1229
  %1993 = vmatprep.subr.mxu0 0.0
  %1994 = vmatpush1.msra.mxu0 %v1230
  %1995 = vmatprep.subr.mxu0 0.0
  %1996 = vmatpush1.msra.mxu0 %v1231
  %1997 = vmatprep.subr.mxu0 0.0
  %1998 = vmatpush1.msra.mxu0 %v1232
  %1999 = vmatprep.subr.mxu0 0.0
  %2000 = vmatpush1.msra.mxu0 %v1233
  %2001 = vmatprep.subr.mxu0 0.0
  %2002 = vmatpush1.msra.mxu0 %v1234
  %2003 = vmatprep.subr.mxu0 0.0
  %2004 = vmatpush1.msra.mxu0 %v1235
  %2005 = vmatprep.subr.mxu0 0.0
  %2006 = vmatpush1.msra.mxu0 %v1236
  %2007 = vmatprep.subr.mxu0 0.0
  %2008 = vmatpush1.msra.mxu0 %v1237
  %2009 = vmatprep.subr.mxu0 0.0
  %2010 = vmatpush1.msra.mxu0 %v1238
  %2011 = vmatprep.subr.mxu0 0.0
  %2012 = vmatpush1.msra.mxu0 %v1239
  %2013 = vmatprep.subr.mxu0 0.0
  %2014 = vmatpush1.msra.mxu0 %v1240
  %2015 = vmatprep.subr.mxu0 0.0
  %2016 = vmatpush1.msra.mxu0 %v1241
  %2017 = vmatprep.subr.mxu0 0.0
  %2018 = vmatpush1.msra.mxu0 %v1242
  %2019 = vmatprep.subr.mxu0 0.0
  %2020 = vmatpush1.msra.mxu0 %v1243
  %2021 = vmatprep.subr.mxu0 0.0
  %2022 = vmatpush1.msra.mxu0 %v1244
  %2023 = vmatprep.subr.mxu0 0.0
  %2024 = vmatpush1.msra.mxu0 %v1245
  %2025 = vmatprep.mubr.f32.mxu0 %v1002
  %2026 = vmatmul.mubr.f32.gmra.mrb[0].mxu0 %v1001
  %v2027 = vpop.f32.mrb[0].mxu0
  %v2028 = vadd.f32 %v1958, %v2027
  %v2029 = vpop.f32.mrb[0].mxu0
  %2030 = vdwg.mxu0
  %2031 = vmatprep.subr.mxu0 0.0
  %2032 = vmatpush1.msra.mxu0 %v1246
  %2033 = vmatprep.subr.mxu0 0.0
  %2034 = vmatpush1.msra.mxu0 %v1247
  %2035 = vmatprep.subr.mxu0 0.0
  %2036 = vmatpush1.msra.mxu0 %v1248
  %2037 = vmatprep.subr.mxu0 0.0
  %2038 = vmatpush1.msra.mxu0 %v1249
  %2039 = vmatprep.subr.mxu0 0.0
  %2040 = vmatpush1.msra.mxu0 %v1250
  %2041 = vmatprep.subr.mxu0 0.0
  %2042 = vmatpush1.msra.mxu0 %v1251
  %2043 = vmatprep.subr.mxu0 0.0
  %2044 = vmatpush1.msra.mxu0 %v1252
  %2045 = vmatprep.subr.mxu0 0.0
  %2046 = vmatpush1.msra.mxu0 %v1253
  %2047 = vmatprep.subr.mxu0 0.0
  %2048 = vmatpush1.msra.mxu0 %v1254
  %2049 = vmatprep.subr.mxu0 0.0
  %2050 = vmatpush1.msra.mxu0 %v1255
  %2051 = vmatprep.subr.mxu0 0.0
  %2052 = vmatpush1.msra.mxu0 %v1256
  %2053 = vmatprep.subr.mxu0 0.0
  %2054 = vmatpush1.msra.mxu0 %v1257
  %2055 = vmatprep.subr.mxu0 0.0
  %2056 = vmatpush1.msra.mxu0 %v1258
  %2057 = vmatprep.subr.mxu0 0.0
  %2058 = vmatpush1.msra.mxu0 %v1259
  %2059 = vmatprep.subr.mxu0 0.0
  %2060 = vmatpush1.msra.mxu0 %v1260
  %2061 = vmatprep.subr.mxu0 0.0
  %2062 = vmatpush1.msra.mxu0 %v1261
  %2063 = vmatprep.subr.mxu0 0.0
  %2064 = vmatpush1.msra.mxu0 %v1262
  %2065 = vmatprep.subr.mxu0 0.0
  %2066 = vmatpush1.msra.mxu0 %v1263
  %2067 = vmatprep.subr.mxu0 0.0
  %2068 = vmatpush1.msra.mxu0 %v1264
  %2069 = vmatprep.subr.mxu0 0.0
  %2070 = vmatpush1.msra.mxu0 %v1265
  %2071 = vmatprep.subr.mxu0 0.0
  %2072 = vmatpush1.msra.mxu0 %v1266
  %2073 = vmatprep.subr.mxu0 0.0
  %2074 = vmatpush1.msra.mxu0 %v1267
  %2075 = vmatprep.subr.mxu0 0.0
  %2076 = vmatpush1.msra.mxu0 %v1268
  %2077 = vmatprep.subr.mxu0 0.0
  %2078 = vmatpush1.msra.mxu0 %v1269
  %2079 = vmatprep.subr.mxu0 0.0
  %2080 = vmatpush1.msra.mxu0 %v1270
  %2081 = vmatprep.subr.mxu0 0.0
  %2082 = vmatpush1.msra.mxu0 %v1271
  %2083 = vmatprep.subr.mxu0 0.0
  %2084 = vmatpush1.msra.mxu0 %v1272
  %2085 = vmatprep.subr.mxu0 0.0
  %2086 = vmatpush1.msra.mxu0 %v1273
  %2087 = vmatprep.subr.mxu0 0.0
  %2088 = vmatpush1.msra.mxu0 %v1274
  %2089 = vmatprep.subr.mxu0 0.0
  %2090 = vmatpush1.msra.mxu0 %v1275
  %2091 = vmatprep.subr.mxu0 0.0
  %2092 = vmatpush1.msra.mxu0 %v1276
  %2093 = vmatprep.subr.mxu0 0.0
  %2094 = vmatpush1.msra.mxu0 %v1277
  %2095 = vmatprep.mubr.f32.mxu0 %v1004
  %2096 = vmatmul.mubr.f32.gmra.mrb[0].mxu0 %v1003
  %v2097 = vpop.f32.mrb[0].mxu0
  %v2098 = vadd.f32 %v2028, %v2097
  %v2099 = vpop.f32.mrb[0].mxu0
  %2100 = vdwg.mxu0
  %2101 = vmatprep.subr.mxu0 0.0
  %2102 = vmatpush1.msra.mxu0 %v1278
  %2103 = vmatprep.subr.mxu0 0.0
  %2104 = vmatpush1.msra.mxu0 %v1279
  %2105 = vmatprep.subr.mxu0 0.0
  %2106 = vmatpush1.msra.mxu0 %v1280
  %2107 = vmatprep.subr.mxu0 0.0
  %2108 = vmatpush1.msra.mxu0 %v1281
  %2109 = vmatprep.subr.mxu0 0.0
  %2110 = vmatpush1.msra.mxu0 %v1282
  %2111 = vmatprep.subr.mxu0 0.0
  %2112 = vmatpush1.msra.mxu0 %v1283
  %2113 = vmatprep.subr.mxu0 0.0
  %2114 = vmatpush1.msra.mxu0 %v1284
  %2115 = vmatprep.subr.mxu0 0.0
  %2116 = vmatpush1.msra.mxu0 %v1285
  %2117 = vmatprep.subr.mxu0 0.0
  %2118 = vmatpush1.msra.mxu0 %v1286
  %2119 = vmatprep.subr.mxu0 0.0
  %2120 = vmatpush1.msra.mxu0 %v1287
  %2121 = vmatprep.subr.mxu0 0.0
  %2122 = vmatpush1.msra.mxu0 %v1288
  %2123 = vmatprep.subr.mxu0 0.0
  %2124 = vmatpush1.msra.mxu0 %v1289
  %2125 = vmatprep.subr.mxu0 0.0
  %2126 = vmatpush1.msra.mxu0 %v1290
  %2127 = vmatprep.subr.mxu0 0.0
  %2128 = vmatpush1.msra.mxu0 %v1291
  %2129 = vmatprep.subr.mxu0 0.0
  %2130 = vmatpush1.msra.mxu0 %v1292
  %2131 = vmatprep.subr.mxu0 0.0
  %2132 = vmatpush1.msra.mxu0 %v1293
  %2133 = vmatprep.subr.mxu0 0.0
  %2134 = vmatpush1.msra.mxu0 %v1294
  %2135 = vmatprep.subr.mxu0 0.0
  %2136 = vmatpush1.msra.mxu0 %v1295
  %2137 = vmatprep.subr.mxu0 0.0
  %2138 = vmatpush1.msra.mxu0 %v1296
  %2139 = vmatprep.subr.mxu0 0.0
  %2140 = vmatpush1.msra.mxu0 %v1297
  %2141 = vmatprep.subr.mxu0 0.0
  %2142 = vmatpush1.msra.mxu0 %v1298
  %2143 = vmatprep.subr.mxu0 0.0
  %2144 = vmatpush1.msra.mxu0 %v1299
  %2145 = vmatprep.subr.mxu0 0.0
  %2146 = vmatpush1.msra.mxu0 %v1300
  %2147 = vmatprep.subr.mxu0 0.0
  %2148 = vmatpush1.msra.mxu0 %v1301
  %2149 = vmatprep.subr.mxu0 0.0
  %2150 = vmatpush1.msra.mxu0 %v1302
  %2151 = vmatprep.subr.mxu0 0.0
  %2152 = vmatpush1.msra.mxu0 %v1303
  %2153 = vmatprep.subr.mxu0 0.0
  %2154 = vmatpush1.msra.mxu0 %v1304
  %2155 = vmatprep.subr.mxu0 0.0
  %2156 = vmatpush1.msra.mxu0 %v1305
  %2157 = vmatprep.subr.mxu0 0.0
  %2158 = vmatpush1.msra.mxu0 %v1306
  %2159 = vmatprep.subr.mxu0 0.0
  %2160 = vmatpush1.msra.mxu0 %v1307
  %2161 = vmatprep.subr.mxu0 0.0
  %2162 = vmatpush1.msra.mxu0 %v1308
  %2163 = vmatprep.subr.mxu0 0.0
  %2164 = vmatpush1.msra.mxu0 %v1309
  %2165 = vmatprep.mubr.f32.mxu0 %v1006
  %2166 = vmatmul.mubr.f32.gmra.mrb[0].mxu0 %v1005
  %v2167 = vpop.f32.mrb[0].mxu0
  %v2168 = vadd.f32 %v2098, %v2167
  %v2169 = vpop.f32.mrb[0].mxu0
  %2170 = vdwg.mxu0
  %2171 = vmatprep.subr.mxu0 0.0
  %2172 = vmatpush1.msra.mxu0 %v1310
  %2173 = vmatprep.subr.mxu0 0.0
  %2174 = vmatpush1.msra.mxu0 %v1311
  %2175 = vmatprep.subr.mxu0 0.0
  %2176 = vmatpush1.msra.mxu0 %v1312
  %2177 = vmatprep.subr.mxu0 0.0
  %2178 = vmatpush1.msra.mxu0 %v1313
  %2179 = vmatprep.subr.mxu0 0.0
  %2180 = vmatpush1.msra.mxu0 %v1314
  %2181 = vmatprep.subr.mxu0 0.0
  %2182 = vmatpush1.msra.mxu0 %v1315
  %2183 = vmatprep.subr.mxu0 0.0
  %2184 = vmatpush1.msra.mxu0 %v1316
  %2185 = vmatprep.subr.mxu0 0.0
  %2186 = vmatpush1.msra.mxu0 %v1317
  %2187 = vmatprep.subr.mxu0 0.0
  %2188 = vmatpush1.msra.mxu0 %v1318
  %2189 = vmatprep.subr.mxu0 0.0
  %2190 = vmatpush1.msra.mxu0 %v1319
  %2191 = vmatprep.subr.mxu0 0.0
  %2192 = vmatpush1.msra.mxu0 %v1320
  %2193 = vmatprep.subr.mxu0 0.0
  %2194 = vmatpush1.msra.mxu0 %v1321
  %2195 = vmatprep.subr.mxu0 0.0
  %2196 = vmatpush1.msra.mxu0 %v1322
  %2197 = vmatprep.subr.mxu0 0.0
  %2198 = vmatpush1.msra.mxu0 %v1323
  %2199 = vmatprep.subr.mxu0 0.0
  %2200 = vmatpush1.msra.mxu0 %v1324
  %2201 = vmatprep.subr.mxu0 0.0
  %2202 = vmatpush1.msra.mxu0 %v1325
  %2203 = vmatprep.subr.mxu0 0.0
  %2204 = vmatpush1.msra.mxu0 %v1326
  %2205 = vmatprep.subr.mxu0 0.0
  %2206 = vmatpush1.msra.mxu0 %v1327
  %2207 = vmatprep.subr.mxu0 0.0
  %2208 = vmatpush1.msra.mxu0 %v1328
  %2209 = vmatprep.subr.mxu0 0.0
  %2210 = vmatpush1.msra.mxu0 %v1329
  %2211 = vmatprep.subr.mxu0 0.0
  %2212 = vmatpush1.msra.mxu0 %v1330
  %2213 = vmatprep.subr.mxu0 0.0
  %2214 = vmatpush1.msra.mxu0 %v1331
  %2215 = vmatprep.subr.mxu0 0.0
  %2216 = vmatpush1.msra.mxu0 %v1332
  %2217 = vmatprep.subr.mxu0 0.0
  %2218 = vmatpush1.msra.mxu0 %v1333
  %2219 = vmatprep.subr.mxu0 0.0
  %2220 = vmatpush1.msra.mxu0 %v1334
  %2221 = vmatprep.subr.mxu0 0.0
  %2222 = vmatpush1.msra.mxu0 %v1335
  %2223 = vmatprep.subr.mxu0 0.0
  %2224 = vmatpush1.msra.mxu0 %v1336
  %2225 = vmatprep.subr.mxu0 0.0
  %2226 = vmatpush1.msra.mxu0 %v1337
  %2227 = vmatprep.subr.mxu0 0.0
  %2228 = vmatpush1.msra.mxu0 %v1338
  %2229 = vmatprep.subr.mxu0 0.0
  %2230 = vmatpush1.msra.mxu0 %v1339
  %2231 = vmatprep.subr.mxu0 0.0
  %2232 = vmatpush1.msra.mxu0 %v1340
  %2233 = vmatprep.subr.mxu0 0.0
  %2234 = vmatpush1.msra.mxu0 %v1341
  %2235 = vmatprep.mubr.f32.mxu0 %v1008
  %2236 = vmatmul.mubr.f32.gmra.mrb[0].mxu0 %v1007
  %v2237 = vpop.f32.mrb[0].mxu0
  %v2238 = vadd.f32 %v2168, %v2237
  %v2239 = vpop.f32.mrb[0].mxu0
  %2240 = vdwg.mxu0
  %2241 = vmatprep.subr.mxu0 0.0
  %2242 = vmatpush1.msra.mxu0 %v1342
  %2243 = vmatprep.subr.mxu0 0.0
  %2244 = vmatpush1.msra.mxu0 %v1343
  %2245 = vmatprep.subr.mxu0 0.0
  %2246 = vmatpush1.msra.mxu0 %v1344
  %2247 = vmatprep.subr.mxu0 0.0
  %2248 = vmatpush1.msra.mxu0 %v1345
  %2249 = vmatprep.subr.mxu0 0.0
  %2250 = vmatpush1.msra.mxu0 %v1346
  %2251 = vmatprep.subr.mxu0 0.0
  %2252 = vmatpush1.msra.mxu0 %v1347
  %2253 = vmatprep.subr.mxu0 0.0
  %2254 = vmatpush1.msra.mxu0 %v1348
  %2255 = vmatprep.subr.mxu0 0.0
  %2256 = vmatpush1.msra.mxu0 %v1349
  %2257 = vmatprep.subr.mxu0 0.0
  %2258 = vmatpush1.msra.mxu0 %v1350
  %2259 = vmatprep.subr.mxu0 0.0
  %2260 = vmatpush1.msra.mxu0 %v1351
  %2261 = vmatprep.subr.mxu0 0.0
  %2262 = vmatpush1.msra.mxu0 %v1352
  %2263 = vmatprep.subr.mxu0 0.0
  %2264 = vmatpush1.msra.mxu0 %v1353
  %2265 = vmatprep.subr.mxu0 0.0
  %2266 = vmatpush1.msra.mxu0 %v1354
  %2267 = vmatprep.subr.mxu0 0.0
  %2268 = vmatpush1.msra.mxu0 %v1355
  %2269 = vmatprep.subr.mxu0 0.0
  %2270 = vmatpush1.msra.mxu0 %v1356
  %2271 = vmatprep.subr.mxu0 0.0
  %2272 = vmatpush1.msra.mxu0 %v1357
  %2273 = vmatprep.subr.mxu0 0.0
  %2274 = vmatpush1.msra.mxu0 %v1358
  %2275 = vmatprep.subr.mxu0 0.0
  %2276 = vmatpush1.msra.mxu0 %v1359
  %2277 = vmatprep.subr.mxu0 0.0
  %2278 = vmatpush1.msra.mxu0 %v1360
  %2279 = vmatprep.subr.mxu0 0.0
  %2280 = vmatpush1.msra.mxu0 %v1361
  %2281 = vmatprep.subr.mxu0 0.0
  %2282 = vmatpush1.msra.mxu0 %v1362
  %2283 = vmatprep.subr.mxu0 0.0
  %2284 = vmatpush1.msra.mxu0 %v1363
  %2285 = vmatprep.subr.mxu0 0.0
  %2286 = vmatpush1.msra.mxu0 %v1364
  %2287 = vmatprep.subr.mxu0 0.0
  %2288 = vmatpush1.msra.mxu0 %v1365
  %2289 = vmatprep.subr.mxu0 0.0
  %2290 = vmatpush1.msra.mxu0 %v1366
  %2291 = vmatprep.subr.mxu0 0.0
  %2292 = vmatpush1.msra.mxu0 %v1367
  %2293 = vmatprep.subr.mxu0 0.0
  %2294 = vmatpush1.msra.mxu0 %v1368
  %2295 = vmatprep.subr.mxu0 0.0
  %2296 = vmatpush1.msra.mxu0 %v1369
  %2297 = vmatprep.subr.mxu0 0.0
  %2298 = vmatpush1.msra.mxu0 %v1370
  %2299 = vmatprep.subr.mxu0 0.0
  %2300 = vmatpush1.msra.mxu0 %v1371
  %2301 = vmatprep.subr.mxu0 0.0
  %2302 = vmatpush1.msra.mxu0 %v1372
  %2303 = vmatprep.subr.mxu0 0.0
  %2304 = vmatpush1.msra.mxu0 %v1373
  %2305 = vmatprep.mubr.f32.mxu0 %v1010
  %2306 = vmatmul.mubr.f32.gmra.mrb[0].mxu0 %v1009
  %v2307 = vpop.f32.mrb[0].mxu0
  %v2308 = vadd.f32 %v2238, %v2307
  %v2309 = vpop.f32.mrb[0].mxu0
  %2310 = vdwg.mxu0
  %2311 = vmatprep.subr.mxu0 0.0
  %2312 = vmatpush1.msra.mxu0 %v1374
  %2313 = vmatprep.subr.mxu0 0.0
  %2314 = vmatpush1.msra.mxu0 %v1375
  %2315 = vmatprep.subr.mxu0 0.0
  %2316 = vmatpush1.msra.mxu0 %v1376
  %2317 = vmatprep.subr.mxu0 0.0
  %2318 = vmatpush1.msra.mxu0 %v1377
  %2319 = vmatprep.subr.mxu0 0.0
  %2320 = vmatpush1.msra.mxu0 %v1378
  %2321 = vmatprep.subr.mxu0 0.0
  %2322 = vmatpush1.msra.mxu0 %v1379
  %2323 = vmatprep.subr.mxu0 0.0
  %2324 = vmatpush1.msra.mxu0 %v1380
  %2325 = vmatprep.subr.mxu0 0.0
  %2326 = vmatpush1.msra.mxu0 %v1381
  %2327 = vmatprep.subr.mxu0 0.0
  %2328 = vmatpush1.msra.mxu0 %v1382
  %2329 = vmatprep.subr.mxu0 0.0
  %2330 = vmatpush1.msra.mxu0 %v1383
  %2331 = vmatprep.subr.mxu0 0.0
  %2332 = vmatpush1.msra.mxu0 %v1384
  %2333 = vmatprep.subr.mxu0 0.0
  %2334 = vmatpush1.msra.mxu0 %v1385
  %2335 = vmatprep.subr.mxu0 0.0
  %2336 = vmatpush1.msra.mxu0 %v1386
  %2337 = vmatprep.subr.mxu0 0.0
  %2338 = vmatpush1.msra.mxu0 %v1387
  %2339 = vmatprep.subr.mxu0 0.0
  %2340 = vmatpush1.msra.mxu0 %v1388
  %2341 = vmatprep.subr.mxu0 0.0
  %2342 = vmatpush1.msra.mxu0 %v1389
  %2343 = vmatprep.subr.mxu0 0.0
  %2344 = vmatpush1.msra.mxu0 %v1390
  %2345 = vmatprep.subr.mxu0 0.0
  %2346 = vmatpush1.msra.mxu0 %v1391
  %2347 = vmatprep.subr.mxu0 0.0
  %2348 = vmatpush1.msra.mxu0 %v1392
  %2349 = vmatprep.subr.mxu0 0.0
  %2350 = vmatpush1.msra.mxu0 %v1393
  %2351 = vmatprep.subr.mxu0 0.0
  %2352 = vmatpush1.msra.mxu0 %v1394
  %2353 = vmatprep.subr.mxu0 0.0
  %2354 = vmatpush1.msra.mxu0 %v1395
  %2355 = vmatprep.subr.mxu0 0.0
  %2356 = vmatpush1.msra.mxu0 %v1396
  %2357 = vmatprep.subr.mxu0 0.0
  %2358 = vmatpush1.msra.mxu0 %v1397
  %2359 = vmatprep.subr.mxu0 0.0
  %2360 = vmatpush1.msra.mxu0 %v1398
  %2361 = vmatprep.subr.mxu0 0.0
  %2362 = vmatpush1.msra.mxu0 %v1399
  %2363 = vmatprep.subr.mxu0 0.0
  %2364 = vmatpush1.msra.mxu0 %v1400
  %2365 = vmatprep.subr.mxu0 0.0
  %2366 = vmatpush1.msra.mxu0 %v1401
  %2367 = vmatprep.subr.mxu0 0.0
  %2368 = vmatpush1.msra.mxu0 %v1402
  %2369 = vmatprep.subr.mxu0 0.0
  %2370 = vmatpush1.msra.mxu0 %v1403
  %2371 = vmatprep.subr.mxu0 0.0
  %2372 = vmatpush1.msra.mxu0 %v1404
  %2373 = vmatprep.subr.mxu0 0.0
  %2374 = vmatpush1.msra.mxu0 %v1405
  %2375 = vmatprep.mubr.f32.mxu0 %v1012
  %2376 = vmatmul.mubr.f32.gmra.mrb[0].mxu0 %v1011
  %v2377 = vpop.f32.mrb[0].mxu0
  %v2378 = vadd.f32 %v2308, %v2377
  %v2379 = vpop.f32.mrb[0].mxu0
  %2380 = vdwg.mxu0
  %2381 = vmatprep.subr.mxu0 0.0
  %2382 = vmatpush1.msra.mxu0 %v1406
  %2383 = vmatprep.subr.mxu0 0.0
  %2384 = vmatpush1.msra.mxu0 %v1407
  %2385 = vmatprep.subr.mxu0 0.0
  %2386 = vmatpush1.msra.mxu0 %v1408
  %2387 = vmatprep.subr.mxu0 0.0
  %2388 = vmatpush1.msra.mxu0 %v1409
  %2389 = vmatprep.subr.mxu0 0.0
  %2390 = vmatpush1.msra.mxu0 %v1410
  %2391 = vmatprep.subr.mxu0 0.0
  %2392 = vmatpush1.msra.mxu0 %v1411
  %2393 = vmatprep.subr.mxu0 0.0
  %2394 = vmatpush1.msra.mxu0 %v1412
  %2395 = vmatprep.subr.mxu0 0.0
  %2396 = vmatpush1.msra.mxu0 %v1413
  %2397 = vmatprep.subr.mxu0 0.0
  %2398 = vmatpush1.msra.mxu0 %v1414
  %2399 = vmatprep.subr.mxu0 0.0
  %2400 = vmatpush1.msra.mxu0 %v1415
  %2401 = vmatprep.subr.mxu0 0.0
  %2402 = vmatpush1.msra.mxu0 %v1416
  %2403 = vmatprep.subr.mxu0 0.0
  %2404 = vmatpush1.msra.mxu0 %v1417
  %2405 = vmatprep.subr.mxu0 0.0
  %2406 = vmatpush1.msra.mxu0 %v1418
  %2407 = vmatprep.subr.mxu0 0.0
  %2408 = vmatpush1.msra.mxu0 %v1419
  %2409 = vmatprep.subr.mxu0 0.0
  %2410 = vmatpush1.msra.mxu0 %v1420
  %2411 = vmatprep.subr.mxu0 0.0
  %2412 = vmatpush1.msra.mxu0 %v1421
  %2413 = vmatprep.subr.mxu0 0.0
  %2414 = vmatpush1.msra.mxu0 %v1422
  %2415 = vmatprep.subr.mxu0 0.0
  %2416 = vmatpush1.msra.mxu0 %v1423
  %2417 = vmatprep.subr.mxu0 0.0
  %2418 = vmatpush1.msra.mxu0 %v1424
  %2419 = vmatprep.subr.mxu0 0.0
  %2420 = vmatpush1.msra.mxu0 %v1425
  %2421 = vmatprep.subr.mxu0 0.0
  %2422 = vmatpush1.msra.mxu0 %v1426
  %2423 = vmatprep.subr.mxu0 0.0
  %2424 = vmatpush1.msra.mxu0 %v1427
  %2425 = vmatprep.subr.mxu0 0.0
  %2426 = vmatpush1.msra.mxu0 %v1428
  %2427 = vmatprep.subr.mxu0 0.0
  %2428 = vmatpush1.msra.mxu0 %v1429
  %2429 = vmatprep.subr.mxu0 0.0
  %2430 = vmatpush1.msra.mxu0 %v1430
  %2431 = vmatprep.subr.mxu0 0.0
  %2432 = vmatpush1.msra.mxu0 %v1431
  %2433 = vmatprep.subr.mxu0 0.0
  %2434 = vmatpush1.msra.mxu0 %v1432
  %2435 = vmatprep.subr.mxu0 0.0
  %2436 = vmatpush1.msra.mxu0 %v1433
  %2437 = vmatprep.subr.mxu0 0.0
  %2438 = vmatpush1.msra.mxu0 %v1434
  %2439 = vmatprep.subr.mxu0 0.0
  %2440 = vmatpush1.msra.mxu0 %v1435
  %2441 = vmatprep.subr.mxu0 0.0
  %2442 = vmatpush1.msra.mxu0 %v1436
  %2443 = vmatprep.subr.mxu0 0.0
  %2444 = vmatpush1.msra.mxu0 %v1437
  %2445 = vmatprep.mubr.f32.mxu0 %v1014
  %2446 = vmatmul.mubr.f32.gmra.mrb[0].mxu0 %v1013
  %v2447 = vpop.f32.mrb[0].mxu0
  %v2448 = vadd.f32 %v2378, %v2447
  %v2449 = vpop.f32.mrb[0].mxu0
  %2450 = vdwg.mxu0
  %2451 = vmatprep.subr.mxu0 0.0
  %2452 = vmatpush1.msra.mxu0 %v1438
  %2453 = vmatprep.subr.mxu0 0.0
  %2454 = vmatpush1.msra.mxu0 %v1439
  %2455 = vmatprep.subr.mxu0 0.0
  %2456 = vmatpush1.msra.mxu0 %v1440
  %2457 = vmatprep.subr.mxu0 0.0
  %2458 = vmatpush1.msra.mxu0 %v1441
  %2459 = vmatprep.subr.mxu0 0.0
  %2460 = vmatpush1.msra.mxu0 %v1442
  %2461 = vmatprep.subr.mxu0 0.0
  %2462 = vmatpush1.msra.mxu0 %v1443
  %2463 = vmatprep.subr.mxu0 0.0
  %2464 = vmatpush1.msra.mxu0 %v1444
  %2465 = vmatprep.subr.mxu0 0.0
  %2466 = vmatpush1.msra.mxu0 %v1445
  %2467 = vmatprep.subr.mxu0 0.0
  %2468 = vmatpush1.msra.mxu0 %v1446
  %2469 = vmatprep.subr.mxu0 0.0
  %2470 = vmatpush1.msra.mxu0 %v1447
  %2471 = vmatprep.subr.mxu0 0.0
  %2472 = vmatpush1.msra.mxu0 %v1448
  %2473 = vmatprep.subr.mxu0 0.0
  %2474 = vmatpush1.msra.mxu0 %v1449
  %2475 = vmatprep.subr.mxu0 0.0
  %2476 = vmatpush1.msra.mxu0 %v1450
  %2477 = vmatprep.subr.mxu0 0.0
  %2478 = vmatpush1.msra.mxu0 %v1451
  %2479 = vmatprep.subr.mxu0 0.0
  %2480 = vmatpush1.msra.mxu0 %v1452
  %2481 = vmatprep.subr.mxu0 0.0
  %2482 = vmatpush1.msra.mxu0 %v1453
  %2483 = vmatprep.subr.mxu0 0.0
  %2484 = vmatpush1.msra.mxu0 %v1454
  %2485 = vmatprep.subr.mxu0 0.0
  %2486 = vmatpush1.msra.mxu0 %v1455
  %2487 = vmatprep.subr.mxu0 0.0
  %2488 = vmatpush1.msra.mxu0 %v1456
  %2489 = vmatprep.subr.mxu0 0.0
  %2490 = vmatpush1.msra.mxu0 %v1457
  %2491 = vmatprep.subr.mxu0 0.0
  %2492 = vmatpush1.msra.mxu0 %v1458
  %2493 = vmatprep.subr.mxu0 0.0
  %2494 = vmatpush1.msra.mxu0 %v1459
  %2495 = vmatprep.subr.mxu0 0.0
  %2496 = vmatpush1.msra.mxu0 %v1460
  %2497 = vmatprep.subr.mxu0 0.0
  %2498 = vmatpush1.msra.mxu0 %v1461
  %2499 = vmatprep.subr.mxu0 0.0
  %2500 = vmatpush1.msra.mxu0 %v1462
  %2501 = vmatprep.subr.mxu0 0.0
  %2502 = vmatpush1.msra.mxu0 %v1463
  %2503 = vmatprep.subr.mxu0 0.0
  %2504 = vmatpush1.msra.mxu0 %v1464
  %2505 = vmatprep.subr.mxu0 0.0
  %2506 = vmatpush1.msra.mxu0 %v1465
  %2507 = vmatprep.subr.mxu0 0.0
  %2508 = vmatpush1.msra.mxu0 %v1466
  %2509 = vmatprep.subr.mxu0 0.0
  %2510 = vmatpush1.msra.mxu0 %v1467
  %2511 = vmatprep.subr.mxu0 0.0
  %2512 = vmatpush1.msra.mxu0 %v1468
  %2513 = vmatprep.subr.mxu0 0.0
  %2514 = vmatpush1.msra.mxu0 %v1469
  %2515 = vmatprep.mubr.f32.mxu0 %v1016
  %2516 = vmatmul.mubr.f32.gmra.mrb[0].mxu0 %v1015
  %v2517 = vpop.f32.mrb[0].mxu0
  %v2518 = vadd.f32 %v2448, %v2517
  %v2519 = vpop.f32.mrb[0].mxu0
  %2520 = vdwg.mxu0
  %2521 = vmatprep.subr.mxu0 0.0
  %2522 = vmatpush1.msra.mxu0 %v1470
  %2523 = vmatprep.subr.mxu0 0.0
  %2524 = vmatpush1.msra.mxu0 %v1471
  %2525 = vmatprep.subr.mxu0 0.0
  %2526 = vmatpush1.msra.mxu0 %v1472
  %2527 = vmatprep.subr.mxu0 0.0
  %2528 = vmatpush1.msra.mxu0 %v1473
  %2529 = vmatprep.subr.mxu0 0.0
  %2530 = vmatpush1.msra.mxu0 %v1474
  %2531 = vmatprep.subr.mxu0 0.0
  %2532 = vmatpush1.msra.mxu0 %v1475
  %2533 = vmatprep.subr.mxu0 0.0
  %2534 = vmatpush1.msra.mxu0 %v1476
  %2535 = vmatprep.subr.mxu0 0.0
  %2536 = vmatpush1.msra.mxu0 %v1477
  %2537 = vmatprep.subr.mxu0 0.0
  %2538 = vmatpush1.msra.mxu0 %v1478
  %2539 = vmatprep.subr.mxu0 0.0
  %2540 = vmatpush1.msra.mxu0 %v1479
  %2541 = vmatprep.subr.mxu0 0.0
  %2542 = vmatpush1.msra.mxu0 %v1480
  %2543 = vmatprep.subr.mxu0 0.0
  %2544 = vmatpush1.msra.mxu0 %v1481
  %2545 = vmatprep.subr.mxu0 0.0
  %2546 = vmatpush1.msra.mxu0 %v1482
  %2547 = vmatprep.subr.mxu0 0.0
  %2548 = vmatpush1.msra.mxu0 %v1483
  %2549 = vmatprep.subr.mxu0 0.0
  %2550 = vmatpush1.msra.mxu0 %v1484
  %2551 = vmatprep.subr.mxu0 0.0
  %2552 = vmatpush1.msra.mxu0 %v1485
  %2553 = vmatprep.subr.mxu0 0.0
  %2554 = vmatpush1.msra.mxu0 %v1486
  %2555 = vmatprep.subr.mxu0 0.0
  %2556 = vmatpush1.msra.mxu0 %v1487
  %2557 = vmatprep.subr.mxu0 0.0
  %2558 = vmatpush1.msra.mxu0 %v1488
  %2559 = vmatprep.subr.mxu0 0.0
  %2560 = vmatpush1.msra.mxu0 %v1489
  %2561 = vmatprep.subr.mxu0 0.0
  %2562 = vmatpush1.msra.mxu0 %v1490
  %2563 = vmatprep.subr.mxu0 0.0
  %2564 = vmatpush1.msra.mxu0 %v1491
  %2565 = vmatprep.subr.mxu0 0.0
  %2566 = vmatpush1.msra.mxu0 %v1492
  %2567 = vmatprep.subr.mxu0 0.0
  %2568 = vmatpush1.msra.mxu0 %v1493
  %2569 = vmatprep.subr.mxu0 0.0
  %2570 = vmatpush1.msra.mxu0 %v1494
  %2571 = vmatprep.subr.mxu0 0.0
  %2572 = vmatpush1.msra.mxu0 %v1495
  %2573 = vmatprep.subr.mxu0 0.0
  %2574 = vmatpush1.msra.mxu0 %v1496
  %2575 = vmatprep.subr.mxu0 0.0
  %2576 = vmatpush1.msra.mxu0 %v1497
  %2577 = vmatprep.subr.mxu0 0.0
  %2578 = vmatpush1.msra.mxu0 %v1498
  %2579 = vmatprep.subr.mxu0 0.0
  %2580 = vmatpush1.msra.mxu0 %v1499
  %2581 = vmatprep.subr.mxu0 0.0
  %2582 = vmatpush1.msra.mxu0 %v1500
  %2583 = vmatprep.subr.mxu0 0.0
  %2584 = vmatpush1.msra.mxu0 %v1501
  %2585 = vmatprep.mubr.f32.mxu0 %v1018
  %2586 = vmatmul.mubr.f32.gmra.mrb[0].mxu0 %v1017
  %v2587 = vpop.f32.mrb[0].mxu0
  %v2588 = vadd.f32 %v2518, %v2587
  %v2589 = vpop.f32.mrb[0].mxu0
  %2590 = vdwg.mxu0
  %2591 = vmatprep.subr.mxu0 0.0
  %2592 = vmatpush1.msra.mxu0 %v1502
  %2593 = vmatprep.subr.mxu0 0.0
  %2594 = vmatpush1.msra.mxu0 %v1503
  %2595 = vmatprep.subr.mxu0 0.0
  %2596 = vmatpush1.msra.mxu0 %v1504
  %2597 = vmatprep.subr.mxu0 0.0
  %2598 = vmatpush1.msra.mxu0 %v1505
  %2599 = vmatprep.subr.mxu0 0.0
  %2600 = vmatpush1.msra.mxu0 %v1506
  %2601 = vmatprep.subr.mxu0 0.0
  %2602 = vmatpush1.msra.mxu0 %v1507
  %2603 = vmatprep.subr.mxu0 0.0
  %2604 = vmatpush1.msra.mxu0 %v1508
  %2605 = vmatprep.subr.mxu0 0.0
  %2606 = vmatpush1.msra.mxu0 %v1509
  %2607 = vmatprep.subr.mxu0 0.0
  %2608 = vmatpush1.msra.mxu0 %v1510
  %2609 = vmatprep.subr.mxu0 0.0
  %2610 = vmatpush1.msra.mxu0 %v1511
  %2611 = vmatprep.subr.mxu0 0.0
  %2612 = vmatpush1.msra.mxu0 %v1512
  %2613 = vmatprep.subr.mxu0 0.0
  %2614 = vmatpush1.msra.mxu0 %v1513
  %2615 = vmatprep.subr.mxu0 0.0
  %2616 = vmatpush1.msra.mxu0 %v1514
  %2617 = vmatprep.subr.mxu0 0.0
  %2618 = vmatpush1.msra.mxu0 %v1515
  %2619 = vmatprep.subr.mxu0 0.0
  %2620 = vmatpush1.msra.mxu0 %v1516
  %2621 = vmatprep.subr.mxu0 0.0
  %2622 = vmatpush1.msra.mxu0 %v1517
  %2623 = vmatprep.subr.mxu0 0.0
  %2624 = vmatpush1.msra.mxu0 %v1518
  %2625 = vmatprep.subr.mxu0 0.0
  %2626 = vmatpush1.msra.mxu0 %v1519
  %2627 = vmatprep.subr.mxu0 0.0
  %2628 = vmatpush1.msra.mxu0 %v1520
  %2629 = vmatprep.subr.mxu0 0.0
  %2630 = vmatpush1.msra.mxu0 %v1521
  %2631 = vmatprep.subr.mxu0 0.0
  %2632 = vmatpush1.msra.mxu0 %v1522
  %2633 = vmatprep.subr.mxu0 0.0
  %2634 = vmatpush1.msra.mxu0 %v1523
  %2635 = vmatprep.subr.mxu0 0.0
  %2636 = vmatpush1.msra.mxu0 %v1524
  %2637 = vmatprep.subr.mxu0 0.0
  %2638 = vmatpush1.msra.mxu0 %v1525
  %2639 = vmatprep.subr.mxu0 0.0
  %2640 = vmatpush1.msra.mxu0 %v1526
  %2641 = vmatprep.subr.mxu0 0.0
  %2642 = vmatpush1.msra.mxu0 %v1527
  %2643 = vmatprep.subr.mxu0 0.0
  %2644 = vmatpush1.msra.mxu0 %v1528
  %2645 = vmatprep.subr.mxu0 0.0
  %2646 = vmatpush1.msra.mxu0 %v1529
  %2647 = vmatprep.subr.mxu0 0.0
  %2648 = vmatpush1.msra.mxu0 %v1530
  %2649 = vmatprep.subr.mxu0 0.0
  %2650 = vmatpush1.msra.mxu0 %v1531
  %2651 = vmatprep.subr.mxu0 0.0
  %2652 = vmatpush1.msra.mxu0 %v1532
  %2653 = vmatprep.subr.mxu0 0.0
  %2654 = vmatpush1.msra.mxu0 %v1533
  %2655 = vmatprep.mubr.f32.mxu0 %v1020
  %2656 = vmatmul.mubr.f32.gmra.mrb[0].mxu0 %v1019
  %v2657 = vpop.f32.mrb[0].mxu0
  %v2658 = vadd.f32 %v2588, %v2657
  %v2659 = vpop.f32.mrb[0].mxu0
  %2660 = vdwg.mxu0
  %v2661 = vmax.f32 %v2658, 0.0
  %v2662 = vld [vmem:[%s15] sm:$0xff]
  %v2663 = vld [vmem:[%s15 + $0x8] sm:$0xff]
  %v2664 = vld [vmem:[%s15 + $0x10] sm:$0xff]
  %v2665 = vld [vmem:[%s15 + $0x18] sm:$0xff]
  %v2666 = vld [vmem:[%s15 + $0x20] sm:$0xff]
  %v2667 = vld [vmem:[%s15 + $0x28] sm:$0xff]
  %v2668 = vld [vmem:[%s15 + $0x30] sm:$0xff]
  %v2669 = vld [vmem:[%s15 + $0x38] sm:$0xff]
  %v2670 = vld [vmem:[%s15 + $0x40] sm:$0xff]
  %v2671 = vld [vmem:[%s15 + $0x48] sm:$0xff]
  %v2672 = vld [vmem:[%s15 + $0x50] sm:$0xff]
  %v2673 = vld [vmem:[%s15 + $0x58] sm:$0xff]
  %v2674 = vld [vmem:[%s15 + $0x60] sm:$0xff]
  %v2675 = vld [vmem:[%s15 + $0x68] sm:$0xff]
  %v2676 = vld [vmem:[%s15 + $0x70] sm:$0xff]
  %v2677 = vld [vmem:[%s15 + $0x78] sm:$0xff]
  %v2678 = vld [vmem:[%s15 + $0x80] sm:$0xff]
  %v2679 = vld [vmem:[%s15 + $0x88] sm:$0xff]
  %v2680 = vld [vmem:[%s15 + $0x90] sm:$0xff]
  %v2681 = vld [vmem:[%s15 + $0x98] sm:$0xff]
  %v2682 = vld [vmem:[%s15 + $0xa0] sm:$0xff]
  %v2683 = vld [vmem:[%s15 + $0xa8] sm:$0xff]
  %v2684 = vld [vmem:[%s15 + $0xb0] sm:$0xff]
  %v2685 = vld [vmem:[%s15 + $0xb8] sm:$0xff]
  %v2686 = vld [vmem:[%s15 + $0xc0] sm:$0xff]
  %v2687 = vld [vmem:[%s15 + $0xc8] sm:$0xff]
  %v2688 = vld [vmem:[%s15 + $0xd0] sm:$0xff]
  %v2689 = vld [vmem:[%s15 + $0xd8] sm:$0xff]
  %v2690 = vld [vmem:[%s15 + $0xe0] sm:$0xff]
  %v2691 = vld [vmem:[%s15 + $0xe8] sm:$0xff]
  %v2692 = vld [vmem:[%s15 + $0xf0] sm:$0xff]
  %v2693 = vld [vmem:[%s15 + $0xf8] sm:$0xff]
  %v2694 = vld [vmem:[%s16] sm:$0x3]
  %v2696 = vlaneseq
  %v2697 = vshrl.u32 %v2696, 7
  %v2698 = vsub.s32 0, %v2697
  %v2699 = vrot.slane %v2694, %v2698
  %v2700 = vlaneseq
  %v2701 = vshrl.u32 %v2700, 7
  %v2702 = vsub.s32 1, %v2701
  %v2703 = vrot.slane %v2694, %v2702
  %2706 = vmatprep.subr.mxu0 %v2663
  %2707 = vmatpush1.msra.mxu0 %v2662
  %2708 = vmatprep.subr.mxu0 %v2665
  %2709 = vmatpush1.msra.mxu0 %v2664
  %2710 = vmatprep.subr.mxu0 %v2667
  %2711 = vmatpush1.msra.mxu0 %v2666
  %2712 = vmatprep.subr.mxu0 %v2669
  %2713 = vmatpush1.msra.mxu0 %v2668
  %2714 = vmatprep.subr.mxu0 %v2671
  %2715 = vmatpush1.msra.mxu0 %v2670
  %2716 = vmatprep.subr.mxu0 %v2673
  %2717 = vmatpush1.msra.mxu0 %v2672
  %2718 = vmatprep.subr.mxu0 %v2675
  %2719 = vmatpush1.msra.mxu0 %v2674
  %2720 = vmatprep.subr.mxu0 %v2677
  %2721 = vmatpush1.msra.mxu0 %v2676
  %2722 = vmatprep.subr.mxu0 %v2679
  %2723 = vmatpush1.msra.mxu0 %v2678
  %2724 = vmatprep.subr.mxu0 %v2681
  %2725 = vmatpush1.msra.mxu0 %v2680
  %2726 = vmatprep.subr.mxu0 %v2683
  %2727 = vmatpush1.msra.mxu0 %v2682
  %2728 = vmatprep.subr.mxu0 %v2685
  %2729 = vmatpush1.msra.mxu0 %v2684
  %2730 = vmatprep.subr.mxu0 %v2687
  %2731 = vmatpush1.msra.mxu0 %v2686
  %2732 = vmatprep.subr.mxu0 %v2689
  %2733 = vmatpush1.msra.mxu0 %v2688
  %2734 = vmatprep.subr.mxu0 %v2691
  %2735 = vmatpush1.msra.mxu0 %v2690
  %2736 = vmatprep.subr.mxu0 %v2693
  %2737 = vmatpush1.msra.mxu0 %v2692
  %2738 = vmatprep.subr.mxu0 0.0
  %2739 = vmatpush1.msra.mxu0 0.0
  %2740 = vmatprep.subr.mxu0 0.0
  %2741 = vmatpush1.msra.mxu0 0.0
  %2742 = vmatprep.subr.mxu0 0.0
  %2743 = vmatpush1.msra.mxu0 0.0
  %2744 = vmatprep.subr.mxu0 0.0
  %2745 = vmatpush1.msra.mxu0 0.0
  %2746 = vmatprep.subr.mxu0 0.0
  %2747 = vmatpush1.msra.mxu0 0.0
  %2748 = vmatprep.subr.mxu0 0.0
  %2749 = vmatpush1.msra.mxu0 0.0
  %2750 = vmatprep.subr.mxu0 0.0
  %2751 = vmatpush1.msra.mxu0 0.0
  %2752 = vmatprep.subr.mxu0 0.0
  %2753 = vmatpush1.msra.mxu0 0.0
  %2754 = vmatprep.subr.mxu0 0.0
  %2755 = vmatpush1.msra.mxu0 0.0
  %2756 = vmatprep.subr.mxu0 0.0
  %2757 = vmatpush1.msra.mxu0 0.0
  %2758 = vmatprep.subr.mxu0 0.0
  %2759 = vmatpush1.msra.mxu0 0.0
  %2760 = vmatprep.subr.mxu0 0.0
  %2761 = vmatpush1.msra.mxu0 0.0
  %2762 = vmatprep.subr.mxu0 0.0
  %2763 = vmatpush1.msra.mxu0 0.0
  %2764 = vmatprep.subr.mxu0 0.0
  %2765 = vmatpush1.msra.mxu0 0.0
  %2766 = vmatprep.subr.mxu0 0.0
  %2767 = vmatpush1.msra.mxu0 0.0
  %2768 = vmatprep.subr.mxu0 0.0
  %2769 = vmatpush1.msra.mxu0 0.0
  %2770 = vmatprep.mubr.f32.mxu0 0.0
  %2771 = vmatmul.mubr.f32.gmra.mrb[0].mxu0 %v1021
  %v2772 = vpop.f32.mrb[0].mxu0
  %v2773 = vadd.f32 %v2699, %v2772
  %v2774 = vpop.f32.mrb[0].mxu0
  %v2775 = vadd.f32 %v2703, %v2774
  %2776 = vdwg.mxu0
  %v2777 = vmax.f32 %v2773, 0.0
  %v2778 = vmax.f32 %v2775, 0.0
  %v2779 = vld [vmem:[%s17] sm:$0xff]
  %v2780 = vld [vmem:[%s17 + $0x8] sm:$0xff]
  %v2781 = vld [vmem:[%s17 + $0x10] sm:$0xff]
  %v2782 = vld [vmem:[%s17 + $0x18] sm:$0xff]
  %v2783 = vld [vmem:[%s17 + $0x20] sm:$0xff]
  %v2784 = vld [vmem:[%s17 + $0x28] sm:$0xff]
  %v2785 = vld [vmem:[%s17 + $0x30] sm:$0xff]
  %v2786 = vld [vmem:[%s17 + $0x38] sm:$0xff]
  %v2787 = vld [vmem:[%s17 + $0x40] sm:$0xff]
  %v2788 = vld [vmem:[%s17 + $0x48] sm:$0xff]
  %v2789 = vld [vmem:[%s17 + $0x50] sm:$0xff]
  %v2790 = vld [vmem:[%s17 + $0x58] sm:$0xff]
  %v2791 = vld [vmem:[%s17 + $0x60] sm:$0xff]
  %v2792 = vld [vmem:[%s17 + $0x68] sm:$0xff]
  %v2793 = vld [vmem:[%s17 + $0x70] sm:$0xff]
  %v2794 = vld [vmem:[%s17 + $0x78] sm:$0xff]
  %v2795 = vld [vmem:[%s17 + $0x80] sm:$0xff]
  %v2796 = vld [vmem:[%s17 + $0x88] sm:$0xff]
  %v2797 = vld [vmem:[%s17 + $0x90] sm:$0xff]
  %v2798 = vld [vmem:[%s17 + $0x98] sm:$0xff]
  %v2799 = vld [vmem:[%s17 + $0xa0] sm:$0xff]
  %v2800 = vld [vmem:[%s17 + $0xa8] sm:$0xff]
  %v2801 = vld [vmem:[%s17 + $0xb0] sm:$0xff]
  %v2802 = vld [vmem:[%s17 + $0xb8] sm:$0xff]
  %v2803 = vld [vmem:[%s17 + $0xc0] sm:$0xff]
  %v2804 = vld [vmem:[%s17 + $0xc8] sm:$0xff]
  %v2805 = vld [vmem:[%s17 + $0xd0] sm:$0xff]
  %v2806 = vld [vmem:[%s17 + $0xd8] sm:$0xff]
  %v2807 = vld [vmem:[%s17 + $0xe0] sm:$0xff]
  %v2808 = vld [vmem:[%s17 + $0xe8] sm:$0xff]
  %v2809 = vld [vmem:[%s17 + $0xf0] sm:$0xff]
  %v2810 = vld [vmem:[%s17 + $0xf8] sm:$0xff]
  %v2811 = vld [vmem:[%s18] sm:$0x1]
  %v2813 = vlaneseq
  %v2814 = vshrl.u32 %v2813, 7
  %v2815 = vsub.s32 0, %v2814
  %v2816 = vrot.slane %v2811, %v2815
  %2818 = vmatprep.subr.mxu0 0.0
  %2819 = vmatpush1.msra.mxu0 %v2779
  %2820 = vmatprep.subr.mxu0 0.0
  %2821 = vmatpush1.msra.mxu0 %v2780
  %2822 = vmatprep.subr.mxu0 0.0
  %2823 = vmatpush1.msra.mxu0 %v2781
  %2824 = vmatprep.subr.mxu0 0.0
  %2825 = vmatpush1.msra.mxu0 %v2782
  %2826 = vmatprep.subr.mxu0 0.0
  %2827 = vmatpush1.msra.mxu0 %v2783
  %2828 = vmatprep.subr.mxu0 0.0
  %2829 = vmatpush1.msra.mxu0 %v2784
  %2830 = vmatprep.subr.mxu0 0.0
  %2831 = vmatpush1.msra.mxu0 %v2785
  %2832 = vmatprep.subr.mxu0 0.0
  %2833 = vmatpush1.msra.mxu0 %v2786
  %2834 = vmatprep.subr.mxu0 0.0
  %2835 = vmatpush1.msra.mxu0 %v2787
  %2836 = vmatprep.subr.mxu0 0.0
  %2837 = vmatpush1.msra.mxu0 %v2788
  %2838 = vmatprep.subr.mxu0 0.0
  %2839 = vmatpush1.msra.mxu0 %v2789
  %2840 = vmatprep.subr.mxu0 0.0
  %2841 = vmatpush1.msra.mxu0 %v2790
  %2842 = vmatprep.subr.mxu0 0.0
  %2843 = vmatpush1.msra.mxu0 %v2791
  %2844 = vmatprep.subr.mxu0 0.0
  %2845 = vmatpush1.msra.mxu0 %v2792
  %2846 = vmatprep.subr.mxu0 0.0
  %2847 = vmatpush1.msra.mxu0 %v2793
  %2848 = vmatprep.subr.mxu0 0.0
  %2849 = vmatpush1.msra.mxu0 %v2794
  %2850 = vmatprep.subr.mxu0 0.0
  %2851 = vmatpush1.msra.mxu0 %v2795
  %2852 = vmatprep.subr.mxu0 0.0
  %2853 = vmatpush1.msra.mxu0 %v2796
  %2854 = vmatprep.subr.mxu0 0.0
  %2855 = vmatpush1.msra.mxu0 %v2797
  %2856 = vmatprep.subr.mxu0 0.0
  %2857 = vmatpush1.msra.mxu0 %v2798
  %2858 = vmatprep.subr.mxu0 0.0
  %2859 = vmatpush1.msra.mxu0 %v2799
  %2860 = vmatprep.subr.mxu0 0.0
  %2861 = vmatpush1.msra.mxu0 %v2800
  %2862 = vmatprep.subr.mxu0 0.0
  %2863 = vmatpush1.msra.mxu0 %v2801
  %2864 = vmatprep.subr.mxu0 0.0
  %2865 = vmatpush1.msra.mxu0 %v2802
  %2866 = vmatprep.subr.mxu0 0.0
  %2867 = vmatpush1.msra.mxu0 %v2803
  %2868 = vmatprep.subr.mxu0 0.0
  %2869 = vmatpush1.msra.mxu0 %v2804
  %2870 = vmatprep.subr.mxu0 0.0
  %2871 = vmatpush1.msra.mxu0 %v2805
  %2872 = vmatprep.subr.mxu0 0.0
  %2873 = vmatpush1.msra.mxu0 %v2806
  %2874 = vmatprep.subr.mxu0 0.0
  %2875 = vmatpush1.msra.mxu0 %v2807
  %2876 = vmatprep.subr.mxu0 0.0
  %2877 = vmatpush1.msra.mxu0 %v2808
  %2878 = vmatprep.subr.mxu0 0.0
  %2879 = vmatpush1.msra.mxu0 %v2809
  %2880 = vmatprep.subr.mxu0 0.0
  %2881 = vmatpush1.msra.mxu0 %v2810
  %2882 = vmatprep.mubr.f32.mxu0 %v2778
  %2883 = vmatmul.mubr.f32.gmra.mrb[0].mxu0 %v2777
  %v2884 = vpop.f32.mrb[0].mxu0
  %v2885 = vadd.f32 %v2816, %v2884
  %v2886 = vpop.f32.mrb[0].mxu0
  %2887 = vdwg.mxu0
  %v2888 = vmax.f32 %v2885, 0.0
  %v2889 = vld [vmem:[%s19] sm:$0xff]
  %v2890 = vld [vmem:[%s19 + $0x8] sm:$0xff]
  %v2891 = vld [vmem:[%s19 + $0x10] sm:$0xff]
  %v2892 = vld [vmem:[%s19 + $0x18] sm:$0xff]
  %v2893 = vld [vmem:[%s19 + $0x20] sm:$0xff]
  %v2894 = vld [vmem:[%s19 + $0x28] sm:$0xff]
  %v2895 = vld [vmem:[%s19 + $0x30] sm:$0xff]
  %v2896 = vld [vmem:[%s19 + $0x38] sm:$0xff]
  %v2897 = vld [vmem:[%s19 + $0x40] sm:$0xff]
  %v2898 = vld [vmem:[%s19 + $0x48] sm:$0xff]
  %v2899 = vld [vmem:[%s19 + $0x50] sm:$0xff]
  %v2900 = vld [vmem:[%s19 + $0x58] sm:$0xff]
  %v2901 = vld [vmem:[%s19 + $0x60] sm:$0xff]
  %v2902 = vld [vmem:[%s19 + $0x68] sm:$0xff]
  %v2903 = vld [vmem:[%s19 + $0x70] sm:$0xff]
  %v2904 = vld [vmem:[%s19 + $0x78] sm:$0xff]
  %v2905 = vld [vmem:[%s20] sm:$0x1]
  %v2907 = vlaneseq
  %v2908 = vshrl.u32 %v2907, 7
  %v2909 = vsub.s32 0, %v2908
  %v2910 = vrot.slane %v2905, %v2909
  %2912 = vmatprep.subr.mxu0 0.0
  %2913 = vmatpush1.msra.mxu0 %v2889
  %2914 = vmatprep.subr.mxu0 0.0
  %2915 = vmatpush1.msra.mxu0 %v2890
  %2916 = vmatprep.subr.mxu0 0.0
  %2917 = vmatpush1.msra.mxu0 %v2891
  %2918 = vmatprep.subr.mxu0 0.0
  %2919 = vmatpush1.msra.mxu0 %v2892
  %2920 = vmatprep.subr.mxu0 0.0
  %2921 = vmatpush1.msra.mxu0 %v2893
  %2922 = vmatprep.subr.mxu0 0.0
  %2923 = vmatpush1.msra.mxu0 %v2894
  %2924 = vmatprep.subr.mxu0 0.0
  %2925 = vmatpush1.msra.mxu0 %v2895
  %2926 = vmatprep.subr.mxu0 0.0
  %2927 = vmatpush1.msra.mxu0 %v2896
  %2928 = vmatprep.subr.mxu0 0.0
  %2929 = vmatpush1.msra.mxu0 %v2897
  %2930 = vmatprep.subr.mxu0 0.0
  %2931 = vmatpush1.msra.mxu0 %v2898
  %2932 = vmatprep.subr.mxu0 0.0
  %2933 = vmatpush1.msra.mxu0 %v2899
  %2934 = vmatprep.subr.mxu0 0.0
  %2935 = vmatpush1.msra.mxu0 %v2900
  %2936 = vmatprep.subr.mxu0 0.0
  %2937 = vmatpush1.msra.mxu0 %v2901
  %2938 = vmatprep.subr.mxu0 0.0
  %2939 = vmatpush1.msra.mxu0 %v2902
  %2940 = vmatprep.subr.mxu0 0.0
  %2941 = vmatpush1.msra.mxu0 %v2903
  %2942 = vmatprep.subr.mxu0 0.0
  %2943 = vmatpush1.msra.mxu0 %v2904
  %2944 = vmatprep.subr.mxu0 0.0
  %2945 = vmatpush1.msra.mxu0 0.0
  %2946 = vmatprep.subr.mxu0 0.0
  %2947 = vmatpush1.msra.mxu0 0.0
  %2948 = vmatprep.subr.mxu0 0.0
  %2949 = vmatpush1.msra.mxu0 0.0
  %2950 = vmatprep.subr.mxu0 0.0
  %2951 = vmatpush1.msra.mxu0 0.0
  %2952 = vmatprep.subr.mxu0 0.0
  %2953 = vmatpush1.msra.mxu0 0.0
  %2954 = vmatprep.subr.mxu0 0.0
  %2955 = vmatpush1.msra.mxu0 0.0
  %2956 = vmatprep.subr.mxu0 0.0
  %2957 = vmatpush1.msra.mxu0 0.0
  %2958 = vmatprep.subr.mxu0 0.0
  %2959 = vmatpush1.msra.mxu0 0.0
  %2960 = vmatprep.subr.mxu0 0.0
  %2961 = vmatpush1.msra.mxu0 0.0
  %2962 = vmatprep.subr.mxu0 0.0
  %2963 = vmatpush1.msra.mxu0 0.0
  %2964 = vmatprep.subr.mxu0 0.0
  %2965 = vmatpush1.msra.mxu0 0.0
  %2966 = vmatprep.subr.mxu0 0.0
  %2967 = vmatpush1.msra.mxu0 0.0
  %2968 = vmatprep.subr.mxu0 0.0
  %2969 = vmatpush1.msra.mxu0 0.0
  %2970 = vmatprep.subr.mxu0 0.0
  %2971 = vmatpush1.msra.mxu0 0.0
  %2972 = vmatprep.subr.mxu0 0.0
  %2973 = vmatpush1.msra.mxu0 0.0
  %2974 = vmatprep.subr.mxu0 0.0
  %2975 = vmatpush1.msra.mxu0 0.0
  %2976 = vmatprep.mubr.f32.mxu0 0.0
  %2977 = vmatmul.mubr.f32.gmra.mrb[0].mxu0 %v2888
  %v2978 = vpop.f32.mrb[0].mxu0
  %v2979 = vadd.f32 %v2910, %v2978
  %v2980 = vpop.f32.mrb[0].mxu0
  %2981 = vdwg.mxu0
  %v2982 = vmax.f32 %v2979, 0.0
  %v2983 = vld [vmem:[%s21] sm:$0xff]
  %v2984 = vld [vmem:[%s21 + $0x8] sm:$0xff]
  %v2985 = vld [vmem:[%s21 + $0x10] sm:$0xff]
  %v2986 = vld [vmem:[%s21 + $0x18] sm:$0xff]
  %v2987 = vld [vmem:[%s21 + $0x20] sm:$0xff]
  %v2988 = vld [vmem:[%s21 + $0x28] sm:$0xff]
  %v2989 = vld [vmem:[%s21 + $0x30] sm:$0xff]
  %v2990 = vld [vmem:[%s21 + $0x38] sm:$0xff]
  %v2991 = vld [vmem:[%s21 + $0x40] sm:$0xff]
  %v2992 = vld [vmem:[%s21 + $0x48] sm:$0xff]
  %v2993 = vld [vmem:[%s21 + $0x50] sm:$0xff]
  %v2994 = vld [vmem:[%s21 + $0x58] sm:$0xff]
  %v2995 = vld [vmem:[%s21 + $0x60] sm:$0xff]
  %v2996 = vld [vmem:[%s21 + $0x68] sm:$0xff]
  %v2997 = vld [vmem:[%s21 + $0x70] sm:$0xff]
  %v2998 = vld [vmem:[%s21 + $0x78] sm:$0xff]
  %v2999 = vld [vmem:[%s22] sm:$0xff]
  %v3000 = vld [vmem:[%s22 + $0x8] sm:$0xff]
  %v3001 = vld [vmem:[%s22 + $0x10] sm:$0xff]
  %v3002 = vld [vmem:[%s22 + $0x18] sm:$0xff]
  %v3003 = vld [vmem:[%s22 + $0x20] sm:$0xff]
  %v3004 = vld [vmem:[%s22 + $0x28] sm:$0xff]
  %v3005 = vld [vmem:[%s22 + $0x30] sm:$0xff]
  %v3006 = vld [vmem:[%s22 + $0x38] sm:$0xff]
  %v3007 = vld [vmem:[%s22 + $0x40] sm:$0xff]
  %v3008 = vld [vmem:[%s22 + $0x48] sm:$0xff]
  %v3009 = vld [vmem:[%s22 + $0x50] sm:$0xff]
  %v3010 = vld [vmem:[%s22 + $0x58] sm:$0xff]
  %v3011 = vld [vmem:[%s22 + $0x60] sm:$0xff]
  %v3012 = vld [vmem:[%s22 + $0x68] sm:$0xff]
  %v3013 = vld [vmem:[%s22 + $0x70] sm:$0xff]
  %v3014 = vld [vmem:[%s22 + $0x78] sm:$0xff]
  %3015 = vmatprep.subr.mxu0 0.0
  %3016 = vmatpush1.msra.mxu0 %v2999
  %3017 = vmatprep.subr.mxu0 0.0
  %3018 = vmatpush1.msra.mxu0 %v3000
  %3019 = vmatprep.subr.mxu0 0.0
  %3020 = vmatpush1.msra.mxu0 %v3001
  %3021 = vmatprep.subr.mxu0 0.0
  %3022 = vmatpush1.msra.mxu0 %v3002
  %3023 = vmatprep.subr.mxu0 0.0
  %3024 = vmatpush1.msra.mxu0 %v3003
  %3025 = vmatprep.subr.mxu0 0.0
  %3026 = vmatpush1.msra.mxu0 %v3004
  %3027 = vmatprep.subr.mxu0 0.0
  %3028 = vmatpush1.msra.mxu0 %v3005
  %3029 = vmatprep.subr.mxu0 0.0
  %3030 = vmatpush1.msra.mxu0 %v3006
  %3031 = vmatprep.subr.mxu0 0.0
  %3032 = vmatpush1.msra.mxu0 %v3007
  %3033 = vmatprep.subr.mxu0 0.0
  %3034 = vmatpush1.msra.mxu0 %v3008
  %3035 = vmatprep.subr.mxu0 0.0
  %3036 = vmatpush1.msra.mxu0 %v3009
  %3037 = vmatprep.subr.mxu0 0.0
  %3038 = vmatpush1.msra.mxu0 %v3010
  %3039 = vmatprep.subr.mxu0 0.0
  %3040 = vmatpush1.msra.mxu0 %v3011
  %3041 = vmatprep.subr.mxu0 0.0
  %3042 = vmatpush1.msra.mxu0 %v3012
  %3043 = vmatprep.subr.mxu0 0.0
  %3044 = vmatpush1.msra.mxu0 %v3013
  %3045 = vmatprep.subr.mxu0 0.0
  %3046 = vmatpush1.msra.mxu0 %v3014
  %3047 = vmatprep.subr.mxu0 0.0
  %3048 = vmatpush1.msra.mxu0 0.0
  %3049 = vmatprep.subr.mxu0 0.0
  %3050 = vmatpush1.msra.mxu0 0.0
  %3051 = vmatprep.subr.mxu0 0.0
  %3052 = vmatpush1.msra.mxu0 0.0
  %3053 = vmatprep.subr.mxu0 0.0
  %3054 = vmatpush1.msra.mxu0 0.0
  %3055 = vmatprep.subr.mxu0 0.0
  %3056 = vmatpush1.msra.mxu0 0.0
  %3057 = vmatprep.subr.mxu0 0.0
  %3058 = vmatpush1.msra.mxu0 0.0
  %3059 = vmatprep.subr.mxu0 0.0
  %3060 = vmatpush1.msra.mxu0 0.0
  %3061 = vmatprep.subr.mxu0 0.0
  %3062 = vmatpush1.msra.mxu0 0.0
  %3063 = vmatprep.subr.mxu0 0.0
  %3064 = vmatpush1.msra.mxu0 0.0
  %3065 = vmatprep.subr.mxu0 0.0
  %3066 = vmatpush1.msra.mxu0 0.0
  %3067 = vmatprep.subr.mxu0 0.0
  %3068 = vmatpush1.msra.mxu0 0.0
  %3069 = vmatprep.subr.mxu0 0.0
  %3070 = vmatpush1.msra.mxu0 0.0
  %3071 = vmatprep.subr.mxu0 0.0
  %3072 = vmatpush1.msra.mxu0 0.0
  %3073 = vmatprep.subr.mxu0 0.0
  %3074 = vmatpush1.msra.mxu0 0.0
  %3075 = vmatprep.subr.mxu0 0.0
  %3076 = vmatpush1.msra.mxu0 0.0
  %3077 = vmatprep.subr.mxu0 0.0
  %3078 = vmatpush1.msra.mxu0 0.0
  %3079 = vmatprep.mubr.f32.mxu0 0.0
  %3080 = vmatmul.mubr.f32.gmra.mrb[0].mxu0 %v2982
  %v3081 = vpop.f32.mrb[0].mxu0
  %v3082 = vadd.f32 0.0, %v3081
  %v3083 = vpop.f32.mrb[0].mxu0
  %3084 = vdwg.mxu0
  %3085 = vmatprep.subr.mxu0 0.0
  %3086 = vmatpush1.msra.mxu0 %v2983
  %3087 = vmatprep.subr.mxu0 0.0
  %3088 = vmatpush1.msra.mxu0 %v2984
  %3089 = vmatprep.subr.mxu0 0.0
  %3090 = vmatpush1.msra.mxu0 %v2985
  %3091 = vmatprep.subr.mxu0 0.0
  %3092 = vmatpush1.msra.mxu0 %v2986
  %3093 = vmatprep.subr.mxu0 0.0
  %3094 = vmatpush1.msra.mxu0 %v2987
  %3095 = vmatprep.subr.mxu0 0.0
  %3096 = vmatpush1.msra.mxu0 %v2988
  %3097 = vmatprep.subr.mxu0 0.0
  %3098 = vmatpush1.msra.mxu0 %v2989
  %3099 = vmatprep.subr.mxu0 0.0
  %3100 = vmatpush1.msra.mxu0 %v2990
  %3101 = vmatprep.subr.mxu0 0.0
  %3102 = vmatpush1.msra.mxu0 %v2991
  %3103 = vmatprep.subr.mxu0 0.0
  %3104 = vmatpush1.msra.mxu0 %v2992
  %3105 = vmatprep.subr.mxu0 0.0
  %3106 = vmatpush1.msra.mxu0 %v2993
  %3107 = vmatprep.subr.mxu0 0.0
  %3108 = vmatpush1.msra.mxu0 %v2994
  %3109 = vmatprep.subr.mxu0 0.0
  %3110 = vmatpush1.msra.mxu0 %v2995
  %3111 = vmatprep.subr.mxu0 0.0
  %3112 = vmatpush1.msra.mxu0 %v2996
  %3113 = vmatprep.subr.mxu0 0.0
  %3114 = vmatpush1.msra.mxu0 %v2997
  %3115 = vmatprep.subr.mxu0 0.0
  %3116 = vmatpush1.msra.mxu0 %v2998
  %3117 = vmatprep.subr.mxu0 0.0
  %3118 = vmatpush1.msra.mxu0 0.0
  %3119 = vmatprep.subr.mxu0 0.0
  %3120 = vmatpush1.msra.mxu0 0.0
  %3121 = vmatprep.subr.mxu0 0.0
  %3122 = vmatpush1.msra.mxu0 0.0
  %3123 = vmatprep.subr.mxu0 0.0
  %3124 = vmatpush1.msra.mxu0 0.0
  %3125 = vmatprep.subr.mxu0 0.0
  %3126 = vmatpush1.msra.mxu0 0.0
  %3127 = vmatprep.subr.mxu0 0.0
  %3128 = vmatpush1.msra.mxu0 0.0
  %3129 = vmatprep.subr.mxu0 0.0
  %3130 = vmatpush1.msra.mxu0 0.0
  %3131 = vmatprep.subr.mxu0 0.0
  %3132 = vmatpush1.msra.mxu0 0.0
  %3133 = vmatprep.subr.mxu0 0.0
  %3134 = vmatpush1.msra.mxu0 0.0
  %3135 = vmatprep.subr.mxu0 0.0
  %3136 = vmatpush1.msra.mxu0 0.0
  %3137 = vmatprep.subr.mxu0 0.0
  %3138 = vmatpush1.msra.mxu0 0.0
  %3139 = vmatprep.subr.mxu0 0.0
  %3140 = vmatpush1.msra.mxu0 0.0
  %3141 = vmatprep.subr.mxu0 0.0
  %3142 = vmatpush1.msra.mxu0 0.0
  %3143 = vmatprep.subr.mxu0 0.0
  %3144 = vmatpush1.msra.mxu0 0.0
  %3145 = vmatprep.subr.mxu0 0.0
  %3146 = vmatpush1.msra.mxu0 0.0
  %3147 = vmatprep.subr.mxu0 0.0
  %3148 = vmatpush1.msra.mxu0 0.0
  %3149 = vmatprep.mubr.f32.mxu0 0.0
  %3150 = vmatmul.mubr.f32.gmra.mrb[0].mxu0 %v2661
  %v3151 = vpop.f32.mrb[0].mxu0
  %v3152 = vadd.f32 %v3082, %v3151
  %v3153 = vpop.f32.mrb[0].mxu0
  %3154 = vdwg.mxu0
  %v3155 = vld [vmem:[%s23] sm:$0x1]
  %v3157 = vlaneseq
  %v3158 = vshrl.u32 %v3157, 7
  %v3159 = vsub.s32 0, %v3158
  %v3160 = vrot.slane %v3155, %v3159
  %v3162 = vadd.f32 %v3152, %v3160
  %v3163 = vmax.f32 %v3162, 0.0
  %v3164 = vld [vmem:[%s24] sm:$0xff]
  %v3165 = vld [vmem:[%s24 + $0x8] sm:$0xff]
  %v3166 = vld [vmem:[%s24 + $0x10] sm:$0xff]
  %v3167 = vld [vmem:[%s24 + $0x18] sm:$0xff]
  %v3168 = vld [vmem:[%s24 + $0x20] sm:$0xff]
  %v3169 = vld [vmem:[%s24 + $0x28] sm:$0xff]
  %v3170 = vld [vmem:[%s24 + $0x30] sm:$0xff]
  %v3171 = vld [vmem:[%s24 + $0x38] sm:$0xff]
  %v3172 = vld [vmem:[%s24 + $0x40] sm:$0xff]
  %v3173 = vld [vmem:[%s24 + $0x48] sm:$0xff]
  %v3174 = vld [vmem:[%s24 + $0x50] sm:$0xff]
  %v3175 = vld [vmem:[%s24 + $0x58] sm:$0xff]
  %v3176 = vld [vmem:[%s24 + $0x60] sm:$0xff]
  %v3177 = vld [vmem:[%s24 + $0x68] sm:$0xff]
  %v3178 = vld [vmem:[%s24 + $0x70] sm:$0xff]
  %v3179 = vld [vmem:[%s24 + $0x78] sm:$0xff]
  %v3180 = vld [vmem:[%s25] sm:$0x1]
  %v3182 = vlaneseq
  %v3183 = vshrl.u32 %v3182, 7
  %v3184 = vsub.s32 0, %v3183
  %v3185 = vrot.slane %v3180, %v3184
  %3187 = vmatprep.subr.mxu0 0.0
  %3188 = vmatpush1.msra.mxu0 %v3164
  %3189 = vmatprep.subr.mxu0 0.0
  %3190 = vmatpush1.msra.mxu0 %v3165
  %3191 = vmatprep.subr.mxu0 0.0
  %3192 = vmatpush1.msra.mxu0 %v3166
  %3193 = vmatprep.subr.mxu0 0.0
  %3194 = vmatpush1.msra.mxu0 %v3167
  %3195 = vmatprep.subr.mxu0 0.0
  %3196 = vmatpush1.msra.mxu0 %v3168
  %3197 = vmatprep.subr.mxu0 0.0
  %3198 = vmatpush1.msra.mxu0 %v3169
  %3199 = vmatprep.subr.mxu0 0.0
  %3200 = vmatpush1.msra.mxu0 %v3170
  %3201 = vmatprep.subr.mxu0 0.0
  %3202 = vmatpush1.msra.mxu0 %v3171
  %3203 = vmatprep.subr.mxu0 0.0
  %3204 = vmatpush1.msra.mxu0 %v3172
  %3205 = vmatprep.subr.mxu0 0.0
  %3206 = vmatpush1.msra.mxu0 %v3173
  %3207 = vmatprep.subr.mxu0 0.0
  %3208 = vmatpush1.msra.mxu0 %v3174
  %3209 = vmatprep.subr.mxu0 0.0
  %3210 = vmatpush1.msra.mxu0 %v3175
  %3211 = vmatprep.subr.mxu0 0.0
  %3212 = vmatpush1.msra.mxu0 %v3176
  %3213 = vmatprep.subr.mxu0 0.0
  %3214 = vmatpush1.msra.mxu0 %v3177
  %3215 = vmatprep.subr.mxu0 0.0
  %3216 = vmatpush1.msra.mxu0 %v3178
  %3217 = vmatprep.subr.mxu0 0.0
  %3218 = vmatpush1.msra.mxu0 %v3179
  %3219 = vmatprep.subr.mxu0 0.0
  %3220 = vmatpush1.msra.mxu0 0.0
  %3221 = vmatprep.subr.mxu0 0.0
  %3222 = vmatpush1.msra.mxu0 0.0
  %3223 = vmatprep.subr.mxu0 0.0
  %3224 = vmatpush1.msra.mxu0 0.0
  %3225 = vmatprep.subr.mxu0 0.0
  %3226 = vmatpush1.msra.mxu0 0.0
  %3227 = vmatprep.subr.mxu0 0.0
  %3228 = vmatpush1.msra.mxu0 0.0
  %3229 = vmatprep.subr.mxu0 0.0
  %3230 = vmatpush1.msra.mxu0 0.0
  %3231 = vmatprep.subr.mxu0 0.0
  %3232 = vmatpush1.msra.mxu0 0.0
  %3233 = vmatprep.subr.mxu0 0.0
  %3234 = vmatpush1.msra.mxu0 0.0
  %3235 = vmatprep.subr.mxu0 0.0
  %3236 = vmatpush1.msra.mxu0 0.0
  %3237 = vmatprep.subr.mxu0 0.0
  %3238 = vmatpush1.msra.mxu0 0.0
  %3239 = vmatprep.subr.mxu0 0.0
  %3240 = vmatpush1.msra.mxu0 0.0
  %3241 = vmatprep.subr.mxu0 0.0
  %3242 = vmatpush1.msra.mxu0 0.0
  %3243 = vmatprep.subr.mxu0 0.0
  %3244 = vmatpush1.msra.mxu0 0.0
  %3245 = vmatprep.subr.mxu0 0.0
  %3246 = vmatpush1.msra.mxu0 0.0
  %3247 = vmatprep.subr.mxu0 0.0
  %3248 = vmatpush1.msra.mxu0 0.0
  %3249 = vmatprep.subr.mxu0 0.0
  %3250 = vmatpush1.msra.mxu0 0.0
  %3251 = vmatprep.mubr.f32.mxu0 0.0
  %3252 = vmatmul.mubr.f32.gmra.mrb[0].mxu0 %v3163
  %v3253 = vpop.f32.mrb[0].mxu0
  %v3254 = vadd.f32 %v3185, %v3253
  %v3255 = vpop.f32.mrb[0].mxu0
  %3256 = vdwg.mxu0
  %v3257 = vmax.f32 %v3254, 0.0
  %v3258 = vadd.f32 %v988, %v3257
  %3259 = vst [vmem:[%s26] sm:$0xff] %v3258
  // Predicated region
  $region106: #{attention_layer_forward.5} parent=0 // pred_check
    _
  $region107: #{attention_layer_forward.5} parent=0 // pred_check_branch
    %3261 = sbr.rel (0) target = $region109
  $region108: #{attention_layer_forward.5} parent=0 // pred_region
    _
  $region109: #{attention_layer_forward.5} parent=0 // pred_fallthru
    _
  // Predicated region
  $region110: #{attention_layer_forward.5} parent=0 // pred_check
    _
  $region111: #{attention_layer_forward.5} parent=0 // pred_check_branch
    %3263 = sbr.rel (0) target = $region113
  $region112: #{attention_layer_forward.5} parent=0 // pred_region
    _
  $region113: #{attention_layer_forward.5} parent=0 // pred_fallthru
    _

</llo_original>
